<compile_context>
chip_gen: v5e
topology: v5e:2x2
jax: 0.10.0
libtpu: 0.0.40
codegen_flags: <defaults>
</compile_context>

<pallas_src>
import functools

import jax
import jax.numpy as jnp
from jax.experimental import pallas as pl
from jax.experimental.pallas import tpu as pltpu


def _round_up(x, m):
    return (x + m - 1) // m * m


def _elu(v):
    # ELU(alpha=1); exp instead of expm1 to keep the lowering trivially on EUP.
    return jnp.where(v > 0, v, jnp.exp(jnp.minimum(v, 0.0)) - 1.0)


# ---------------------------------------------------------------------------
# Kernel 1: per-node linear transforms of one SAGEConv layer (row-tiled).
#   M = X @ W_l          -> bf16 (feeds the A @ M MXU matmul downstream)
#   R = X @ W_r + b      -> f32  (root/self term + bias, kept full precision)
# ---------------------------------------------------------------------------
def sage_linear_kernel(x_ref, wl_ref, wr_ref, b_ref, m_ref, r_ref):
    x = x_ref[...]
    m = jnp.dot(x, wl_ref[...], preferred_element_type=jnp.float32)
    r = jnp.dot(x, wr_ref[...], preferred_element_type=jnp.float32) + b_ref[...]
    m_ref[...] = m.astype(m_ref.dtype)
    r_ref[...] = r


# ---------------------------------------------------------------------------
# Kernel 2: mean aggregation + root add + ELU (+ fused log_softmax if final).
#   h = elu(A_norm @ M + R)            [accumulated over the N reduction axis]
# Grid = (row_tiles, k_tiles); A and M are bf16, accumulation is f32.
# ---------------------------------------------------------------------------
def sage_aggregate_kernel(a_ref, m_ref, r_ref, *refs, out_dim, final):
    if final:
        h_ref, logp_ref, acc_ref = refs
    else:
        h_ref, acc_ref = refs
        logp_ref = None

    k = pl.program_id(1)

    @pl.when(k == 0)
    def _():
        acc_ref[...] = jnp.zeros_like(acc_ref)

    acc_ref[...] += jnp.dot(a_ref[...], m_ref[...],
                            preferred_element_type=jnp.float32)

    @pl.when(k == pl.num_programs(1) - 1)
    def _():
        h = _elu(acc_ref[...] + r_ref[...])
        # TODO(synk): dropout is identity here (eval semantics).
        h_ref[...] = h
        if final:
            # Masked log_softmax over the real (unpadded) feature lanes only.
            col = jax.lax.broadcasted_iota(jnp.int32, h.shape, 1)
            valid = col < out_dim
            hm = jnp.where(valid, h, -jnp.inf)
            mx = jnp.max(hm, axis=1, keepdims=True)
            sh = hm - mx
            lse = jnp.log(jnp.sum(jnp.where(valid, jnp.exp(sh), 0.0),
                                  axis=1, keepdims=True))
            logp_ref[...] = sh - lse


# ---------------------------------------------------------------------------
# pallas_call wrappers
# ---------------------------------------------------------------------------
_VMEM_LIMIT = 32 * 1024 * 1024  # safe on v5e/v6e (128 MiB) and v7x (64 MiB)


def _sage_linear(x_pad, wl_pad, wr_pad, b_pad, *, tm):
    n_pad, f_in = x_pad.shape
    f_out = wl_pad.shape[1]
    cost = pl.CostEstimate(
        flops=4 * n_pad * f_in * f_out,
        transcendentals=0,
        bytes_accessed=(x_pad.size + wl_pad.size + wr_pad.size + b_pad.size) * 4
        + n_pad * f_out * (2 + 4),
    )
    return pl.pallas_call(
        sage_linear_kernel,
        out_shape=(
            jax.ShapeDtypeStruct((n_pad, f_out), jnp.bfloat16),  # M
            jax.ShapeDtypeStruct((n_pad, f_out), jnp.float32),   # R
        ),
        grid_spec=pltpu.PrefetchScalarGridSpec(
            num_scalar_prefetch=0,
            grid=(n_pad // tm,),
            in_specs=[
                pl.BlockSpec((tm, f_in), lambda i: (i, 0)),
                pl.BlockSpec((f_in, f_out), lambda i: (0, 0)),
                pl.BlockSpec((f_in, f_out), lambda i: (0, 0)),
                pl.BlockSpec((1, f_out), lambda i: (0, 0)),
            ],
            out_specs=(
                pl.BlockSpec((tm, f_out), lambda i: (i, 0)),
                pl.BlockSpec((tm, f_out), lambda i: (i, 0)),
            ),
        ),
        compiler_params=pltpu.CompilerParams(
            dimension_semantics=("parallel",),
            vmem_limit_bytes=_VMEM_LIMIT,
        ),
        cost_estimate=cost,
    )(x_pad, wl_pad, wr_pad, b_pad)


def _sage_aggregate(a_bf16, m_bf16, r_f32, *, out_dim, final, tm, tk):
    n_pad = a_bf16.shape[0]
    f_out = m_bf16.shape[1]
    kernel = functools.partial(sage_aggregate_kernel, out_dim=out_dim, final=final)

    out_shape = [jax.ShapeDtypeStruct((n_pad, f_out), jnp.float32)]          # h
    out_specs = [pl.BlockSpec((tm, f_out), lambda i, k: (i, 0))]
    if final:
        out_shape.append(jax.ShapeDtypeStruct((n_pad, f_out), jnp.float32))  # logp
        out_specs.append(pl.BlockSpec((tm, f_out), lambda i, k: (i, 0)))

    cost = pl.CostEstimate(
        flops=2 * n_pad * n_pad * f_out,
        transcendentals=n_pad * f_out * (2 if final else 1),
        bytes_accessed=a_bf16.size * 2 + m_bf16.size * 2 + r_f32.size * 4
        + len(out_shape) * n_pad * f_out * 4,
    )
    return pl.pallas_call(
        kernel,
        out_shape=tuple(out_shape),
        grid_spec=pltpu.PrefetchScalarGridSpec(
            num_scalar_prefetch=0,
            grid=(n_pad // tm, n_pad // tk),          # reduction axis last
            in_specs=[
                pl.BlockSpec((tm, tk), lambda i, k: (i, k)),        # A tile
                pl.BlockSpec((tk, f_out), lambda i, k: (k, 0)),     # M (k only)
                pl.BlockSpec((tm, f_out), lambda i, k: (i, 0)),     # R (i only)
            ],
            out_specs=tuple(out_specs),
            scratch_shapes=[pltpu.VMEM((tm, f_out), jnp.float32)],  # accumulator
        ),
        compiler_params=pltpu.CompilerParams(
            dimension_semantics=("parallel", "arbitrary"),
            vmem_limit_bytes=_VMEM_LIMIT,
        ),
        cost_estimate=cost,
    )(a_bf16, m_bf16, r_f32)


def lame_sage(x, edge_index, params, *, tm=256, tk=256):
    """Forward pass of LameSAGE (eval mode).

    x: [N, in_dim] f32.  edge_index: [2, E] int32 (row 0 = src, row 1 = dst).
    params: 3 tuples (W_l [f_in, f_out], W_r [f_in, f_out], b [f_out]).
    Returns (h [N, out_dim], log_probs [N, out_dim]).
    Tile note: tm/tk=256 match the v6e/v7x 256-wide MXU and are also multiples
    of 128 for v5e; at scale, tk can be raised (e.g. 512) and swept.
    """
    n = x.shape[0]
    out_dim = params[-1][0].shape[1]

    # Dense row-normalized adjacency (mean aggregation over in-neighbors).
    src, dst = edge_index[0], edge_index[1]
    a = jnp.zeros((n, n), jnp.float32).at[dst, src].add(1.0)
    deg = jnp.sum(a, axis=1, keepdims=True)
    a_norm = a / jnp.maximum(deg, 1.0)   # zero in-degree -> 0 (PyG scatter mean)

    # Pad nodes to the tile grid and features to the 128-lane width.
    n_pad = _round_up(n, max(tm, tk))
    assert n_pad % tm == 0 and n_pad % tk == 0
    a_pad = jnp.zeros((n_pad, n_pad), jnp.bfloat16).at[:n, :n].set(
        a_norm.astype(jnp.bfloat16))

    f0_pad = _round_up(x.shape[1], 128)
    h = jnp.zeros((n_pad, f0_pad), jnp.float32).at[:n, :x.shape[1]].set(x)

    outs = None
    for layer, (wl, wr, b) in enumerate(params):
        f_in, f_out = wl.shape
        f_in_pad = _round_up(f_in, 128)
        f_out_pad = _round_up(f_out, 128)
        assert h.shape[1] == f_in_pad
        wl_pad = jnp.zeros((f_in_pad, f_out_pad), jnp.float32).at[:f_in, :f_out].set(wl)
        wr_pad = jnp.zeros((f_in_pad, f_out_pad), jnp.float32).at[:f_in, :f_out].set(wr)
        b_pad = jnp.zeros((1, f_out_pad), jnp.float32).at[0, :f_out].set(b)

        m, r = _sage_linear(h, wl_pad, wr_pad, b_pad, tm=tm)
        final = layer == len(params) - 1
        outs = _sage_aggregate(a_pad, m, r, out_dim=out_dim, final=final,
                               tm=tm, tk=tk)
        h = outs[0]

    logp = outs[1]
    return h[:n, :out_dim], logp[:n, :out_dim]


# ---------------------------------------------------------------------------
# Demo / self-check
# ---------------------------------------------------------------------------
if __name__ == "__main__":
    N, E = 500, 4000
    IN_DIM, HID_DIM, OUT_DIM = 16, 64, 10

    key = jax.random.PRNGKey(0)
    keys = jax.random.split(key, 12)

    x = jax.random.normal(keys[0], (N, IN_DIM), dtype=jnp.float32)
    edge_index = jax.random.randint(keys[1], (2, E), 0, N, dtype=jnp.int32)

    dims = [(IN_DIM, HID_DIM), (HID_DIM, HID_DIM), (HID_DIM, OUT_DIM)]
    params = []
    ki = 2
    for fi, fo in dims:
        lim = 1.0 / jnp.sqrt(jnp.float32(fi))
        wl = jax.random.uniform(keys[ki], (fi, fo), jnp.float32, -lim, lim); ki += 1
        wr = jax.random.uniform(keys[ki], (fi, fo), jnp.float32, -lim, lim); ki += 1
        b = jax.random.uniform(keys[ki], (fo,), jnp.float32, -lim, lim); ki += 1
        params.append((wl, wr, b))

    h, logp = jax.jit(lame_sage)(x, edge_index, params)
    jax.block_until_ready((h, logp))

    # Pure f32 reference (original module semantics, eval-mode dropout).
    src, dst = edge_index[0], edge_index[1]
    a = jnp.zeros((N, N), jnp.float32).at[dst, src].add(1.0)
    a_norm = a / jnp.maximum(jnp.sum(a, axis=1, keepdims=True), 1.0)
    hr = x
    for wl, wr, b in params:
        hr = _elu(a_norm @ (hr @ wl) + hr @ wr + b)
    logp_ref = jax.nn.log_softmax(hr, axis=-1)

    # Kernel uses bf16 A/M inputs with f32 accumulation -> loosened tolerance
    # vs. the pure-f32 reference (per the performance review).
    assert h.shape == (N, OUT_DIM) and logp.shape == (N, OUT_DIM)
    assert jnp.allclose(h, hr, atol=5e-2, rtol=5e-2), "embedding mismatch"
    assert jnp.allclose(logp, logp_ref, atol=5e-2, rtol=5e-2), "log_softmax mismatch"
    assert bool(jnp.all(jnp.isfinite(logp)))

    print("KERNEL_OK")
</pallas_src>

<mosaic_0001>
module attributes {stable_mosaic.version = 11 : i64} {
  func.func @sage_aggregate_kernel(%arg0: i32, %arg1: i32, %arg2: memref<256x256xbf16, #tpu.memory_space<vmem>>, %arg3: memref<256x128xbf16, #tpu.memory_space<vmem>>, %arg4: memref<256x128xf32, #tpu.memory_space<vmem>>, %arg5: memref<256x128xf32, #tpu.memory_space<vmem>>, %arg6: memref<256x128xf32, #tpu.memory_space<vmem>>) attributes {dimension_semantics = [#tpu.dimension_semantics<parallel>, #tpu.dimension_semantics<arbitrary>], iteration_bounds = array<i64: 2, 2>, scalar_prefetch = 0 : i64, scratch_operands = 1 : i64, tpu.core_type = #tpu.core_type<tc>, window_params = [{transform_indices = @transform_0, window_bounds = array<i64: 256, 256>}, {transform_indices = @transform_1, window_bounds = array<i64: 256, 128>}, {transform_indices = @transform_2, window_bounds = array<i64: 256, 128>}, {transform_indices = @transform_3, window_bounds = array<i64: 256, 128>}]} {
    %c0_i32 = arith.constant 0 : i32
    %0 = arith.cmpi eq, %arg1, %c0_i32 : i32
    %1 = arith.extui %0 : i1 to i32
    %c0_i32_0 = arith.constant 0 : i32
    %2 = arith.cmpi ne, %1, %c0_i32_0 : i32
    scf.if %2 {
      %cst_9 = arith.constant 0.000000e+00 : f32
      %12 = vector.broadcast %cst_9 : f32 to vector<256x128xf32>
      %c0_10 = arith.constant 0 : index
      %c0_11 = arith.constant 0 : index
      %13 = vector.load %arg6[%c0_10, %c0_11] : memref<256x128xf32, #tpu.memory_space<vmem>>, vector<256x128xf32>
      tpu.vector_store %arg6[%c0_10, %c0_11], %12 {strides = array<i32>} : memref<256x128xf32, #tpu.memory_space<vmem>>, vector<256x128xf32>,
    } else {
    }
    %c0 = arith.constant 0 : index
    %c0_1 = arith.constant 0 : index
    %3 = vector.load %arg6[%c0, %c0_1] : memref<256x128xf32, #tpu.memory_space<vmem>>, vector<256x128xf32>
    %c0_2 = arith.constant 0 : index
    %c0_3 = arith.constant 0 : index
    %4 = vector.load %arg2[%c0_2, %c0_3] : memref<256x256xbf16, #tpu.memory_space<vmem>>, vector<256x256xbf16>
    %c0_4 = arith.constant 0 : index
    %c0_5 = arith.constant 0 : index
    %5 = vector.load %arg3[%c0_4, %c0_5] : memref<256x128xbf16, #tpu.memory_space<vmem>>, vector<256x128xbf16>
    %cst = arith.constant dense<0.000000e+00> : vector<256x128xf32>
    %6 = tpu.matmul %4, %5, %cst {dimension_numbers = #tpu.dot_dimension_numbers<[1], [0], [0], [1], [0, 0, 1, 1], [], []>} : vector<256x256xbf16>, vector<256x128xbf16>, vector<256x128xf32> -> vector<256x128xf32>
    %7 = arith.addf %3, %6 : vector<256x128xf32>
    %c0_6 = arith.constant 0 : index
    %c0_7 = arith.constant 0 : index
    %8 = vector.load %arg6[%c0_6, %c0_7] : memref<256x128xf32, #tpu.memory_space<vmem>>, vector<256x128xf32>
    tpu.vector_store %arg6[%c0_6, %c0_7], %7 {strides = array<i32>} : memref<256x128xf32, #tpu.memory_space<vmem>>, vector<256x128xf32>,
    %c1_i32 = arith.constant 1 : i32
    %9 = arith.cmpi eq, %arg1, %c1_i32 : i32
    %10 = arith.extui %9 : i1 to i32
    %c0_i32_8 = arith.constant 0 : i32
    %11 = arith.cmpi ne, %10, %c0_i32_8 : i32
    scf.if %11 {
      %c0_9 = arith.constant 0 : index
      %c0_10 = arith.constant 0 : index
      %12 = vector.load %arg6[%c0_9, %c0_10] : memref<256x128xf32, #tpu.memory_space<vmem>>, vector<256x128xf32>
      %c0_11 = arith.constant 0 : index
      %c0_12 = arith.constant 0 : index
      %13 = vector.load %arg4[%c0_11, %c0_12] : memref<256x128xf32, #tpu.memory_space<vmem>>, vector<256x128xf32>
      %14 = arith.addf %12, %13 : vector<256x128xf32>
      %cst_13 = arith.constant 0.000000e+00 : f32
      %15 = vector.broadcast %cst_13 : f32 to vector<256x128xf32>
      %16 = arith.cmpf ogt, %14, %15 : vector<256x128xf32>
      %cst_14 = arith.constant 0.000000e+00 : f32
      %17 = vector.broadcast %cst_14 : f32 to vector<256x128xf32>
      %18 = arith.minimumf %14, %17 : vector<256x128xf32>
      %19 = math.exp %18 : vector<256x128xf32>
      %cst_15 = arith.constant 1.000000e+00 : f32
      %20 = vector.broadcast %cst_15 : f32 to vector<256x128xf32>
      %21 = arith.subf %19, %20 : vector<256x128xf32>
      %22 = arith.select %16, %14, %21 : vector<256x128xi1>, vector<256x128xf32>
      %c0_16 = arith.constant 0 : index
      %c0_17 = arith.constant 0 : index
      %23 = vector.load %arg5[%c0_16, %c0_17] : memref<256x128xf32, #tpu.memory_space<vmem>>, vector<256x128xf32>
      tpu.vector_store %arg5[%c0_16, %c0_17], %22 {strides = array<i32>} : memref<256x128xf32, #tpu.memory_space<vmem>>, vector<256x128xf32>,
    } else {
    }
    return
  }
  func.func @transform_0(%arg0: i32, %arg1: i32) -> (i32, i32) {
    %c0_i32 = arith.constant 0 : i32
    return %arg0, %arg1 : i32, i32
  }
  func.func @transform_1(%arg0: i32, %arg1: i32) -> (i32, i32) {
    %c0_i32 = arith.constant 0 : i32
    %c0_i32_0 = arith.constant 0 : i32
    return %arg1, %c0_i32 : i32, i32
  }
  func.func @transform_2(%arg0: i32, %arg1: i32) -> (i32, i32) {
    %c0_i32 = arith.constant 0 : i32
    %c0_i32_0 = arith.constant 0 : i32
    return %arg0, %c0_i32 : i32, i32
  }
  func.func @transform_3(%arg0: i32, %arg1: i32) -> (i32, i32) {
    %c0_i32 = arith.constant 0 : i32
    %c0_i32_0 = arith.constant 0 : i32
    return %arg0, %c0_i32 : i32, i32
  }
}

module attributes {stable_mosaic.version = 11 : i64} {
  func.func @sage_linear_kernel(%arg0: i32, %arg1: memref<256x128xf32, #tpu.memory_space<vmem>>, %arg2: memref<128x128xf32, #tpu.memory_space<vmem>>, %arg3: memref<128x128xf32, #tpu.memory_space<vmem>>, %arg4: memref<1x128xf32, #tpu.memory_space<vmem>>, %arg5: memref<256x128xbf16, #tpu.memory_space<vmem>>, %arg6: memref<256x128xf32, #tpu.memory_space<vmem>>) attributes {dimension_semantics = [#tpu.dimension_semantics<parallel>], iteration_bounds = array<i64: 2>, scalar_prefetch = 0 : i64, scratch_operands = 0 : i64, tpu.core_type = #tpu.core_type<tc>, window_params = [{transform_indices = @transform_0, window_bounds = array<i64: 256, 128>}, {pipeline_mode = #tpu.pipeline_mode<synchronous>, transform_indices = @transform_1, window_bounds = array<i64: 128, 128>}, {pipeline_mode = #tpu.pipeline_mode<synchronous>, transform_indices = @transform_2, window_bounds = array<i64: 128, 128>}, {pipeline_mode = #tpu.pipeline_mode<synchronous>, transform_indices = @transform_3, window_bounds = array<i64: 1, 128>}, {transform_indices = @transform_4, window_bounds = array<i64: 256, 128>}, {transform_indices = @transform_5, window_bounds = array<i64: 256, 128>}]} {
    %c0 = arith.constant 0 : index
    %c0_0 = arith.constant 0 : index
    %0 = vector.load %arg1[%c0, %c0_0] : memref<256x128xf32, #tpu.memory_space<vmem>>, vector<256x128xf32>
    %c0_1 = arith.constant 0 : index
    %c0_2 = arith.constant 0 : index
    %1 = vector.load %arg2[%c0_1, %c0_2] : memref<128x128xf32, #tpu.memory_space<vmem>>, vector<128x128xf32>
    %cst = arith.constant dense<0.000000e+00> : vector<256x128xf32>
    %2 = tpu.matmul %0, %1, %cst {dimension_numbers = #tpu.dot_dimension_numbers<[1], [0], [0], [1], [0, 0, 1, 1], [], []>} : vector<256x128xf32>, vector<128x128xf32>, vector<256x128xf32> -> vector<256x128xf32>
    %c0_3 = arith.constant 0 : index
    %c0_4 = arith.constant 0 : index
    %3 = vector.load %arg3[%c0_3, %c0_4] : memref<128x128xf32, #tpu.memory_space<vmem>>, vector<128x128xf32>
    %cst_5 = arith.constant dense<0.000000e+00> : vector<256x128xf32>
    %4 = tpu.matmul %0, %3, %cst_5 {dimension_numbers = #tpu.dot_dimension_numbers<[1], [0], [0], [1], [0, 0, 1, 1], [], []>} : vector<256x128xf32>, vector<128x128xf32>, vector<256x128xf32> -> vector<256x128xf32>
    %c0_6 = arith.constant 0 : index
    %c0_7 = arith.constant 0 : index
    %5 = vector.load %arg4[%c0_6, %c0_7] : memref<1x128xf32, #tpu.memory_space<vmem>>, vector<1x128xf32>
    %6 = vector.broadcast %5 : vector<1x128xf32> to vector<256x128xf32>
    %7 = arith.addf %4, %6 : vector<256x128xf32>
    %8 = arith.truncf %2 : vector<256x128xf32> to vector<256x128xbf16>
    %c0_8 = arith.constant 0 : index
    %c0_9 = arith.constant 0 : index
    %9 = vector.load %arg5[%c0_8, %c0_9] : memref<256x128xbf16, #tpu.memory_space<vmem>>, vector<256x128xbf16>
    tpu.vector_store %arg5[%c0_8, %c0_9], %8 {strides = array<i32>} : memref<256x128xbf16, #tpu.memory_space<vmem>>, vector<256x128xbf16>,
    %c0_10 = arith.constant 0 : index
    %c0_11 = arith.constant 0 : index
    %10 = vector.load %arg6[%c0_10, %c0_11] : memref<256x128xf32, #tpu.memory_space<vmem>>, vector<256x128xf32>
    tpu.vector_store %arg6[%c0_10, %c0_11], %7 {strides = array<i32>} : memref<256x128xf32, #tpu.memory_space<vmem>>, vector<256x128xf32>,
    return
  }
  func.func @transform_0(%arg0: i32) -> (i32, i32) {
    %c0_i32 = arith.constant 0 : i32
    %c0_i32_0 = arith.constant 0 : i32
    return %arg0, %c0_i32 : i32, i32
  }
  func.func @transform_1(%arg0: i32) -> (i32, i32) {
    %c0_i32 = arith.constant 0 : i32
    %c0_i32_0 = arith.constant 0 : i32
    %c0_i32_1 = arith.constant 0 : i32
    return %c0_i32, %c0_i32_0 : i32, i32
  }
  func.func @transform_2(%arg0: i32) -> (i32, i32) {
    %c0_i32 = arith.constant 0 : i32
    %c0_i32_0 = arith.constant 0 : i32
    %c0_i32_1 = arith.constant 0 : i32
    return %c0_i32, %c0_i32_0 : i32, i32
  }
  func.func @transform_3(%arg0: i32) -> (i32, i32) {
    %c0_i32 = arith.constant 0 : i32
    %c0_i32_0 = arith.constant 0 : i32
    %c0_i32_1 = arith.constant 0 : i32
    return %c0_i32, %c0_i32_0 : i32, i32
  }
  func.func @transform_4(%arg0: i32) -> (i32, i32) {
    %c0_i32 = arith.constant 0 : i32
    %c0_i32_0 = arith.constant 0 : i32
    return %arg0, %c0_i32 : i32, i32
  }
  func.func @transform_5(%arg0: i32) -> (i32, i32) {
    %c0_i32 = arith.constant 0 : i32
    %c0_i32_0 = arith.constant 0 : i32
    return %arg0, %c0_i32 : i32, i32
  }
}

module attributes {stable_mosaic.version = 11 : i64} {
  func.func @sage_aggregate_kernel(%arg0: i32, %arg1: i32, %arg2: memref<256x256xbf16, #tpu.memory_space<vmem>>, %arg3: memref<256x128xbf16, #tpu.memory_space<vmem>>, %arg4: memref<256x128xf32, #tpu.memory_space<vmem>>, %arg5: memref<256x128xf32, #tpu.memory_space<vmem>>, %arg6: memref<256x128xf32, #tpu.memory_space<vmem>>, %arg7: memref<256x128xf32, #tpu.memory_space<vmem>>) attributes {dimension_semantics = [#tpu.dimension_semantics<parallel>, #tpu.dimension_semantics<arbitrary>], iteration_bounds = array<i64: 2, 2>, scalar_prefetch = 0 : i64, scratch_operands = 1 : i64, tpu.core_type = #tpu.core_type<tc>, window_params = [{transform_indices = @transform_0, window_bounds = array<i64: 256, 256>}, {transform_indices = @transform_1, window_bounds = array<i64: 256, 128>}, {transform_indices = @transform_2, window_bounds = array<i64: 256, 128>}, {transform_indices = @transform_3, window_bounds = array<i64: 256, 128>}, {transform_indices = @transform_4, window_bounds = array<i64: 256, 128>}]} {
    %c0_i32 = arith.constant 0 : i32
    %0 = arith.cmpi eq, %arg1, %c0_i32 : i32
    %1 = arith.extui %0 : i1 to i32
    %c0_i32_0 = arith.constant 0 : i32
    %2 = arith.cmpi ne, %1, %c0_i32_0 : i32
    scf.if %2 {
      %cst_9 = arith.constant 0.000000e+00 : f32
      %12 = vector.broadcast %cst_9 : f32 to vector<256x128xf32>
      %c0_10 = arith.constant 0 : index
      %c0_11 = arith.constant 0 : index
      %13 = vector.load %arg7[%c0_10, %c0_11] : memref<256x128xf32, #tpu.memory_space<vmem>>, vector<256x128xf32>
      tpu.vector_store %arg7[%c0_10, %c0_11], %12 {strides = array<i32>} : memref<256x128xf32, #tpu.memory_space<vmem>>, vector<256x128xf32>,
    } else {
    }
    %c0 = arith.constant 0 : index
    %c0_1 = arith.constant 0 : index
    %3 = vector.load %arg7[%c0, %c0_1] : memref<256x128xf32, #tpu.memory_space<vmem>>, vector<256x128xf32>
    %c0_2 = arith.constant 0 : index
    %c0_3 = arith.constant 0 : index
    %4 = vector.load %arg2[%c0_2, %c0_3] : memref<256x256xbf16, #tpu.memory_space<vmem>>, vector<256x256xbf16>
    %c0_4 = arith.constant 0 : index
    %c0_5 = arith.constant 0 : index
    %5 = vector.load %arg3[%c0_4, %c0_5] : memref<256x128xbf16, #tpu.memory_space<vmem>>, vector<256x128xbf16>
    %cst = arith.constant dense<0.000000e+00> : vector<256x128xf32>
    %6 = tpu.matmul %4, %5, %cst {dimension_numbers = #tpu.dot_dimension_numbers<[1], [0], [0], [1], [0, 0, 1, 1], [], []>} : vector<256x256xbf16>, vector<256x128xbf16>, vector<256x128xf32> -> vector<256x128xf32>
    %7 = arith.addf %3, %6 : vector<256x128xf32>
    %c0_6 = arith.constant 0 : index
    %c0_7 = arith.constant 0 : index
    %8 = vector.load %arg7[%c0_6, %c0_7] : memref<256x128xf32, #tpu.memory_space<vmem>>, vector<256x128xf32>
    tpu.vector_store %arg7[%c0_6, %c0_7], %7 {strides = array<i32>} : memref<256x128xf32, #tpu.memory_space<vmem>>, vector<256x128xf32>,
    %c1_i32 = arith.constant 1 : i32
    %9 = arith.cmpi eq, %arg1, %c1_i32 : i32
    %10 = arith.extui %9 : i1 to i32
    %c0_i32_8 = arith.constant 0 : i32
    %11 = arith.cmpi ne, %10, %c0_i32_8 : i32
    scf.if %11 {
      %c0_9 = arith.constant 0 : index
      %c0_10 = arith.constant 0 : index
      %12 = vector.load %arg7[%c0_9, %c0_10] : memref<256x128xf32, #tpu.memory_space<vmem>>, vector<256x128xf32>
      %c0_11 = arith.constant 0 : index
      %c0_12 = arith.constant 0 : index
      %13 = vector.load %arg4[%c0_11, %c0_12] : memref<256x128xf32, #tpu.memory_space<vmem>>, vector<256x128xf32>
      %14 = arith.addf %12, %13 : vector<256x128xf32>
      %cst_13 = arith.constant 0.000000e+00 : f32
      %15 = vector.broadcast %cst_13 : f32 to vector<256x128xf32>
      %16 = arith.cmpf ogt, %14, %15 : vector<256x128xf32>
      %cst_14 = arith.constant 0.000000e+00 : f32
      %17 = vector.broadcast %cst_14 : f32 to vector<256x128xf32>
      %18 = arith.minimumf %14, %17 : vector<256x128xf32>
      %19 = math.exp %18 : vector<256x128xf32>
      %cst_15 = arith.constant 1.000000e+00 : f32
      %20 = vector.broadcast %cst_15 : f32 to vector<256x128xf32>
      %21 = arith.subf %19, %20 : vector<256x128xf32>
      %22 = arith.select %16, %14, %21 : vector<256x128xi1>, vector<256x128xf32>
      %c0_16 = arith.constant 0 : index
      %c0_17 = arith.constant 0 : index
      %23 = vector.load %arg5[%c0_16, %c0_17] : memref<256x128xf32, #tpu.memory_space<vmem>>, vector<256x128xf32>
      tpu.vector_store %arg5[%c0_16, %c0_17], %22 {strides = array<i32>} : memref<256x128xf32, #tpu.memory_space<vmem>>, vector<256x128xf32>,
      %24 = tpu.iota {dimensions = array<i32: 1>} : vector<256x128xi32>
      %c10_i32 = arith.constant 10 : i32
      %25 = vector.broadcast %c10_i32 : i32 to vector<256x128xi32>
      %26 = arith.cmpi slt, %24, %25 : vector<256x128xi32>
      %cst_18 = arith.constant 0xFF800000 : f32
      %27 = vector.broadcast %cst_18 : f32 to vector<256x128xf32>
      %28 = arith.select %26, %22, %27 : vector<256x128xi1>, vector<256x128xf32>
      %cst_19 = arith.constant dense<0xFF800000> : vector<256xf32>
      %29 = vector.multi_reduction <maximumf>, %28, %cst_19 [1] : vector<256x128xf32> to vector<256xf32>
      %30 = vector.shape_cast %29 : vector<256xf32> to vector<256x1xf32>
      %31 = vector.broadcast %30 : vector<256x1xf32> to vector<256x128xf32>
      %32 = arith.subf %28, %31 : vector<256x128xf32>
      %33 = math.exp %32 : vector<256x128xf32>
      %cst_20 = arith.constant 0.000000e+00 : f32
      %34 = vector.broadcast %cst_20 : f32 to vector<256x128xf32>
      %35 = arith.select %26, %33, %34 : vector<256x128xi1>, vector<256x128xf32>
      %cst_21 = arith.constant dense<0.000000e+00> : vector<256xf32>
      %36 = vector.multi_reduction <add>, %35, %cst_21 [1] : vector<256x128xf32> to vector<256xf32>
      %37 = vector.shape_cast %36 : vector<256xf32> to vector<256x1xf32>
      %38 = math.log %37 : vector<256x1xf32>
      %39 = vector.broadcast %38 : vector<256x1xf32> to vector<256x128xf32>
      %40 = arith.subf %32, %39 : vector<256x128xf32>
      %c0_22 = arith.constant 0 : index
      %c0_23 = arith.constant 0 : index
      %41 = vector.load %arg6[%c0_22, %c0_23] : memref<256x128xf32, #tpu.memory_space<vmem>>, vector<256x128xf32>
      tpu.vector_store %arg6[%c0_22, %c0_23], %40 {strides = array<i32>} : memref<256x128xf32, #tpu.memory_space<vmem>>, vector<256x128xf32>,
    } else {
    }
    return
  }
  func.func @transform_0(%arg0: i32, %arg1: i32) -> (i32, i32) {
    %c0_i32 = arith.constant 0 : i32
    return %arg0, %arg1 : i32, i32
  }
  func.func @transform_1(%arg0: i32, %arg1: i32) -> (i32, i32) {
    %c0_i32 = arith.constant 0 : i32
    %c0_i32_0 = arith.constant 0 : i32
    return %arg1, %c0_i32 : i32, i32
  }
  func.func @transform_2(%arg0: i32, %arg1: i32) -> (i32, i32) {
    %c0_i32 = arith.constant 0 : i32
    %c0_i32_0 = arith.constant 0 : i32
    return %arg0, %c0_i32 : i32, i32
  }
  func.func @transform_3(%arg0: i32, %arg1: i32) -> (i32, i32) {
    %c0_i32 = arith.constant 0 : i32
    %c0_i32_0 = arith.constant 0 : i32
    return %arg0, %c0_i32 : i32, i32
  }
  func.func @transform_4(%arg0: i32, %arg1: i32) -> (i32, i32) {
    %c0_i32 = arith.constant 0 : i32
    %c0_i32_0 = arith.constant 0 : i32
    return %arg0, %c0_i32 : i32, i32
  }
}

</mosaic_0001>

<llo_original>
// kernel: lame_sage.6
$region0: #{lame_sage.6}
  #allocation0 [shape = 'u32[]', space=smem, size = 0x4, offset = 0x4, fixed_abs, tag = 'smem constant byte address 0x4 - core index']
  #allocation1 [shape = 'u32[72,128]{1,0:T(1,128)}', space=vmem, size = 0x9000, scoped, tag = 'internal scratch']
  %s0 = inlined_call_operand.vmem [shape: f32[512,128], index: 0, kind: input, shape index: {}]
  %s1 = inlined_call_operand.vmem [shape: f32[128,128], index: 1, kind: input, shape index: {}]
  %s2 = inlined_call_operand.vmem [shape: f32[128,128], index: 2, kind: input, shape index: {}]
  %s3 = inlined_call_operand.vmem [shape: f32[1,128], index: 3, kind: input, shape index: {}]
  %s4 = inlined_call_operand.vmem [shape: bf16[512,128], index: 4, kind: output, shape index: {0}]
  %s5 = inlined_call_operand.vmem [shape: f32[512,128], index: 5, kind: output, shape index: {1}]
  %6 = xla_tuple %s4, %s5
  %s7 = sld [smem:[#allocation0]]
  $region57: #{lame_sage.6} parent=0
    _
  %s9 = ssub.s32 1, %s7
  %s10 = scalar_select 0, %s9, %s7
  loop: start=0, step=1, limit=4
  $region2: #{lame_sage.6} parent=0 // loop_pre_header
    _
  $region3: #{lame_sage.6} parent=0 // loop_header
    %s12 = sphi 0, %s16
    %p13 = scmp.ge.s32.totalorder %s12, 4
    %s22 = sphi 0, %s24
    %s25 = sphi 0, %s22
    %s26 = sphi 0, %s25
    %s42 = sphi 0, %s26
    %s46 = sphi 0, %s46
    %s48 = sphi 0, %s46
    %s49 = sphi 0, %s48
    %s63 = sphi 0, %s49
    %s67 = sphi 0, %s67
    %s69 = sphi 0, %s67
    %s70 = sphi 0, %s69
    %s84 = sphi 0, %s70
    %s88 = sphi 0, %s88
    %s90 = sphi 0, %s88
    %s91 = sphi 0, %s90
    %s105 = sphi 0, %s91
    %s111 = sphi 0, %s113
    %s114 = sphi 0, %s111
    %s115 = sphi 0, %s114
    %s131 = sphi 0, %s115
    %s137 = sphi 0, %s139
    %s140 = sphi 0, %s137
    %s141 = sphi 0, %s140
    %s157 = sphi 0, %s141
  $region4: #{lame_sage.6} parent=0 // loop_header_branch
    %15 = sbr.rel (%p13) target = $region8
  $region5: #{lame_sage.6} parent=0 // loop_body
    %s17 = ssub.s32 %s12, 1
    %s18 = ssub.s32 %s12, 2
    %s19 = sadd.s32 %s12, 1
    %s20 = ssub.s32 %s12, %s19
    %p21 = scmp.eq.s32.totalorder %s20, 0
    %s23 = sadd.s32 %s22, 1
    %s24 = scalar_select %p21, %s22, %s23
    %p27 = pneg %p21
    %p28 = scmp.eq.s32.totalorder %s12, 1
    %p29 = por %p27, %p28
    %p30 = scmp.ne.s32.totalorder %s22, %s25
    %p31 = scmp.eq.s32.totalorder %s12, 0
    %p32 = por %p30, %p31
    %p33 = scmp.ne.s32.totalorder %s22, %s25
    %p34 = scmp.eq.s32.totalorder %s17, 1
    %p35 = por %p33, %p34
    %p36 = scmp.ne.s32.totalorder %s25, %s26
    %p37 = scmp.eq.s32.totalorder %s17, 0
    %p38 = por %p36, %p37
    %p39 = scmp.ne.s32.totalorder %s25, %s26
    %p40 = scmp.eq.s32.totalorder %s18, 1
    %p41 = por %p39, %p40
    %p43 = scmp.ne.s32.totalorder %s26, %s42
    %p44 = scmp.eq.s32.totalorder %s18, 0
    %p45 = por %p43, %p44
    %s47 = sadd.s32 %s46, 1
    %p50 = scmp.eq.s32.totalorder %s12, 1
    %p51 = scmp.ne.s32.totalorder %s46, %s48
    %p52 = scmp.eq.s32.totalorder %s12, 0
    %p53 = por %p51, %p52
    %p54 = scmp.ne.s32.totalorder %s46, %s48
    %p55 = scmp.eq.s32.totalorder %s17, 1
    %p56 = por %p54, %p55
    %p57 = scmp.ne.s32.totalorder %s48, %s49
    %p58 = scmp.eq.s32.totalorder %s17, 0
    %p59 = por %p57, %p58
    %p60 = scmp.ne.s32.totalorder %s48, %s49
    %p61 = scmp.eq.s32.totalorder %s18, 1
    %p62 = por %p60, %p61
    %p64 = scmp.ne.s32.totalorder %s49, %s63
    %p65 = scmp.eq.s32.totalorder %s18, 0
    %p66 = por %p64, %p65
    %s68 = sadd.s32 %s67, 1
    %p71 = scmp.eq.s32.totalorder %s12, 1
    %p72 = scmp.ne.s32.totalorder %s67, %s69
    %p73 = scmp.eq.s32.totalorder %s12, 0
    %p74 = por %p72, %p73
    %p75 = scmp.ne.s32.totalorder %s67, %s69
    %p76 = scmp.eq.s32.totalorder %s17, 1
    %p77 = por %p75, %p76
    %p78 = scmp.ne.s32.totalorder %s69, %s70
    %p79 = scmp.eq.s32.totalorder %s17, 0
    %p80 = por %p78, %p79
    %p81 = scmp.ne.s32.totalorder %s69, %s70
    %p82 = scmp.eq.s32.totalorder %s18, 1
    %p83 = por %p81, %p82
    %p85 = scmp.ne.s32.totalorder %s70, %s84
    %p86 = scmp.eq.s32.totalorder %s18, 0
    %p87 = por %p85, %p86
    %s89 = sadd.s32 %s88, 1
    %p92 = scmp.eq.s32.totalorder %s12, 1
    %p93 = scmp.ne.s32.totalorder %s88, %s90
    %p94 = scmp.eq.s32.totalorder %s12, 0
    %p95 = por %p93, %p94
    %p96 = scmp.ne.s32.totalorder %s88, %s90
    %p97 = scmp.eq.s32.totalorder %s17, 1
    %p98 = por %p96, %p97
    %p99 = scmp.ne.s32.totalorder %s90, %s91
    %p100 = scmp.eq.s32.totalorder %s17, 0
    %p101 = por %p99, %p100
    %p102 = scmp.ne.s32.totalorder %s90, %s91
    %p103 = scmp.eq.s32.totalorder %s18, 1
    %p104 = por %p102, %p103
    %p106 = scmp.ne.s32.totalorder %s91, %s105
    %p107 = scmp.eq.s32.totalorder %s18, 0
    %p108 = por %p106, %p107
    %s109 = ssub.s32 %s12, %s19
    %p110 = scmp.eq.s32.totalorder %s109, 0
    %s112 = sadd.s32 %s111, 1
    %s113 = scalar_select %p110, %s111, %s112
    %p116 = pneg %p110
    %p117 = scmp.eq.s32.totalorder %s12, 1
    %p118 = por %p116, %p117
    %p119 = scmp.ne.s32.totalorder %s111, %s114
    %p120 = scmp.eq.s32.totalorder %s12, 0
    %p121 = por %p119, %p120
    %p122 = scmp.ne.s32.totalorder %s111, %s114
    %p123 = scmp.eq.s32.totalorder %s17, 1
    %p124 = por %p122, %p123
    %p125 = scmp.ne.s32.totalorder %s114, %s115
    %p126 = scmp.eq.s32.totalorder %s17, 0
    %p127 = por %p125, %p126
    %p128 = scmp.ne.s32.totalorder %s114, %s115
    %p129 = scmp.eq.s32.totalorder %s18, 1
    %p130 = por %p128, %p129
    %p132 = scmp.ne.s32.totalorder %s115, %s131
    %p133 = scmp.eq.s32.totalorder %s18, 0
    %p134 = por %p132, %p133
    %s135 = ssub.s32 %s12, %s19
    %p136 = scmp.eq.s32.totalorder %s135, 0
    %s138 = sadd.s32 %s137, 1
    %s139 = scalar_select %p136, %s137, %s138
    %p142 = pneg %p136
    %p143 = scmp.eq.s32.totalorder %s12, 1
    %p144 = por %p142, %p143
    %p145 = scmp.ne.s32.totalorder %s137, %s140
    %p146 = scmp.eq.s32.totalorder %s12, 0
    %p147 = por %p145, %p146
    %p148 = scmp.ne.s32.totalorder %s137, %s140
    %p149 = scmp.eq.s32.totalorder %s17, 1
    %p150 = por %p148, %p149
    %p151 = scmp.ne.s32.totalorder %s140, %s141
    %p152 = scmp.eq.s32.totalorder %s17, 0
    %p153 = por %p151, %p152
    %p154 = scmp.ne.s32.totalorder %s140, %s141
    %p155 = scmp.eq.s32.totalorder %s18, 1
    %p156 = por %p154, %p155
    %p158 = scmp.ne.s32.totalorder %s141, %s157
    %p159 = scmp.eq.s32.totalorder %s18, 0
    %p160 = por %p158, %p159
    %p161 = scmp.le.s32.totalorder 1, %s12
    %p162 = scmp.lt.s32.totalorder %s12, 3
    %p163 = pnand %p161, %p162
    %p164 = pneg %p163
    // Predicated region
    $region9: #{lame_sage.6} parent=5 // pred_check
      _
    $region10: #{lame_sage.6} parent=5 // pred_check_branch
      %166 = sbr.rel (%p163) target = $region12
    $region11: #{lame_sage.6} parent=5 // pred_region
      %s167 = ssub.s32 %s12, 1
      // Predicated region
      $region13: #{lame_sage.6} parent=11 // pred_check
        %p168 = pneg %p59
      $region14: #{lame_sage.6} parent=11 // pred_check_branch
        %170 = sbr.rel (%p168) target = $region16
      $region15: #{lame_sage.6} parent=11 // pred_region
        _
      $region16: #{lame_sage.6} parent=11 // pred_fallthru
        _
      // Predicated region
      $region17: #{lame_sage.6} parent=11 // pred_check
        %p171 = pneg %p80
      $region18: #{lame_sage.6} parent=11 // pred_check_branch
        %173 = sbr.rel (%p171) target = $region20
      $region19: #{lame_sage.6} parent=11 // pred_region
        _
      $region20: #{lame_sage.6} parent=11 // pred_fallthru
        _
      // Predicated region
      $region21: #{lame_sage.6} parent=11 // pred_check
        %p174 = pneg %p101
      $region22: #{lame_sage.6} parent=11 // pred_check_branch
        %176 = sbr.rel (%p174) target = $region24
      $region23: #{lame_sage.6} parent=11 // pred_region
        _
      $region24: #{lame_sage.6} parent=11 // pred_fallthru
        _
    $region12: #{lame_sage.6} parent=5 // pred_fallthru
      _
    %p177 = scmp.lt.s32.totalorder %s12, 2
    // Predicated region
    $region25: #{lame_sage.6} parent=5 // pred_check
      %p178 = pneg %p177
    $region26: #{lame_sage.6} parent=5 // pred_check_branch
      %180 = sbr.rel (%p178) target = $region28
    $region27: #{lame_sage.6} parent=5 // pred_region
      // Predicated region
      $region29: #{lame_sage.6} parent=27 // pred_check
        %p181 = pneg %p32
      $region30: #{lame_sage.6} parent=27 // pred_check_branch
        %183 = sbr.rel (%p181) target = $region32
      $region31: #{lame_sage.6} parent=27 // pred_region
        %s184 = smul.u32 32, %s12
        %p185 = scmp.lt.s32.totalorder %s184, 63
        %s186 = scalar_select %p185, %s184, 63
        %s187 = smul.addr %s186, 8
        %s188 = scalar_lea.vmem %s0, %s187
        %s189 = smul.u32 32, %s12
      $region32: #{lame_sage.6} parent=27 // pred_fallthru
        _
    $region28: #{lame_sage.6} parent=5 // pred_fallthru
      _
    %p190 = scmp.le.s32.totalorder 1, %s12
    %p191 = scmp.lt.s32.totalorder %s12, 3
    %p192 = pnand %p190, %p191
    %p193 = pneg %p192
    // Predicated region
    $region33: #{lame_sage.6} parent=5 // pred_check
      _
    $region34: #{lame_sage.6} parent=5 // pred_check_branch
      %195 = sbr.rel (%p192) target = $region36
    $region35: #{lame_sage.6} parent=5 // pred_region
      %s196 = ssub.s32 %s12, 1
      %s197 = smul.u32 32, %s17
      %p198 = scmp.lt.s32.totalorder %s197, 63
      %s199 = scalar_select %p198, %s197, 63
      %s200 = smul.addr %s199, 8
      %s201 = scalar_lea.vmem %s0, %s200
      %p202 = pneg %p38
      %p203 = pneg %p35
      %p204 = pneg %p59
      %p205 = pneg %p56
      %p206 = pneg %p80
      %p207 = pneg %p77
      %p208 = pneg %p101
      %p209 = pneg %p98
      %p210 = pneg %p127
      %p211 = pneg %p124
      %s212 = smul.u32 32, %s17
      %p213 = scmp.lt.s32.totalorder %s212, 63
      %s214 = scalar_select %p213, %s212, 63
      %s215 = smul.addr %s214, 4
      %s216 = scalar_lea.vmem %s4, %s215
      %p217 = pneg %p153
      %p218 = pneg %p150
      %s219 = smul.u32 32, %s17
      %p220 = scmp.lt.s32.totalorder %s219, 63
      %s221 = scalar_select %p220, %s219, 63
      %s222 = smul.addr %s221, 8
      %s223 = scalar_lea.vmem %s5, %s222
      %s224 = smul.u32 32, %s17
      %p225 = scmp.lt.s32.totalorder %s224, 63
      %s226 = scalar_select %p225, %s224, 63
      %s227 = smul.addr %s226, 8
      %s228 = scalar_lea.vmem %s0, %s227
      %s229 = smul.u32 32, %s17
      %s230 = smul.u32 32, %s17
      %p231 = scmp.lt.s32.totalorder %s230, 63
      %s232 = scalar_select %p231, %s230, 63
      %s233 = smul.addr %s232, 4
      %s234 = scalar_lea.vmem %s4, %s233
      %s235 = smul.u32 32, %s17
      %s236 = smul.u32 32, %s17
      %p237 = scmp.lt.s32.totalorder %s236, 63
      %s238 = scalar_select %p237, %s236, 63
      %s239 = smul.addr %s238, 8
      %s240 = scalar_lea.vmem %s5, %s239
      %s241 = smul.u32 32, %s17
      %v242 = vld [vmem:[%s228] sm:$0xff]
      %v243 = vld [vmem:[%s228 + $0x8] sm:$0xff]
      %v244 = vld [vmem:[%s228 + $0x10] sm:$0xff]
      %v245 = vld [vmem:[%s228 + $0x18] sm:$0xff]
      %v246 = vld [vmem:[%s228 + $0x20] sm:$0xff]
      %v247 = vld [vmem:[%s228 + $0x28] sm:$0xff]
      %v248 = vld [vmem:[%s228 + $0x30] sm:$0xff]
      %v249 = vld [vmem:[%s228 + $0x38] sm:$0xff]
      %v250 = vld [vmem:[%s228 + $0x40] sm:$0xff]
      %v251 = vld [vmem:[%s228 + $0x48] sm:$0xff]
      %v252 = vld [vmem:[%s228 + $0x50] sm:$0xff]
      %v253 = vld [vmem:[%s228 + $0x58] sm:$0xff]
      %v254 = vld [vmem:[%s228 + $0x60] sm:$0xff]
      %v255 = vld [vmem:[%s228 + $0x68] sm:$0xff]
      %v256 = vld [vmem:[%s228 + $0x70] sm:$0xff]
      %v257 = vld [vmem:[%s228 + $0x78] sm:$0xff]
      %v258 = vld [vmem:[%s228 + $0x80] sm:$0xff]
      %v259 = vld [vmem:[%s228 + $0x88] sm:$0xff]
      %v260 = vld [vmem:[%s228 + $0x90] sm:$0xff]
      %v261 = vld [vmem:[%s228 + $0x98] sm:$0xff]
      %v262 = vld [vmem:[%s228 + $0xa0] sm:$0xff]
      %v263 = vld [vmem:[%s228 + $0xa8] sm:$0xff]
      %v264 = vld [vmem:[%s228 + $0xb0] sm:$0xff]
      %v265 = vld [vmem:[%s228 + $0xb8] sm:$0xff]
      %v266 = vld [vmem:[%s228 + $0xc0] sm:$0xff]
      %v267 = vld [vmem:[%s228 + $0xc8] sm:$0xff]
      %v268 = vld [vmem:[%s228 + $0xd0] sm:$0xff]
      %v269 = vld [vmem:[%s228 + $0xd8] sm:$0xff]
      %v270 = vld [vmem:[%s228 + $0xe0] sm:$0xff]
      %v271 = vld [vmem:[%s228 + $0xe8] sm:$0xff]
      %v272 = vld [vmem:[%s228 + $0xf0] sm:$0xff]
      %v273 = vld [vmem:[%s228 + $0xf8] sm:$0xff]
      %v274 = vld [vmem:[%s1] sm:$0xff]
      %v275 = vld [vmem:[%s1 + $0x8] sm:$0xff]
      %v276 = vld [vmem:[%s1 + $0x10] sm:$0xff]
      %v277 = vld [vmem:[%s1 + $0x18] sm:$0xff]
      %v278 = vld [vmem:[%s1 + $0x20] sm:$0xff]
      %v279 = vld [vmem:[%s1 + $0x28] sm:$0xff]
      %v280 = vld [vmem:[%s1 + $0x30] sm:$0xff]
      %v281 = vld [vmem:[%s1 + $0x38] sm:$0xff]
      %v282 = vld [vmem:[%s1 + $0x40] sm:$0xff]
      %v283 = vld [vmem:[%s1 + $0x48] sm:$0xff]
      %v284 = vld [vmem:[%s1 + $0x50] sm:$0xff]
      %v285 = vld [vmem:[%s1 + $0x58] sm:$0xff]
      %v286 = vld [vmem:[%s1 + $0x60] sm:$0xff]
      %v287 = vld [vmem:[%s1 + $0x68] sm:$0xff]
      %v288 = vld [vmem:[%s1 + $0x70] sm:$0xff]
      %v289 = vld [vmem:[%s1 + $0x78] sm:$0xff]
      %290 = vmatpush.msra.mxu0 %v289
      %291 = vmatpush.msra.mxu0 %v288
      %292 = vmatpush.msra.mxu0 %v287
      %293 = vmatpush.msra.mxu0 %v286
      %294 = vmatpush.msra.mxu0 %v285
      %295 = vmatpush.msra.mxu0 %v284
      %296 = vmatpush.msra.mxu0 %v283
      %297 = vmatpush.msra.mxu0 %v282
      %298 = vmatpush.msra.mxu0 %v281
      %299 = vmatpush.msra.mxu0 %v280
      %300 = vmatpush.msra.mxu0 %v279
      %301 = vmatpush.msra.mxu0 %v278
      %302 = vmatpush.msra.mxu0 %v277
      %303 = vmatpush.msra.mxu0 %v276
      %304 = vmatpush.msra.mxu0 %v275
      %305 = vmatpush.msra.mxu0 %v274
      %306 = vmatmul.f32.gmra.mxu0 %v242
      %v307 = vpop.f32.mrf.mxu0
      %v308 = vadd.f32 0.0, %v307
      %309 = vmatmul.f32.gmra.mxu0 %v243
      %v310 = vpop.f32.mrf.mxu0
      %v311 = vadd.f32 0.0, %v310
      %312 = vmatmul.f32.gmra.mxu0 %v244
      %v313 = vpop.f32.mrf.mxu0
      %v314 = vadd.f32 0.0, %v313
      %315 = vmatmul.f32.gmra.mxu0 %v245
      %v316 = vpop.f32.mrf.mxu0
      %v317 = vadd.f32 0.0, %v316
      %318 = vmatmul.f32.gmra.mxu0 %v246
      %v319 = vpop.f32.mrf.mxu0
      %v320 = vadd.f32 0.0, %v319
      %321 = vmatmul.f32.gmra.mxu0 %v247
      %v322 = vpop.f32.mrf.mxu0
      %v323 = vadd.f32 0.0, %v322
      %324 = vmatmul.f32.gmra.mxu0 %v248
      %v325 = vpop.f32.mrf.mxu0
      %v326 = vadd.f32 0.0, %v325
      %327 = vmatmul.f32.gmra.mxu0 %v249
      %v328 = vpop.f32.mrf.mxu0
      %v329 = vadd.f32 0.0, %v328
      %330 = vmatmul.f32.gmra.mxu0 %v250
      %v331 = vpop.f32.mrf.mxu0
      %v332 = vadd.f32 0.0, %v331
      %333 = vmatmul.f32.gmra.mxu0 %v251
      %v334 = vpop.f32.mrf.mxu0
      %v335 = vadd.f32 0.0, %v334
      %336 = vmatmul.f32.gmra.mxu0 %v252
      %v337 = vpop.f32.mrf.mxu0
      %v338 = vadd.f32 0.0, %v337
      %339 = vmatmul.f32.gmra.mxu0 %v253
      %v340 = vpop.f32.mrf.mxu0
      %v341 = vadd.f32 0.0, %v340
      %342 = vmatmul.f32.gmra.mxu0 %v254
      %v343 = vpop.f32.mrf.mxu0
      %v344 = vadd.f32 0.0, %v343
      %345 = vmatmul.f32.gmra.mxu0 %v255
      %v346 = vpop.f32.mrf.mxu0
      %v347 = vadd.f32 0.0, %v346
      %348 = vmatmul.f32.gmra.mxu0 %v256
      %v349 = vpop.f32.mrf.mxu0
      %v350 = vadd.f32 0.0, %v349
      %351 = vmatmul.f32.gmra.mxu0 %v257
      %v352 = vpop.f32.mrf.mxu0
      %v353 = vadd.f32 0.0, %v352
      %354 = vmatmul.f32.gmra.mxu0 %v258
      %v355 = vpop.f32.mrf.mxu0
      %v356 = vadd.f32 0.0, %v355
      %357 = vmatmul.f32.gmra.mxu0 %v259
      %v358 = vpop.f32.mrf.mxu0
      %v359 = vadd.f32 0.0, %v358
      %360 = vmatmul.f32.gmra.mxu0 %v260
      %v361 = vpop.f32.mrf.mxu0
      %v362 = vadd.f32 0.0, %v361
      %363 = vmatmul.f32.gmra.mxu0 %v261
      %v364 = vpop.f32.mrf.mxu0
      %v365 = vadd.f32 0.0, %v364
      %366 = vmatmul.f32.gmra.mxu0 %v262
      %v367 = vpop.f32.mrf.mxu0
      %v368 = vadd.f32 0.0, %v367
      %369 = vmatmul.f32.gmra.mxu0 %v263
      %v370 = vpop.f32.mrf.mxu0
      %v371 = vadd.f32 0.0, %v370
      %372 = vmatmul.f32.gmra.mxu0 %v264
      %v373 = vpop.f32.mrf.mxu0
      %v374 = vadd.f32 0.0, %v373
      %375 = vmatmul.f32.gmra.mxu0 %v265
      %v376 = vpop.f32.mrf.mxu0
      %v377 = vadd.f32 0.0, %v376
      %378 = vmatmul.f32.gmra.mxu0 %v266
      %v379 = vpop.f32.mrf.mxu0
      %v380 = vadd.f32 0.0, %v379
      %381 = vmatmul.f32.gmra.mxu0 %v267
      %v382 = vpop.f32.mrf.mxu0
      %v383 = vadd.f32 0.0, %v382
      %384 = vmatmul.f32.gmra.mxu0 %v268
      %v385 = vpop.f32.mrf.mxu0
      %v386 = vadd.f32 0.0, %v385
      %387 = vmatmul.f32.gmra.mxu0 %v269
      %v388 = vpop.f32.mrf.mxu0
      %v389 = vadd.f32 0.0, %v388
      %390 = vmatmul.f32.gmra.mxu0 %v270
      %v391 = vpop.f32.mrf.mxu0
      %v392 = vadd.f32 0.0, %v391
      %393 = vmatmul.f32.gmra.mxu0 %v271
      %v394 = vpop.f32.mrf.mxu0
      %v395 = vadd.f32 0.0, %v394
      %396 = vmatmul.f32.gmra.mxu0 %v272
      %v397 = vpop.f32.mrf.mxu0
      %v398 = vadd.f32 0.0, %v397
      %399 = vmatmul.f32.gmra.mxu0 %v273
      %v400 = vpop.f32.mrf.mxu0
      %v401 = vadd.f32 0.0, %v400
      %402 = vdwg.mxu0
      %v403 = vld [vmem:[%s2] sm:$0xff]
      %v404 = vld [vmem:[%s2 + $0x8] sm:$0xff]
      %v405 = vld [vmem:[%s2 + $0x10] sm:$0xff]
      %v406 = vld [vmem:[%s2 + $0x18] sm:$0xff]
      %v407 = vld [vmem:[%s2 + $0x20] sm:$0xff]
      %v408 = vld [vmem:[%s2 + $0x28] sm:$0xff]
      %v409 = vld [vmem:[%s2 + $0x30] sm:$0xff]
      %v410 = vld [vmem:[%s2 + $0x38] sm:$0xff]
      %v411 = vld [vmem:[%s2 + $0x40] sm:$0xff]
      %v412 = vld [vmem:[%s2 + $0x48] sm:$0xff]
      %v413 = vld [vmem:[%s2 + $0x50] sm:$0xff]
      %v414 = vld [vmem:[%s2 + $0x58] sm:$0xff]
      %v415 = vld [vmem:[%s2 + $0x60] sm:$0xff]
      %v416 = vld [vmem:[%s2 + $0x68] sm:$0xff]
      %v417 = vld [vmem:[%s2 + $0x70] sm:$0xff]
      %v418 = vld [vmem:[%s2 + $0x78] sm:$0xff]
      %v419 = vld [vmem:[%s3] sm:$0x1]
      %v421 = vperm.slane %v419, 0
      %423 = vmatpush.msra.mxu0 %v418
      %424 = vmatpush.msra.mxu0 %v417
      %425 = vmatpush.msra.mxu0 %v416
      %426 = vmatpush.msra.mxu0 %v415
      %427 = vmatpush.msra.mxu0 %v414
      %428 = vmatpush.msra.mxu0 %v413
      %429 = vmatpush.msra.mxu0 %v412
      %430 = vmatpush.msra.mxu0 %v411
      %431 = vmatpush.msra.mxu0 %v410
      %432 = vmatpush.msra.mxu0 %v409
      %433 = vmatpush.msra.mxu0 %v408
      %434 = vmatpush.msra.mxu0 %v407
      %435 = vmatpush.msra.mxu0 %v406
      %436 = vmatpush.msra.mxu0 %v405
      %437 = vmatpush.msra.mxu0 %v404
      %438 = vmatpush.msra.mxu0 %v403
      %439 = vmatmul.f32.gmra.mxu0 %v242
      %v440 = vpop.f32.mrf.mxu0
      %v441 = vadd.f32 %v421, %v440
      %442 = vmatmul.f32.gmra.mxu0 %v243
      %v443 = vpop.f32.mrf.mxu0
      %v444 = vadd.f32 %v421, %v443
      %445 = vmatmul.f32.gmra.mxu0 %v244
      %v446 = vpop.f32.mrf.mxu0
      %v447 = vadd.f32 %v421, %v446
      %448 = vmatmul.f32.gmra.mxu0 %v245
      %v449 = vpop.f32.mrf.mxu0
      %v450 = vadd.f32 %v421, %v449
      %451 = vmatmul.f32.gmra.mxu0 %v246
      %v452 = vpop.f32.mrf.mxu0
      %v453 = vadd.f32 %v421, %v452
      %454 = vmatmul.f32.gmra.mxu0 %v247
      %v455 = vpop.f32.mrf.mxu0
      %v456 = vadd.f32 %v421, %v455
      %457 = vmatmul.f32.gmra.mxu0 %v248
      %v458 = vpop.f32.mrf.mxu0
      %v459 = vadd.f32 %v421, %v458
      %460 = vmatmul.f32.gmra.mxu0 %v249
      %v461 = vpop.f32.mrf.mxu0
      %v462 = vadd.f32 %v421, %v461
      %463 = vmatmul.f32.gmra.mxu0 %v250
      %v464 = vpop.f32.mrf.mxu0
      %v465 = vadd.f32 %v421, %v464
      %466 = vmatmul.f32.gmra.mxu0 %v251
      %v467 = vpop.f32.mrf.mxu0
      %v468 = vadd.f32 %v421, %v467
      %469 = vmatmul.f32.gmra.mxu0 %v252
      %v470 = vpop.f32.mrf.mxu0
      %v471 = vadd.f32 %v421, %v470
      %472 = vmatmul.f32.gmra.mxu0 %v253
      %v473 = vpop.f32.mrf.mxu0
      %v474 = vadd.f32 %v421, %v473
      %475 = vmatmul.f32.gmra.mxu0 %v254
      %v476 = vpop.f32.mrf.mxu0
      %v477 = vadd.f32 %v421, %v476
      %478 = vmatmul.f32.gmra.mxu0 %v255
      %v479 = vpop.f32.mrf.mxu0
      %v480 = vadd.f32 %v421, %v479
      %481 = vmatmul.f32.gmra.mxu0 %v256
      %v482 = vpop.f32.mrf.mxu0
      %v483 = vadd.f32 %v421, %v482
      %484 = vmatmul.f32.gmra.mxu0 %v257
      %v485 = vpop.f32.mrf.mxu0
      %v486 = vadd.f32 %v421, %v485
      %487 = vmatmul.f32.gmra.mxu0 %v258
      %v488 = vpop.f32.mrf.mxu0
      %v489 = vadd.f32 %v421, %v488
      %490 = vmatmul.f32.gmra.mxu0 %v259
      %v491 = vpop.f32.mrf.mxu0
      %v492 = vadd.f32 %v421, %v491
      %493 = vmatmul.f32.gmra.mxu0 %v260
      %v494 = vpop.f32.mrf.mxu0
      %v495 = vadd.f32 %v421, %v494
      %496 = vmatmul.f32.gmra.mxu0 %v261
      %v497 = vpop.f32.mrf.mxu0
      %v498 = vadd.f32 %v421, %v497
      %499 = vmatmul.f32.gmra.mxu0 %v262
      %v500 = vpop.f32.mrf.mxu0
      %v501 = vadd.f32 %v421, %v500
      %502 = vmatmul.f32.gmra.mxu0 %v263
      %v503 = vpop.f32.mrf.mxu0
      %v504 = vadd.f32 %v421, %v503
      %505 = vmatmul.f32.gmra.mxu0 %v264
      %v506 = vpop.f32.mrf.mxu0
      %v507 = vadd.f32 %v421, %v506
      %508 = vmatmul.f32.gmra.mxu0 %v265
      %v509 = vpop.f32.mrf.mxu0
      %v510 = vadd.f32 %v421, %v509
      %511 = vmatmul.f32.gmra.mxu0 %v266
      %v512 = vpop.f32.mrf.mxu0
      %v513 = vadd.f32 %v421, %v512
      %514 = vmatmul.f32.gmra.mxu0 %v267
      %v515 = vpop.f32.mrf.mxu0
      %v516 = vadd.f32 %v421, %v515
      %517 = vmatmul.f32.gmra.mxu0 %v268
      %v518 = vpop.f32.mrf.mxu0
      %v519 = vadd.f32 %v421, %v518
      %520 = vmatmul.f32.gmra.mxu0 %v269
      %v521 = vpop.f32.mrf.mxu0
      %v522 = vadd.f32 %v421, %v521
      %523 = vmatmul.f32.gmra.mxu0 %v270
      %v524 = vpop.f32.mrf.mxu0
      %v525 = vadd.f32 %v421, %v524
      %526 = vmatmul.f32.gmra.mxu0 %v271
      %v527 = vpop.f32.mrf.mxu0
      %v528 = vadd.f32 %v421, %v527
      %529 = vmatmul.f32.gmra.mxu0 %v272
      %v530 = vpop.f32.mrf.mxu0
      %v531 = vadd.f32 %v421, %v530
      %532 = vmatmul.f32.gmra.mxu0 %v273
      %v533 = vpop.f32.mrf.mxu0
      %v534 = vadd.f32 %v421, %v533
      %535 = vdwg.mxu0
      %v536 = vpack.c.bf16 %v308, %v308
      %v537 = vpack.c.bf16 %v311, %v311
      %v538 = vpack.c.bf16 %v314, %v314
      %v539 = vpack.c.bf16 %v317, %v317
      %v540 = vpack.c.bf16 %v320, %v320
      %v541 = vpack.c.bf16 %v323, %v323
      %v542 = vpack.c.bf16 %v326, %v326
      %v543 = vpack.c.bf16 %v329, %v329
      %v544 = vpack.c.bf16 %v332, %v332
      %v545 = vpack.c.bf16 %v335, %v335
      %v546 = vpack.c.bf16 %v338, %v338
      %v547 = vpack.c.bf16 %v341, %v341
      %v548 = vpack.c.bf16 %v344, %v344
      %v549 = vpack.c.bf16 %v347, %v347
      %v550 = vpack.c.bf16 %v350, %v350
      %v551 = vpack.c.bf16 %v353, %v353
      %v552 = vpack.c.bf16 %v356, %v356
      %v553 = vpack.c.bf16 %v359, %v359
      %v554 = vpack.c.bf16 %v362, %v362
      %v555 = vpack.c.bf16 %v365, %v365
      %v556 = vpack.c.bf16 %v368, %v368
      %v557 = vpack.c.bf16 %v371, %v371
      %v558 = vpack.c.bf16 %v374, %v374
      %v559 = vpack.c.bf16 %v377, %v377
      %v560 = vpack.c.bf16 %v380, %v380
      %v561 = vpack.c.bf16 %v383, %v383
      %v562 = vpack.c.bf16 %v386, %v386
      %v563 = vpack.c.bf16 %v389, %v389
      %v564 = vpack.c.bf16 %v392, %v392
      %v565 = vpack.c.bf16 %v395, %v395
      %v566 = vpack.c.bf16 %v398, %v398
      %v567 = vpack.c.bf16 %v401, %v401
      %568 = vst [vmem:[%s234] sm:$0xf] %v536
      %569 = vst [vmem:[%s234 + $0x4] sm:$0xf] %v537
      %570 = vst [vmem:[%s234 + $0x8] sm:$0xf] %v538
      %571 = vst [vmem:[%s234 + $0xc] sm:$0xf] %v539
      %572 = vst [vmem:[%s234 + $0x10] sm:$0xf] %v540
      %573 = vst [vmem:[%s234 + $0x14] sm:$0xf] %v541
      %574 = vst [vmem:[%s234 + $0x18] sm:$0xf] %v542
      %575 = vst [vmem:[%s234 + $0x1c] sm:$0xf] %v543
      %576 = vst [vmem:[%s234 + $0x20] sm:$0xf] %v544
      %577 = vst [vmem:[%s234 + $0x24] sm:$0xf] %v545
      %578 = vst [vmem:[%s234 + $0x28] sm:$0xf] %v546
      %579 = vst [vmem:[%s234 + $0x2c] sm:$0xf] %v547
      %580 = vst [vmem:[%s234 + $0x30] sm:$0xf] %v548
      %581 = vst [vmem:[%s234 + $0x34] sm:$0xf] %v549
      %582 = vst [vmem:[%s234 + $0x38] sm:$0xf] %v550
      %583 = vst [vmem:[%s234 + $0x3c] sm:$0xf] %v551
      %584 = vst [vmem:[%s234 + $0x40] sm:$0xf] %v552
      %585 = vst [vmem:[%s234 + $0x44] sm:$0xf] %v553
      %586 = vst [vmem:[%s234 + $0x48] sm:$0xf] %v554
      %587 = vst [vmem:[%s234 + $0x4c] sm:$0xf] %v555
      %588 = vst [vmem:[%s234 + $0x50] sm:$0xf] %v556
      %589 = vst [vmem:[%s234 + $0x54] sm:$0xf] %v557
      %590 = vst [vmem:[%s234 + $0x58] sm:$0xf] %v558
      %591 = vst [vmem:[%s234 + $0x5c] sm:$0xf] %v559
      %592 = vst [vmem:[%s234 + $0x60] sm:$0xf] %v560
      %593 = vst [vmem:[%s234 + $0x64] sm:$0xf] %v561
      %594 = vst [vmem:[%s234 + $0x68] sm:$0xf] %v562
      %595 = vst [vmem:[%s234 + $0x6c] sm:$0xf] %v563
      %596 = vst [vmem:[%s234 + $0x70] sm:$0xf] %v564
      %597 = vst [vmem:[%s234 + $0x74] sm:$0xf] %v565
      %598 = vst [vmem:[%s234 + $0x78] sm:$0xf] %v566
      %599 = vst [vmem:[%s234 + $0x7c] sm:$0xf] %v567
      %600 = vst [vmem:[%s240] sm:$0xff] %v441
      %601 = vst [vmem:[%s240 + $0x8] sm:$0xff] %v444
      %602 = vst [vmem:[%s240 + $0x10] sm:$0xff] %v447
      %603 = vst [vmem:[%s240 + $0x18] sm:$0xff] %v450
      %604 = vst [vmem:[%s240 + $0x20] sm:$0xff] %v453
      %605 = vst [vmem:[%s240 + $0x28] sm:$0xff] %v456
      %606 = vst [vmem:[%s240 + $0x30] sm:$0xff] %v459
      %607 = vst [vmem:[%s240 + $0x38] sm:$0xff] %v462
      %608 = vst [vmem:[%s240 + $0x40] sm:$0xff] %v465
      %609 = vst [vmem:[%s240 + $0x48] sm:$0xff] %v468
      %610 = vst [vmem:[%s240 + $0x50] sm:$0xff] %v471
      %611 = vst [vmem:[%s240 + $0x58] sm:$0xff] %v474
      %612 = vst [vmem:[%s240 + $0x60] sm:$0xff] %v477
      %613 = vst [vmem:[%s240 + $0x68] sm:$0xff] %v480
      %614 = vst [vmem:[%s240 + $0x70] sm:$0xff] %v483
      %615 = vst [vmem:[%s240 + $0x78] sm:$0xff] %v486
      %616 = vst [vmem:[%s240 + $0x80] sm:$0xff] %v489
      %617 = vst [vmem:[%s240 + $0x88] sm:$0xff] %v492
      %618 = vst [vmem:[%s240 + $0x90] sm:$0xff] %v495
      %619 = vst [vmem:[%s240 + $0x98] sm:$0xff] %v498
      %620 = vst [vmem:[%s240 + $0xa0] sm:$0xff] %v501
      %621 = vst [vmem:[%s240 + $0xa8] sm:$0xff] %v504
      %622 = vst [vmem:[%s240 + $0xb0] sm:$0xff] %v507
      %623 = vst [vmem:[%s240 + $0xb8] sm:$0xff] %v510
      %624 = vst [vmem:[%s240 + $0xc0] sm:$0xff] %v513
      %625 = vst [vmem:[%s240 + $0xc8] sm:$0xff] %v516
      %626 = vst [vmem:[%s240 + $0xd0] sm:$0xff] %v519
      %627 = vst [vmem:[%s240 + $0xd8] sm:$0xff] %v522
      %628 = vst [vmem:[%s240 + $0xe0] sm:$0xff] %v525
      %629 = vst [vmem:[%s240 + $0xe8] sm:$0xff] %v528
      %630 = vst [vmem:[%s240 + $0xf0] sm:$0xff] %v531
      %631 = vst [vmem:[%s240 + $0xf8] sm:$0xff] %v534
      %s632 = smul.u32 32, %s17
      %p633 = scmp.lt.s32.totalorder %s632, 63
      %s634 = scalar_select %p633, %s632, 63
      %s635 = smul.addr %s634, 4
      %s636 = scalar_lea.vmem %s4, %s635
      %s637 = smul.u32 32, %s17
      %p638 = scmp.lt.s32.totalorder %s637, 63
      %s639 = scalar_select %p638, %s637, 63
      %s640 = smul.addr %s639, 8
      %s641 = scalar_lea.vmem %s5, %s640
      // Predicated region
      $region37: #{lame_sage.6} parent=35 // pred_check
        %p642 = pneg %p124
      $region38: #{lame_sage.6} parent=35 // pred_check_branch
        %644 = sbr.rel (%p642) target = $region40
      $region39: #{lame_sage.6} parent=35 // pred_region
        %s645 = smul.u32 32, %s17
      $region40: #{lame_sage.6} parent=35 // pred_fallthru
        _
      // Predicated region
      $region41: #{lame_sage.6} parent=35 // pred_check
        %p646 = pneg %p150
      $region42: #{lame_sage.6} parent=35 // pred_check_branch
        %648 = sbr.rel (%p646) target = $region44
      $region43: #{lame_sage.6} parent=35 // pred_region
        %s649 = smul.u32 32, %s17
      $region44: #{lame_sage.6} parent=35 // pred_fallthru
        _
    $region36: #{lame_sage.6} parent=5 // pred_fallthru
      _
    %p650 = scmp.le.s32.totalorder 2, %s12
    // Predicated region
    $region45: #{lame_sage.6} parent=5 // pred_check
      %p651 = pneg %p650
    $region46: #{lame_sage.6} parent=5 // pred_check_branch
      %653 = sbr.rel (%p651) target = $region48
    $region47: #{lame_sage.6} parent=5 // pred_region
      %s654 = ssub.s32 %s12, 2
      // Predicated region
      $region49: #{lame_sage.6} parent=47 // pred_check
        %p655 = pneg %p130
      $region50: #{lame_sage.6} parent=47 // pred_check_branch
        %657 = sbr.rel (%p655) target = $region52
      $region51: #{lame_sage.6} parent=47 // pred_region
        %s658 = smul.u32 32, %s18
        %p659 = scmp.lt.s32.totalorder %s658, 63
        %s660 = scalar_select %p659, %s658, 63
        %s661 = smul.addr %s660, 4
        %s662 = scalar_lea.vmem %s4, %s661
      $region52: #{lame_sage.6} parent=47 // pred_fallthru
        _
      // Predicated region
      $region53: #{lame_sage.6} parent=47 // pred_check
        %p663 = pneg %p156
      $region54: #{lame_sage.6} parent=47 // pred_check_branch
        %665 = sbr.rel (%p663) target = $region56
      $region55: #{lame_sage.6} parent=47 // pred_region
        %s666 = smul.u32 32, %s18
        %p667 = scmp.lt.s32.totalorder %s666, 63
        %s668 = scalar_select %p667, %s666, 63
        %s669 = smul.addr %s668, 8
        %s670 = scalar_lea.vmem %s5, %s669
      $region56: #{lame_sage.6} parent=47 // pred_fallthru
        _
    $region48: #{lame_sage.6} parent=5 // pred_fallthru
      _
  $region6: #{lame_sage.6} parent=0 // loop_footer
    %s16 = sadd.s32 1, %s12
  $region7: #{lame_sage.6} parent=0 // loop_footer_branch
    %11 = sbr.rel target = $region3
  $region8: #{lame_sage.6} parent=0 // loop_exit
    _

// kernel: lame_sage.7
$region0: #{lame_sage.7}
  #allocation0 [shape = 'u32[]', space=smem, size = 0x4, offset = 0x4, fixed_abs, tag = 'smem constant byte address 0x4 - core index']
  #allocation1 [shape = 'u32[72,128]{1,0:T(1,128)}', space=vmem, size = 0x9000, scoped, tag = 'internal scratch']
  #allocation2 [shape = 'f32[256,128]{1,0:T(8,128)}', space=vmem, size = 0x20000, scoped, tag = 'scratch operand']
  %s0 = inlined_call_operand.vmem [shape: bf16[512,512], index: 0, kind: input, shape index: {}]
  %s1 = inlined_call_operand.vmem [shape: bf16[512,128], index: 1, kind: input, shape index: {}]
  %s2 = inlined_call_operand.vmem [shape: f32[512,128], index: 2, kind: input, shape index: {}]
  %s3 = inlined_call_operand.vmem [shape: f32[512,128], index: 3, kind: output, shape index: {}]
  %s4 = sld [smem:[#allocation0]]
  $region91: #{lame_sage.7} parent=0
    _
  %s6 = ssub.s32 1, %s4
  %s7 = scalar_select 0, %s6, %s4
  $region1: #{lame_sage.7} parent=0
    #allocation3 [shape = 'u8[262144]{0}', space=vmem, size = 0x40000, scoped, tag = 'input window, operand 0']
    loop: start=0, step=1, limit=6
    $region2: #{lame_sage.7} parent=1 // loop_pre_header
      _
    $region3: #{lame_sage.7} parent=1 // loop_header
      %s9 = sphi 0, %s13
      %p10 = scmp.ge.s32.totalorder %s9, 6
      %s16 = sphi 0, %s28
      %s17 = sphi 0, %s24
      %s18 = sphi 0, %s16
      %s19 = sphi 0, %s17
      %s20 = sphi 0, %s18
      %s21 = sphi 0, %s19
      %s33 = sphi 0, %s35
      %s36 = sphi 0, %s33
      %s37 = sphi 0, %s36
      %s53 = sphi 0, %s37
      %s59 = sphi 0, %s61
      %s62 = sphi 0, %s59
      %s63 = sphi 0, %s62
      %s79 = sphi 0, %s63
      %s85 = sphi 0, %s87
      %s88 = sphi 0, %s85
      %s89 = sphi 0, %s88
      %s105 = sphi 0, %s89
      %s111 = sphi 0, %s113
      %s114 = sphi 0, %s111
      %s115 = sphi 0, %s114
      %s131 = sphi 0, %s115
    $region4: #{lame_sage.7} parent=1 // loop_header_branch
      %12 = sbr.rel (%p10) target = $region8
    $region5: #{lame_sage.7} parent=1 // loop_body
      %s14 = ssub.s32 %s9, 1
      %s15 = ssub.s32 %s9, 2
      %s22 = sadd.s32 1, %s17
      %p23 = scmp.ge.s32.totalorder %s22, 2
      %s24 = scalar_select %p23, 0, %s22
      %s25 = sadd.s32 1, %s16
      %s26 = scalar_select %p23, %s25, %s16
      %p27 = scmp.ge.s32.totalorder %s26, 2
      %s28 = scalar_select %p27, 0, %s26
      %s29 = ssub.s32 %s16, %s28
      %s30 = ssub.s32 %s17, %s24
      %s31 = sor.u32 %s29, %s30
      %p32 = scmp.eq.s32.totalorder %s31, 0
      %s34 = sadd.s32 %s33, 1
      %s35 = scalar_select %p32, %s33, %s34
      %p38 = pneg %p32
      %p39 = scmp.eq.s32.totalorder %s9, 3
      %p40 = por %p38, %p39
      %p41 = scmp.ne.s32.totalorder %s33, %s36
      %p42 = scmp.eq.s32.totalorder %s9, 0
      %p43 = por %p41, %p42
      %p44 = scmp.ne.s32.totalorder %s33, %s36
      %p45 = scmp.eq.s32.totalorder %s14, 3
      %p46 = por %p44, %p45
      %p47 = scmp.ne.s32.totalorder %s36, %s37
      %p48 = scmp.eq.s32.totalorder %s14, 0
      %p49 = por %p47, %p48
      %p50 = scmp.ne.s32.totalorder %s36, %s37
      %p51 = scmp.eq.s32.totalorder %s15, 3
      %p52 = por %p50, %p51
      %p54 = scmp.ne.s32.totalorder %s37, %s53
      %p55 = scmp.eq.s32.totalorder %s15, 0
      %p56 = por %p54, %p55
      %s57 = ssub.s32 %s17, %s24
      %p58 = scmp.eq.s32.totalorder %s57, 0
      %s60 = sadd.s32 %s59, 1
      %s61 = scalar_select %p58, %s59, %s60
      %p64 = pneg %p58
      %p65 = scmp.eq.s32.totalorder %s9, 3
      %p66 = por %p64, %p65
      %p67 = scmp.ne.s32.totalorder %s59, %s62
      %p68 = scmp.eq.s32.totalorder %s9, 0
      %p69 = por %p67, %p68
      %p70 = scmp.ne.s32.totalorder %s59, %s62
      %p71 = scmp.eq.s32.totalorder %s14, 3
      %p72 = por %p70, %p71
      %p73 = scmp.ne.s32.totalorder %s62, %s63
      %p74 = scmp.eq.s32.totalorder %s14, 0
      %p75 = por %p73, %p74
      %p76 = scmp.ne.s32.totalorder %s62, %s63
      %p77 = scmp.eq.s32.totalorder %s15, 3
      %p78 = por %p76, %p77
      %p80 = scmp.ne.s32.totalorder %s63, %s79
      %p81 = scmp.eq.s32.totalorder %s15, 0
      %p82 = por %p80, %p81
      %s83 = ssub.s32 %s16, %s28
      %p84 = scmp.eq.s32.totalorder %s83, 0
      %s86 = sadd.s32 %s85, 1
      %s87 = scalar_select %p84, %s85, %s86
      %p90 = pneg %p84
      %p91 = scmp.eq.s32.totalorder %s9, 3
      %p92 = por %p90, %p91
      %p93 = scmp.ne.s32.totalorder %s85, %s88
      %p94 = scmp.eq.s32.totalorder %s9, 0
      %p95 = por %p93, %p94
      %p96 = scmp.ne.s32.totalorder %s85, %s88
      %p97 = scmp.eq.s32.totalorder %s14, 3
      %p98 = por %p96, %p97
      %p99 = scmp.ne.s32.totalorder %s88, %s89
      %p100 = scmp.eq.s32.totalorder %s14, 0
      %p101 = por %p99, %p100
      %p102 = scmp.ne.s32.totalorder %s88, %s89
      %p103 = scmp.eq.s32.totalorder %s15, 3
      %p104 = por %p102, %p103
      %p106 = scmp.ne.s32.totalorder %s89, %s105
      %p107 = scmp.eq.s32.totalorder %s15, 0
      %p108 = por %p106, %p107
      %s109 = ssub.s32 %s16, %s28
      %p110 = scmp.eq.s32.totalorder %s109, 0
      %s112 = sadd.s32 %s111, 1
      %s113 = scalar_select %p110, %s111, %s112
      %p116 = pneg %p110
      %p117 = scmp.eq.s32.totalorder %s9, 3
      %p118 = por %p116, %p117
      %p119 = scmp.ne.s32.totalorder %s111, %s114
      %p120 = scmp.eq.s32.totalorder %s9, 0
      %p121 = por %p119, %p120
      %p122 = scmp.ne.s32.totalorder %s111, %s114
      %p123 = scmp.eq.s32.totalorder %s14, 3
      %p124 = por %p122, %p123
      %p125 = scmp.ne.s32.totalorder %s114, %s115
      %p126 = scmp.eq.s32.totalorder %s14, 0
      %p127 = por %p125, %p126
      %p128 = scmp.ne.s32.totalorder %s114, %s115
      %p129 = scmp.eq.s32.totalorder %s15, 3
      %p130 = por %p128, %p129
      %p132 = scmp.ne.s32.totalorder %s115, %s131
      %p133 = scmp.eq.s32.totalorder %s15, 0
      %p134 = por %p132, %p133
      %p135 = scmp.le.s32.totalorder 1, %s9
      %p136 = scmp.lt.s32.totalorder %s9, 5
      %p137 = pnand %p135, %p136
      %p138 = pneg %p137
      // Predicated region
      $region9: #{lame_sage.7} parent=5 // pred_check
        _
      $region10: #{lame_sage.7} parent=5 // pred_check_branch
        %140 = sbr.rel (%p137) target = $region12
      $region11: #{lame_sage.7} parent=5 // pred_region
        %s141 = ssub.s32 %s9, 1
      $region12: #{lame_sage.7} parent=5 // pred_fallthru
        _
      %p142 = scmp.lt.s32.totalorder %s9, 4
      // Predicated region
      $region13: #{lame_sage.7} parent=5 // pred_check
        %p143 = pneg %p142
      $region14: #{lame_sage.7} parent=5 // pred_check_branch
        %145 = sbr.rel (%p143) target = $region16
      $region15: #{lame_sage.7} parent=5 // pred_region
        // Predicated region
        $region17: #{lame_sage.7} parent=15 // pred_check
          %p146 = pneg %p43
        $region18: #{lame_sage.7} parent=15 // pred_check_branch
          %148 = sbr.rel (%p146) target = $region20
        $region19: #{lame_sage.7} parent=15 // pred_region
          %s149 = sand.u32 %s33, 1
          %s150 = sand.u32 %s33, 1
          %s151 = smul.addr %s150, 256
          %s152 = scalar_lea.vmem [#allocation3], %s151
          %s153 = smul.u32 32, %s16
          %s154 = smul.u32 2, %s17
          %s155 = smul.addr %s153, 4
          %s156 = sadd.s32 %s154, %s155
          %s157 = smul.addr %s156, 4
          %s158 = scalar_lea.vmem %s0, %s157
          // Predicated region
          $region21: #{lame_sage.7} parent=19 // pred_check
            _
          $region22: #{lame_sage.7} parent=19 // pred_check_branch
            %160 = sbr.rel (0) target = $region24
          $region23: #{lame_sage.7} parent=19 // pred_region
            // Predicated region
            $region25: #{lame_sage.7} parent=23 // pred_check
              _
            $region26: #{lame_sage.7} parent=23 // pred_check_branch
              %162 = sbr.rel (0) target = $region28
            $region27: #{lame_sage.7} parent=23 // pred_region
              // Predicated region
              $region40: #{lame_sage.7} parent=27 // pred_check
                _
              $region41: #{lame_sage.7} parent=27 // pred_check_branch
                %240 = sbr.rel (0) target = $region43
              $region42: #{lame_sage.7} parent=27 // pred_region
                loop: start=0, step=1, limit=1
                $region44: #{lame_sage.7} parent=42 // loop_pre_header
                  _
                $region45: #{lame_sage.7} parent=42 // loop_header
                  %s242 = sphi 0, %s246
                  %p243 = scmp.ge.s32.totalorder %s242, 1
                  %s247 = sphi %s158, %s158
                  %s248 = sphi %s152, %s152
                $region46: #{lame_sage.7} parent=42 // loop_header_branch
                  %245 = sbr.rel (%p243) target = $region50
                $region47: #{lame_sage.7} parent=42 // loop_body
                  %v249 = vld [vmem:[%s247] sm:$0xff]
                  %250 = vst [vmem:[%s248] sm:$0xff] %v249
                  %v251 = vld [vmem:[%s247 + $0x10] sm:$0xff]
                  %252 = vst [vmem:[%s248 + $0x8] sm:$0xff] %v251
                  %v253 = vld [vmem:[%s247 + $0x20] sm:$0xff]
                  %254 = vst [vmem:[%s248 + $0x10] sm:$0xff] %v253
                  %v255 = vld [vmem:[%s247 + $0x30] sm:$0xff]
                  %256 = vst [vmem:[%s248 + $0x18] sm:$0xff] %v255
                  %v257 = vld [vmem:[%s247 + $0x40] sm:$0xff]
                  %258 = vst [vmem:[%s248 + $0x20] sm:$0xff] %v257
                  %v259 = vld [vmem:[%s247 + $0x50] sm:$0xff]
                  %260 = vst [vmem:[%s248 + $0x28] sm:$0xff] %v259
                  %v261 = vld [vmem:[%s247 + $0x60] sm:$0xff]
                  %262 = vst [vmem:[%s248 + $0x30] sm:$0xff] %v261
                  %v263 = vld [vmem:[%s247 + $0x70] sm:$0xff]
                  %264 = vst [vmem:[%s248 + $0x38] sm:$0xff] %v263
                  %v265 = vld [vmem:[%s247 + $0x80] sm:$0xff]
                  %266 = vst [vmem:[%s248 + $0x40] sm:$0xff] %v265
                  %v267 = vld [vmem:[%s247 + $0x90] sm:$0xff]
                  %268 = vst [vmem:[%s248 + $0x48] sm:$0xff] %v267
                  %v269 = vld [vmem:[%s247 + $0xa0] sm:$0xff]
                  %270 = vst [vmem:[%s248 + $0x50] sm:$0xff] %v269
                  %v271 = vld [vmem:[%s247 + $0xb0] sm:$0xff]
                  %272 = vst [vmem:[%s248 + $0x58] sm:$0xff] %v271
                  %v273 = vld [vmem:[%s247 + $0xc0] sm:$0xff]
                  %274 = vst [vmem:[%s248 + $0x60] sm:$0xff] %v273
                  %v275 = vld [vmem:[%s247 + $0xd0] sm:$0xff]
                  %276 = vst [vmem:[%s248 + $0x68] sm:$0xff] %v275
                  %v277 = vld [vmem:[%s247 + $0xe0] sm:$0xff]
                  %278 = vst [vmem:[%s248 + $0x70] sm:$0xff] %v277
                  %v279 = vld [vmem:[%s247 + $0xf0] sm:$0xff]
                  %280 = vst [vmem:[%s248 + $0x78] sm:$0xff] %v279
                  %v281 = vld [vmem:[%s247 + $0x100] sm:$0xff]
                  %282 = vst [vmem:[%s248 + $0x80] sm:$0xff] %v281
                  %v283 = vld [vmem:[%s247 + $0x110] sm:$0xff]
                  %284 = vst [vmem:[%s248 + $0x88] sm:$0xff] %v283
                  %v285 = vld [vmem:[%s247 + $0x120] sm:$0xff]
                  %286 = vst [vmem:[%s248 + $0x90] sm:$0xff] %v285
                  %v287 = vld [vmem:[%s247 + $0x130] sm:$0xff]
                  %288 = vst [vmem:[%s248 + $0x98] sm:$0xff] %v287
                  %v289 = vld [vmem:[%s247 + $0x140] sm:$0xff]
                  %290 = vst [vmem:[%s248 + $0xa0] sm:$0xff] %v289
                  %v291 = vld [vmem:[%s247 + $0x150] sm:$0xff]
                  %292 = vst [vmem:[%s248 + $0xa8] sm:$0xff] %v291
                  %v293 = vld [vmem:[%s247 + $0x160] sm:$0xff]
                  %294 = vst [vmem:[%s248 + $0xb0] sm:$0xff] %v293
                  %v295 = vld [vmem:[%s247 + $0x170] sm:$0xff]
                  %296 = vst [vmem:[%s248 + $0xb8] sm:$0xff] %v295
                  %v297 = vld [vmem:[%s247 + $0x180] sm:$0xff]
                  %298 = vst [vmem:[%s248 + $0xc0] sm:$0xff] %v297
                  %v299 = vld [vmem:[%s247 + $0x190] sm:$0xff]
                  %300 = vst [vmem:[%s248 + $0xc8] sm:$0xff] %v299
                  %v301 = vld [vmem:[%s247 + $0x1a0] sm:$0xff]
                  %302 = vst [vmem:[%s248 + $0xd0] sm:$0xff] %v301
                  %v303 = vld [vmem:[%s247 + $0x1b0] sm:$0xff]
                  %304 = vst [vmem:[%s248 + $0xd8] sm:$0xff] %v303
                  %v305 = vld [vmem:[%s247 + $0x1c0] sm:$0xff]
                  %306 = vst [vmem:[%s248 + $0xe0] sm:$0xff] %v305
                  %v307 = vld [vmem:[%s247 + $0x1d0] sm:$0xff]
                  %308 = vst [vmem:[%s248 + $0xe8] sm:$0xff] %v307
                  %v309 = vld [vmem:[%s247 + $0x1e0] sm:$0xff]
                  %310 = vst [vmem:[%s248 + $0xf0] sm:$0xff] %v309
                  %v311 = vld [vmem:[%s247 + $0x1f0] sm:$0xff]
                  %312 = vst [vmem:[%s248 + $0xf8] sm:$0xff] %v311
                $region48: #{lame_sage.7} parent=42 // loop_footer
                  %s246 = sadd.s32 1, %s242
                $region49: #{lame_sage.7} parent=42 // loop_footer_branch
                  %241 = sbr.rel target = $region45
                $region50: #{lame_sage.7} parent=42 // loop_exit
                  _
              $region43: #{lame_sage.7} parent=27 // pred_fallthru
                _
              // Predicated region
              $region51: #{lame_sage.7} parent=27 // pred_check
                _
              $region52: #{lame_sage.7} parent=27 // pred_check_branch
                %314 = sbr.rel target = $region54
              $region53: #{lame_sage.7} parent=27 // pred_region
                _
              $region54: #{lame_sage.7} parent=27 // pred_fallthru
                _
            $region28: #{lame_sage.7} parent=23 // pred_fallthru
              _
            // Predicated region
            $region29: #{lame_sage.7} parent=23 // pred_check
              _
            $region30: #{lame_sage.7} parent=23 // pred_check_branch
              %164 = sbr.rel target = $region32
            $region31: #{lame_sage.7} parent=23 // pred_region
              %s166 = ssub.s32 256, 1
              loop: start=0, step=1, limit=1
              $region33: #{lame_sage.7} parent=31 // loop_pre_header
                _
              $region34: #{lame_sage.7} parent=31 // loop_header
                %s168 = sphi 0, %s172
                %p169 = scmp.ge.s32.totalorder %s168, 1
                %s173 = sphi %s158, %s158
                %s174 = sphi %s152, %s152
              $region35: #{lame_sage.7} parent=31 // loop_header_branch
                %171 = sbr.rel (%p169) target = $region39
              $region36: #{lame_sage.7} parent=31 // loop_body
                %v175 = vld [vmem:[%s173] sm:%s166]
                %176 = vst [vmem:[%s174] sm:%s166] %v175
                %v177 = vld [vmem:[%s173 + $0x10] sm:%s166]
                %178 = vst [vmem:[%s174 + $0x8] sm:%s166] %v177
                %v179 = vld [vmem:[%s173 + $0x20] sm:%s166]
                %180 = vst [vmem:[%s174 + $0x10] sm:%s166] %v179
                %v181 = vld [vmem:[%s173 + $0x30] sm:%s166]
                %182 = vst [vmem:[%s174 + $0x18] sm:%s166] %v181
                %v183 = vld [vmem:[%s173 + $0x40] sm:%s166]
                %184 = vst [vmem:[%s174 + $0x20] sm:%s166] %v183
                %v185 = vld [vmem:[%s173 + $0x50] sm:%s166]
                %186 = vst [vmem:[%s174 + $0x28] sm:%s166] %v185
                %v187 = vld [vmem:[%s173 + $0x60] sm:%s166]
                %188 = vst [vmem:[%s174 + $0x30] sm:%s166] %v187
                %v189 = vld [vmem:[%s173 + $0x70] sm:%s166]
                %190 = vst [vmem:[%s174 + $0x38] sm:%s166] %v189
                %v191 = vld [vmem:[%s173 + $0x80] sm:%s166]
                %192 = vst [vmem:[%s174 + $0x40] sm:%s166] %v191
                %v193 = vld [vmem:[%s173 + $0x90] sm:%s166]
                %194 = vst [vmem:[%s174 + $0x48] sm:%s166] %v193
                %v195 = vld [vmem:[%s173 + $0xa0] sm:%s166]
                %196 = vst [vmem:[%s174 + $0x50] sm:%s166] %v195
                %v197 = vld [vmem:[%s173 + $0xb0] sm:%s166]
                %198 = vst [vmem:[%s174 + $0x58] sm:%s166] %v197
                %v199 = vld [vmem:[%s173 + $0xc0] sm:%s166]
                %200 = vst [vmem:[%s174 + $0x60] sm:%s166] %v199
                %v201 = vld [vmem:[%s173 + $0xd0] sm:%s166]
                %202 = vst [vmem:[%s174 + $0x68] sm:%s166] %v201
                %v203 = vld [vmem:[%s173 + $0xe0] sm:%s166]
                %204 = vst [vmem:[%s174 + $0x70] sm:%s166] %v203
                %v205 = vld [vmem:[%s173 + $0xf0] sm:%s166]
                %206 = vst [vmem:[%s174 + $0x78] sm:%s166] %v205
                %v207 = vld [vmem:[%s173 + $0x100] sm:%s166]
                %208 = vst [vmem:[%s174 + $0x80] sm:%s166] %v207
                %v209 = vld [vmem:[%s173 + $0x110] sm:%s166]
                %210 = vst [vmem:[%s174 + $0x88] sm:%s166] %v209
                %v211 = vld [vmem:[%s173 + $0x120] sm:%s166]
                %212 = vst [vmem:[%s174 + $0x90] sm:%s166] %v211
                %v213 = vld [vmem:[%s173 + $0x130] sm:%s166]
                %214 = vst [vmem:[%s174 + $0x98] sm:%s166] %v213
                %v215 = vld [vmem:[%s173 + $0x140] sm:%s166]
                %216 = vst [vmem:[%s174 + $0xa0] sm:%s166] %v215
                %v217 = vld [vmem:[%s173 + $0x150] sm:%s166]
                %218 = vst [vmem:[%s174 + $0xa8] sm:%s166] %v217
                %v219 = vld [vmem:[%s173 + $0x160] sm:%s166]
                %220 = vst [vmem:[%s174 + $0xb0] sm:%s166] %v219
                %v221 = vld [vmem:[%s173 + $0x170] sm:%s166]
                %222 = vst [vmem:[%s174 + $0xb8] sm:%s166] %v221
                %v223 = vld [vmem:[%s173 + $0x180] sm:%s166]
                %224 = vst [vmem:[%s174 + $0xc0] sm:%s166] %v223
                %v225 = vld [vmem:[%s173 + $0x190] sm:%s166]
                %226 = vst [vmem:[%s174 + $0xc8] sm:%s166] %v225
                %v227 = vld [vmem:[%s173 + $0x1a0] sm:%s166]
                %228 = vst [vmem:[%s174 + $0xd0] sm:%s166] %v227
                %v229 = vld [vmem:[%s173 + $0x1b0] sm:%s166]
                %230 = vst [vmem:[%s174 + $0xd8] sm:%s166] %v229
                %v231 = vld [vmem:[%s173 + $0x1c0] sm:%s166]
                %232 = vst [vmem:[%s174 + $0xe0] sm:%s166] %v231
                %v233 = vld [vmem:[%s173 + $0x1d0] sm:%s166]
                %234 = vst [vmem:[%s174 + $0xe8] sm:%s166] %v233
                %v235 = vld [vmem:[%s173 + $0x1e0] sm:%s166]
                %236 = vst [vmem:[%s174 + $0xf0] sm:%s166] %v235
                %v237 = vld [vmem:[%s173 + $0x1f0] sm:%s166]
                %238 = vst [vmem:[%s174 + $0xf8] sm:%s166] %v237
              $region37: #{lame_sage.7} parent=31 // loop_footer
                %s172 = sadd.s32 1, %s168
              $region38: #{lame_sage.7} parent=31 // loop_footer_branch
                %167 = sbr.rel target = $region34
              $region39: #{lame_sage.7} parent=31 // loop_exit
                _
            $region32: #{lame_sage.7} parent=23 // pred_fallthru
              _
          $region24: #{lame_sage.7} parent=19 // pred_fallthru
            _
          %315 = vnop
        $region20: #{lame_sage.7} parent=15 // pred_fallthru
          _
        // Predicated region
        $region55: #{lame_sage.7} parent=15 // pred_check
          %p316 = pneg %p69
        $region56: #{lame_sage.7} parent=15 // pred_check_branch
          %318 = sbr.rel (%p316) target = $region58
        $region57: #{lame_sage.7} parent=15 // pred_region
          %s319 = smul.u32 32, %s17
          %p320 = scmp.lt.s32.totalorder %s319, 63
          %s321 = scalar_select %p320, %s319, 63
          %s322 = smul.addr %s321, 4
          %s323 = scalar_lea.vmem %s1, %s322
          %s324 = smul.u32 32, %s17
        $region58: #{lame_sage.7} parent=15 // pred_fallthru
          _
        // Predicated region
        $region59: #{lame_sage.7} parent=15 // pred_check
          %p325 = pneg %p95
        $region60: #{lame_sage.7} parent=15 // pred_check_branch
          %327 = sbr.rel (%p325) target = $region62
        $region61: #{lame_sage.7} parent=15 // pred_region
          %s328 = smul.u32 32, %s16
          %p329 = scmp.lt.s32.totalorder %s328, 63
          %s330 = scalar_select %p329, %s328, 63
          %s331 = smul.addr %s330, 8
          %s332 = scalar_lea.vmem %s2, %s331
          %s333 = smul.u32 32, %s16
        $region62: #{lame_sage.7} parent=15 // pred_fallthru
          _
      $region16: #{lame_sage.7} parent=5 // pred_fallthru
        _
      %p334 = scmp.le.s32.totalorder 1, %s9
      %p335 = scmp.lt.s32.totalorder %s9, 5
      %p336 = pnand %p334, %p335
      %p337 = pneg %p336
      // Predicated region
      $region63: #{lame_sage.7} parent=5 // pred_check
        _
      $region64: #{lame_sage.7} parent=5 // pred_check_branch
        %339 = sbr.rel (%p336) target = $region66
      $region65: #{lame_sage.7} parent=5 // pred_region
        %s340 = ssub.s32 %s9, 1
        %s341 = sand.u32 %s36, 1
        %s342 = sand.u32 %s36, 1
        %s343 = smul.addr %s342, 256
        %s344 = scalar_lea.vmem [#allocation3], %s343
        // Predicated region
        $region67: #{lame_sage.7} parent=65 // pred_check
          %p345 = pneg %p49
        $region68: #{lame_sage.7} parent=65 // pred_check_branch
          %347 = sbr.rel (%p345) target = $region70
        $region69: #{lame_sage.7} parent=65 // pred_region
          _
        $region70: #{lame_sage.7} parent=65 // pred_fallthru
          _
        %s348 = sand.u32 %s36, 1
        %s349 = sand.u32 %s36, 1
        %s350 = smul.addr %s349, 256
        %s351 = scalar_lea.vmem [#allocation3], %s350
        %p352 = pneg %p49
        %p353 = pneg %p46
        %s354 = smul.u32 32, %s19
        %p355 = scmp.lt.s32.totalorder %s354, 63
        %s356 = scalar_select %p355, %s354, 63
        %s357 = smul.addr %s356, 4
        %s358 = scalar_lea.vmem %s1, %s357
        %p359 = pneg %p75
        %p360 = pneg %p72
        %s361 = smul.u32 32, %s18
        %p362 = scmp.lt.s32.totalorder %s361, 63
        %s363 = scalar_select %p362, %s361, 63
        %s364 = smul.addr %s363, 8
        %s365 = scalar_lea.vmem %s2, %s364
        %p366 = pneg %p101
        %p367 = pneg %p98
        %p368 = pneg %p127
        %p369 = pneg %p124
        %s370 = smul.u32 32, %s18
        %p371 = scmp.lt.s32.totalorder %s370, 63
        %s372 = scalar_select %p371, %s370, 63
        %s373 = smul.addr %s372, 8
        %s374 = scalar_lea.vmem %s3, %s373
        %s375 = smul.u32 32, %s18
        %s376 = smul.u32 2, %s19
        %s377 = smul.u32 32, %s19
        %p378 = scmp.lt.s32.totalorder %s377, 63
        %s379 = scalar_select %p378, %s377, 63
        %s380 = smul.addr %s379, 4
        %s381 = scalar_lea.vmem %s1, %s380
        %s382 = smul.u32 32, %s19
        %s383 = smul.u32 32, %s18
        %p384 = scmp.lt.s32.totalorder %s383, 63
        %s385 = scalar_select %p384, %s383, 63
        %s386 = smul.addr %s385, 8
        %s387 = scalar_lea.vmem %s2, %s386
        %s388 = smul.u32 32, %s18
        %s389 = smul.u32 32, %s18
        %p390 = scmp.lt.s32.totalorder %s389, 63
        %s391 = scalar_select %p390, %s389, 63
        %s392 = smul.addr %s391, 8
        %s393 = scalar_lea.vmem %s3, %s392
        %s394 = smul.u32 32, %s18
        %p395 = scmp.eq.s32.totalorder %s19, 0
        // Predicated region
        $region71: #{lame_sage.7} parent=65 // pred_check
          %p396 = pneg %p395
        $region72: #{lame_sage.7} parent=65 // pred_check_branch
          %398 = sbr.rel (%p396) target = $region74
        $region73: #{lame_sage.7} parent=65 // pred_region
          %399 = vst [vmem:[#allocation2] sm:$0xff] 0.0
          %400 = vst [vmem:[#allocation2 + $0x8] sm:$0xff] 0.0
          %401 = vst [vmem:[#allocation2 + $0x10] sm:$0xff] 0.0
          %402 = vst [vmem:[#allocation2 + $0x18] sm:$0xff] 0.0
          %403 = vst [vmem:[#allocation2 + $0x20] sm:$0xff] 0.0
          %404 = vst [vmem:[#allocation2 + $0x28] sm:$0xff] 0.0
          %405 = vst [vmem:[#allocation2 + $0x30] sm:$0xff] 0.0
          %406 = vst [vmem:[#allocation2 + $0x38] sm:$0xff] 0.0
          %407 = vst [vmem:[#allocation2 + $0x40] sm:$0xff] 0.0
          %408 = vst [vmem:[#allocation2 + $0x48] sm:$0xff] 0.0
          %409 = vst [vmem:[#allocation2 + $0x50] sm:$0xff] 0.0
          %410 = vst [vmem:[#allocation2 + $0x58] sm:$0xff] 0.0
          %411 = vst [vmem:[#allocation2 + $0x60] sm:$0xff] 0.0
          %412 = vst [vmem:[#allocation2 + $0x68] sm:$0xff] 0.0
          %413 = vst [vmem:[#allocation2 + $0x70] sm:$0xff] 0.0
          %414 = vst [vmem:[#allocation2 + $0x78] sm:$0xff] 0.0
          %415 = vst [vmem:[#allocation2 + $0x80] sm:$0xff] 0.0
          %416 = vst [vmem:[#allocation2 + $0x88] sm:$0xff] 0.0
          %417 = vst [vmem:[#allocation2 + $0x90] sm:$0xff] 0.0
          %418 = vst [vmem:[#allocation2 + $0x98] sm:$0xff] 0.0
          %419 = vst [vmem:[#allocation2 + $0xa0] sm:$0xff] 0.0
          %420 = vst [vmem:[#allocation2 + $0xa8] sm:$0xff] 0.0
          %421 = vst [vmem:[#allocation2 + $0xb0] sm:$0xff] 0.0
          %422 = vst [vmem:[#allocation2 + $0xb8] sm:$0xff] 0.0
          %423 = vst [vmem:[#allocation2 + $0xc0] sm:$0xff] 0.0
          %424 = vst [vmem:[#allocation2 + $0xc8] sm:$0xff] 0.0
          %425 = vst [vmem:[#allocation2 + $0xd0] sm:$0xff] 0.0
          %426 = vst [vmem:[#allocation2 + $0xd8] sm:$0xff] 0.0
          %427 = vst [vmem:[#allocation2 + $0xe0] sm:$0xff] 0.0
          %428 = vst [vmem:[#allocation2 + $0xe8] sm:$0xff] 0.0
          %429 = vst [vmem:[#allocation2 + $0xf0] sm:$0xff] 0.0
          %430 = vst [vmem:[#allocation2 + $0xf8] sm:$0xff] 0.0
        $region74: #{lame_sage.7} parent=65 // pred_fallthru
          _
        %v431 = vld [vmem:[#allocation2] sm:$0xff]
        %v432 = vld [vmem:[#allocation2 + $0x8] sm:$0xff]
        %v433 = vld [vmem:[#allocation2 + $0x10] sm:$0xff]
        %v434 = vld [vmem:[#allocation2 + $0x18] sm:$0xff]
        %v435 = vld [vmem:[#allocation2 + $0x20] sm:$0xff]
        %v436 = vld [vmem:[#allocation2 + $0x28] sm:$0xff]
        %v437 = vld [vmem:[#allocation2 + $0x30] sm:$0xff]
        %v438 = vld [vmem:[#allocation2 + $0x38] sm:$0xff]
        %v439 = vld [vmem:[#allocation2 + $0x40] sm:$0xff]
        %v440 = vld [vmem:[#allocation2 + $0x48] sm:$0xff]
        %v441 = vld [vmem:[#allocation2 + $0x50] sm:$0xff]
        %v442 = vld [vmem:[#allocation2 + $0x58] sm:$0xff]
        %v443 = vld [vmem:[#allocation2 + $0x60] sm:$0xff]
        %v444 = vld [vmem:[#allocation2 + $0x68] sm:$0xff]
        %v445 = vld [vmem:[#allocation2 + $0x70] sm:$0xff]
        %v446 = vld [vmem:[#allocation2 + $0x78] sm:$0xff]
        %v447 = vld [vmem:[#allocation2 + $0x80] sm:$0xff]
        %v448 = vld [vmem:[#allocation2 + $0x88] sm:$0xff]
        %v449 = vld [vmem:[#allocation2 + $0x90] sm:$0xff]
        %v450 = vld [vmem:[#allocation2 + $0x98] sm:$0xff]
        %v451 = vld [vmem:[#allocation2 + $0xa0] sm:$0xff]
        %v452 = vld [vmem:[#allocation2 + $0xa8] sm:$0xff]
        %v453 = vld [vmem:[#allocation2 + $0xb0] sm:$0xff]
        %v454 = vld [vmem:[#allocation2 + $0xb8] sm:$0xff]
        %v455 = vld [vmem:[#allocation2 + $0xc0] sm:$0xff]
        %v456 = vld [vmem:[#allocation2 + $0xc8] sm:$0xff]
        %v457 = vld [vmem:[#allocation2 + $0xd0] sm:$0xff]
        %v458 = vld [vmem:[#allocation2 + $0xd8] sm:$0xff]
        %v459 = vld [vmem:[#allocation2 + $0xe0] sm:$0xff]
        %v460 = vld [vmem:[#allocation2 + $0xe8] sm:$0xff]
        %v461 = vld [vmem:[#allocation2 + $0xf0] sm:$0xff]
        %v462 = vld [vmem:[#allocation2 + $0xf8] sm:$0xff]
        %v463 = vld [vmem:[%s344] sm:$0xff]
        %v464 = vld [vmem:[%s344 + $0x8] sm:$0xff]
        %v465 = vld [vmem:[%s344 + $0x10] sm:$0xff]
        %v466 = vld [vmem:[%s344 + $0x18] sm:$0xff]
        %v467 = vld [vmem:[%s344 + $0x20] sm:$0xff]
        %v468 = vld [vmem:[%s344 + $0x28] sm:$0xff]
        %v469 = vld [vmem:[%s344 + $0x30] sm:$0xff]
        %v470 = vld [vmem:[%s344 + $0x38] sm:$0xff]
        %v471 = vld [vmem:[%s344 + $0x40] sm:$0xff]
        %v472 = vld [vmem:[%s344 + $0x48] sm:$0xff]
        %v473 = vld [vmem:[%s344 + $0x50] sm:$0xff]
        %v474 = vld [vmem:[%s344 + $0x58] sm:$0xff]
        %v475 = vld [vmem:[%s344 + $0x60] sm:$0xff]
        %v476 = vld [vmem:[%s344 + $0x68] sm:$0xff]
        %v477 = vld [vmem:[%s344 + $0x70] sm:$0xff]
        %v478 = vld [vmem:[%s344 + $0x78] sm:$0xff]
        %v479 = vld [vmem:[%s344 + $0x80] sm:$0xff]
        %v480 = vld [vmem:[%s344 + $0x88] sm:$0xff]
        %v481 = vld [vmem:[%s344 + $0x90] sm:$0xff]
        %v482 = vld [vmem:[%s344 + $0x98] sm:$0xff]
        %v483 = vld [vmem:[%s344 + $0xa0] sm:$0xff]
        %v484 = vld [vmem:[%s344 + $0xa8] sm:$0xff]
        %v485 = vld [vmem:[%s344 + $0xb0] sm:$0xff]
        %v486 = vld [vmem:[%s344 + $0xb8] sm:$0xff]
        %v487 = vld [vmem:[%s344 + $0xc0] sm:$0xff]
        %v488 = vld [vmem:[%s344 + $0xc8] sm:$0xff]
        %v489 = vld [vmem:[%s344 + $0xd0] sm:$0xff]
        %v490 = vld [vmem:[%s344 + $0xd8] sm:$0xff]
        %v491 = vld [vmem:[%s344 + $0xe0] sm:$0xff]
        %v492 = vld [vmem:[%s344 + $0xe8] sm:$0xff]
        %v493 = vld [vmem:[%s344 + $0xf0] sm:$0xff]
        %v494 = vld [vmem:[%s344 + $0xf8] sm:$0xff]
        %v495 = vld [vmem:[%s381] sm:$0xf]
        %v496 = vld [vmem:[%s381 + $0x4] sm:$0xf]
        %v497 = vld [vmem:[%s381 + $0x8] sm:$0xf]
        %v498 = vld [vmem:[%s381 + $0xc] sm:$0xf]
        %v499 = vld [vmem:[%s381 + $0x10] sm:$0xf]
        %v500 = vld [vmem:[%s381 + $0x14] sm:$0xf]
        %v501 = vld [vmem:[%s381 + $0x18] sm:$0xf]
        %v502 = vld [vmem:[%s381 + $0x1c] sm:$0xf]
        %v503 = vld [vmem:[%s381 + $0x20] sm:$0xf]
        %v504 = vld [vmem:[%s381 + $0x24] sm:$0xf]
        %v505 = vld [vmem:[%s381 + $0x28] sm:$0xf]
        %v506 = vld [vmem:[%s381 + $0x2c] sm:$0xf]
        %v507 = vld [vmem:[%s381 + $0x30] sm:$0xf]
        %v508 = vld [vmem:[%s381 + $0x34] sm:$0xf]
        %v509 = vld [vmem:[%s381 + $0x38] sm:$0xf]
        %v510 = vld [vmem:[%s381 + $0x3c] sm:$0xf]
        %v511 = vld [vmem:[%s381 + $0x40] sm:$0xf]
        %v512 = vld [vmem:[%s381 + $0x44] sm:$0xf]
        %v513 = vld [vmem:[%s381 + $0x48] sm:$0xf]
        %v514 = vld [vmem:[%s381 + $0x4c] sm:$0xf]
        %v515 = vld [vmem:[%s381 + $0x50] sm:$0xf]
        %v516 = vld [vmem:[%s381 + $0x54] sm:$0xf]
        %v517 = vld [vmem:[%s381 + $0x58] sm:$0xf]
        %v518 = vld [vmem:[%s381 + $0x5c] sm:$0xf]
        %v519 = vld [vmem:[%s381 + $0x60] sm:$0xf]
        %v520 = vld [vmem:[%s381 + $0x64] sm:$0xf]
        %v521 = vld [vmem:[%s381 + $0x68] sm:$0xf]
        %v522 = vld [vmem:[%s381 + $0x6c] sm:$0xf]
        %v523 = vld [vmem:[%s381 + $0x70] sm:$0xf]
        %v524 = vld [vmem:[%s381 + $0x74] sm:$0xf]
        %v525 = vld [vmem:[%s381 + $0x78] sm:$0xf]
        %v526 = vld [vmem:[%s381 + $0x7c] sm:$0xf]
        %v559 = vunpack.c.l.b16 %v463
        %v560 = vunpack.c.h.b16 %v463
        %v561 = vunpack.c.l.b16 %v464
        %v562 = vunpack.c.h.b16 %v464
        %v563 = vunpack.c.l.b16 %v465
        %v564 = vunpack.c.h.b16 %v465
        %v565 = vunpack.c.l.b16 %v466
        %v566 = vunpack.c.h.b16 %v466
        %v567 = vunpack.c.l.b16 %v467
        %v568 = vunpack.c.h.b16 %v467
        %v569 = vunpack.c.l.b16 %v468
        %v570 = vunpack.c.h.b16 %v468
        %v571 = vunpack.c.l.b16 %v469
        %v572 = vunpack.c.h.b16 %v469
        %v573 = vunpack.c.l.b16 %v470
        %v574 = vunpack.c.h.b16 %v470
        %v575 = vunpack.c.l.b16 %v471
        %v576 = vunpack.c.h.b16 %v471
        %v577 = vunpack.c.l.b16 %v472
        %v578 = vunpack.c.h.b16 %v472
        %v579 = vunpack.c.l.b16 %v473
        %v580 = vunpack.c.h.b16 %v473
        %v581 = vunpack.c.l.b16 %v474
        %v582 = vunpack.c.h.b16 %v474
        %v583 = vunpack.c.l.b16 %v475
        %v584 = vunpack.c.h.b16 %v475
        %v585 = vunpack.c.l.b16 %v476
        %v586 = vunpack.c.h.b16 %v476
        %v587 = vunpack.c.l.b16 %v477
        %v588 = vunpack.c.h.b16 %v477
        %v589 = vunpack.c.l.b16 %v478
        %v590 = vunpack.c.h.b16 %v478
        %v591 = vunpack.c.l.b16 %v479
        %v592 = vunpack.c.h.b16 %v479
        %v593 = vunpack.c.l.b16 %v480
        %v594 = vunpack.c.h.b16 %v480
        %v595 = vunpack.c.l.b16 %v481
        %v596 = vunpack.c.h.b16 %v481
        %v597 = vunpack.c.l.b16 %v482
        %v598 = vunpack.c.h.b16 %v482
        %v599 = vunpack.c.l.b16 %v483
        %v600 = vunpack.c.h.b16 %v483
        %v601 = vunpack.c.l.b16 %v484
        %v602 = vunpack.c.h.b16 %v484
        %v603 = vunpack.c.l.b16 %v485
        %v604 = vunpack.c.h.b16 %v485
        %v605 = vunpack.c.l.b16 %v486
        %v606 = vunpack.c.h.b16 %v486
        %v607 = vunpack.c.l.b16 %v487
        %v608 = vunpack.c.h.b16 %v487
        %v609 = vunpack.c.l.b16 %v488
        %v610 = vunpack.c.h.b16 %v488
        %v611 = vunpack.c.l.b16 %v489
        %v612 = vunpack.c.h.b16 %v489
        %v613 = vunpack.c.l.b16 %v490
        %v614 = vunpack.c.h.b16 %v490
        %v615 = vunpack.c.l.b16 %v491
        %v616 = vunpack.c.h.b16 %v491
        %v617 = vunpack.c.l.b16 %v492
        %v618 = vunpack.c.h.b16 %v492
        %v619 = vunpack.c.l.b16 %v493
        %v620 = vunpack.c.h.b16 %v493
        %v621 = vunpack.c.l.b16 %v494
        %v622 = vunpack.c.h.b16 %v494
        %v623 = vpack.c.b16 %v561, %v559
        %v624 = vpack.c.b16 %v562, %v560
        %v625 = vpack.c.b16 %v565, %v563
        %v626 = vpack.c.b16 %v566, %v564
        %v627 = vpack.c.b16 %v569, %v567
        %v628 = vpack.c.b16 %v570, %v568
        %v629 = vpack.c.b16 %v573, %v571
        %v630 = vpack.c.b16 %v574, %v572
        %v631 = vpack.c.b16 %v577, %v575
        %v632 = vpack.c.b16 %v578, %v576
        %v633 = vpack.c.b16 %v581, %v579
        %v634 = vpack.c.b16 %v582, %v580
        %v635 = vpack.c.b16 %v585, %v583
        %v636 = vpack.c.b16 %v586, %v584
        %v637 = vpack.c.b16 %v589, %v587
        %v638 = vpack.c.b16 %v590, %v588
        %v639 = vpack.c.b16 %v593, %v591
        %v640 = vpack.c.b16 %v594, %v592
        %v641 = vpack.c.b16 %v597, %v595
        %v642 = vpack.c.b16 %v598, %v596
        %v643 = vpack.c.b16 %v601, %v599
        %v644 = vpack.c.b16 %v602, %v600
        %v645 = vpack.c.b16 %v605, %v603
        %v646 = vpack.c.b16 %v606, %v604
        %v647 = vpack.c.b16 %v609, %v607
        %v648 = vpack.c.b16 %v610, %v608
        %v649 = vpack.c.b16 %v613, %v611
        %v650 = vpack.c.b16 %v614, %v612
        %v651 = vpack.c.b16 %v617, %v615
        %v652 = vpack.c.b16 %v618, %v616
        %v653 = vpack.c.b16 %v621, %v619
        %v654 = vpack.c.b16 %v622, %v620
        %v719 = vunpack.c.l.b16 %v495
        %v720 = vunpack.c.l.b16 %v496
        %v721 = vunpack.c.l.b16 %v497
        %v722 = vunpack.c.l.b16 %v498
        %v723 = vunpack.c.l.b16 %v499
        %v724 = vunpack.c.l.b16 %v500
        %v725 = vunpack.c.l.b16 %v501
        %v726 = vunpack.c.l.b16 %v502
        %v727 = vunpack.c.l.b16 %v503
        %v728 = vunpack.c.l.b16 %v504
        %v729 = vunpack.c.l.b16 %v505
        %v730 = vunpack.c.l.b16 %v506
        %v731 = vunpack.c.l.b16 %v507
        %v732 = vunpack.c.l.b16 %v508
        %v733 = vunpack.c.l.b16 %v509
        %v734 = vunpack.c.l.b16 %v510
        %v735 = vunpack.c.l.b16 %v511
        %v736 = vunpack.c.l.b16 %v512
        %v737 = vunpack.c.l.b16 %v513
        %v738 = vunpack.c.l.b16 %v514
        %v739 = vunpack.c.l.b16 %v515
        %v740 = vunpack.c.l.b16 %v516
        %v741 = vunpack.c.l.b16 %v517
        %v742 = vunpack.c.l.b16 %v518
        %v743 = vunpack.c.l.b16 %v519
        %v744 = vunpack.c.l.b16 %v520
        %v745 = vunpack.c.l.b16 %v521
        %v746 = vunpack.c.l.b16 %v522
        %v747 = vunpack.c.l.b16 %v523
        %v748 = vunpack.c.l.b16 %v524
        %v749 = vunpack.c.l.b16 %v525
        %v750 = vunpack.c.l.b16 %v526
        %v751 = vpack.c.b16 %v720, %v719
        %v752 = vpack.c.b16 %v722, %v721
        %v753 = vpack.c.b16 %v724, %v723
        %v754 = vpack.c.b16 %v726, %v725
        %v755 = vpack.c.b16 %v728, %v727
        %v756 = vpack.c.b16 %v730, %v729
        %v757 = vpack.c.b16 %v732, %v731
        %v758 = vpack.c.b16 %v734, %v733
        %v759 = vpack.c.b16 %v736, %v735
        %v760 = vpack.c.b16 %v738, %v737
        %v761 = vpack.c.b16 %v740, %v739
        %v762 = vpack.c.b16 %v742, %v741
        %v763 = vpack.c.b16 %v744, %v743
        %v764 = vpack.c.b16 %v746, %v745
        %v765 = vpack.c.b16 %v748, %v747
        %v766 = vpack.c.b16 %v750, %v749
        %783 = vmatpush.bf16.msra.mxu0 %v758
        %784 = vmatpush.bf16.msra.mxu0 %v757
        %785 = vmatpush.bf16.msra.mxu0 %v756
        %786 = vmatpush.bf16.msra.mxu0 %v755
        %787 = vmatpush.bf16.msra.mxu0 %v754
        %788 = vmatpush.bf16.msra.mxu0 %v753
        %789 = vmatpush.bf16.msra.mxu0 %v752
        %790 = vmatpush.bf16.msra.mxu0 %v751
        %791 = vmatmul.bf16.gmra.mxu0 %v623
        %v792 = vpop.f32.mrf.mxu0
        %v793 = vadd.f32 0.0, %v792
        %v794 = vpop.f32.mrf.mxu0
        %v795 = vadd.f32 0.0, %v794
        %796 = vmatmul.bf16.gmra.mxu0 %v625
        %v797 = vpop.f32.mrf.mxu0
        %v798 = vadd.f32 0.0, %v797
        %v799 = vpop.f32.mrf.mxu0
        %v800 = vadd.f32 0.0, %v799
        %801 = vmatmul.bf16.gmra.mxu0 %v627
        %v802 = vpop.f32.mrf.mxu0
        %v803 = vadd.f32 0.0, %v802
        %v804 = vpop.f32.mrf.mxu0
        %v805 = vadd.f32 0.0, %v804
        %806 = vmatmul.bf16.gmra.mxu0 %v629
        %v807 = vpop.f32.mrf.mxu0
        %v808 = vadd.f32 0.0, %v807
        %v809 = vpop.f32.mrf.mxu0
        %v810 = vadd.f32 0.0, %v809
        %811 = vmatmul.bf16.gmra.mxu0 %v631
        %v812 = vpop.f32.mrf.mxu0
        %v813 = vadd.f32 0.0, %v812
        %v814 = vpop.f32.mrf.mxu0
        %v815 = vadd.f32 0.0, %v814
        %816 = vmatmul.bf16.gmra.mxu0 %v633
        %v817 = vpop.f32.mrf.mxu0
        %v818 = vadd.f32 0.0, %v817
        %v819 = vpop.f32.mrf.mxu0
        %v820 = vadd.f32 0.0, %v819
        %821 = vmatmul.bf16.gmra.mxu0 %v635
        %v822 = vpop.f32.mrf.mxu0
        %v823 = vadd.f32 0.0, %v822
        %v824 = vpop.f32.mrf.mxu0
        %v825 = vadd.f32 0.0, %v824
        %826 = vmatmul.bf16.gmra.mxu0 %v637
        %v827 = vpop.f32.mrf.mxu0
        %v828 = vadd.f32 0.0, %v827
        %v829 = vpop.f32.mrf.mxu0
        %v830 = vadd.f32 0.0, %v829
        %831 = vmatmul.bf16.gmra.mxu0 %v639
        %v832 = vpop.f32.mrf.mxu0
        %v833 = vadd.f32 0.0, %v832
        %v834 = vpop.f32.mrf.mxu0
        %v835 = vadd.f32 0.0, %v834
        %836 = vmatmul.bf16.gmra.mxu0 %v641
        %v837 = vpop.f32.mrf.mxu0
        %v838 = vadd.f32 0.0, %v837
        %v839 = vpop.f32.mrf.mxu0
        %v840 = vadd.f32 0.0, %v839
        %841 = vmatmul.bf16.gmra.mxu0 %v643
        %v842 = vpop.f32.mrf.mxu0
        %v843 = vadd.f32 0.0, %v842
        %v844 = vpop.f32.mrf.mxu0
        %v845 = vadd.f32 0.0, %v844
        %846 = vmatmul.bf16.gmra.mxu0 %v645
        %v847 = vpop.f32.mrf.mxu0
        %v848 = vadd.f32 0.0, %v847
        %v849 = vpop.f32.mrf.mxu0
        %v850 = vadd.f32 0.0, %v849
        %851 = vmatmul.bf16.gmra.mxu0 %v647
        %v852 = vpop.f32.mrf.mxu0
        %v853 = vadd.f32 0.0, %v852
        %v854 = vpop.f32.mrf.mxu0
        %v855 = vadd.f32 0.0, %v854
        %856 = vmatmul.bf16.gmra.mxu0 %v649
        %v857 = vpop.f32.mrf.mxu0
        %v858 = vadd.f32 0.0, %v857
        %v859 = vpop.f32.mrf.mxu0
        %v860 = vadd.f32 0.0, %v859
        %861 = vmatmul.bf16.gmra.mxu0 %v651
        %v862 = vpop.f32.mrf.mxu0
        %v863 = vadd.f32 0.0, %v862
        %v864 = vpop.f32.mrf.mxu0
        %v865 = vadd.f32 0.0, %v864
        %866 = vmatmul.bf16.gmra.mxu0 %v653
        %v867 = vpop.f32.mrf.mxu0
        %v868 = vadd.f32 0.0, %v867
        %v869 = vpop.f32.mrf.mxu0
        %v870 = vadd.f32 0.0, %v869
        %871 = vdwg.mxu0
        %872 = vmatpush.bf16.msra.mxu0 %v766
        %873 = vmatpush.bf16.msra.mxu0 %v765
        %874 = vmatpush.bf16.msra.mxu0 %v764
        %875 = vmatpush.bf16.msra.mxu0 %v763
        %876 = vmatpush.bf16.msra.mxu0 %v762
        %877 = vmatpush.bf16.msra.mxu0 %v761
        %878 = vmatpush.bf16.msra.mxu0 %v760
        %879 = vmatpush.bf16.msra.mxu0 %v759
        %880 = vmatmul.bf16.gmra.mxu0 %v624
        %v881 = vpop.f32.mrf.mxu0
        %v882 = vadd.f32 %v793, %v881
        %v883 = vpop.f32.mrf.mxu0
        %v884 = vadd.f32 %v795, %v883
        %885 = vmatmul.bf16.gmra.mxu0 %v626
        %v886 = vpop.f32.mrf.mxu0
        %v887 = vadd.f32 %v798, %v886
        %v888 = vpop.f32.mrf.mxu0
        %v889 = vadd.f32 %v800, %v888
        %890 = vmatmul.bf16.gmra.mxu0 %v628
        %v891 = vpop.f32.mrf.mxu0
        %v892 = vadd.f32 %v803, %v891
        %v893 = vpop.f32.mrf.mxu0
        %v894 = vadd.f32 %v805, %v893
        %895 = vmatmul.bf16.gmra.mxu0 %v630
        %v896 = vpop.f32.mrf.mxu0
        %v897 = vadd.f32 %v808, %v896
        %v898 = vpop.f32.mrf.mxu0
        %v899 = vadd.f32 %v810, %v898
        %900 = vmatmul.bf16.gmra.mxu0 %v632
        %v901 = vpop.f32.mrf.mxu0
        %v902 = vadd.f32 %v813, %v901
        %v903 = vpop.f32.mrf.mxu0
        %v904 = vadd.f32 %v815, %v903
        %905 = vmatmul.bf16.gmra.mxu0 %v634
        %v906 = vpop.f32.mrf.mxu0
        %v907 = vadd.f32 %v818, %v906
        %v908 = vpop.f32.mrf.mxu0
        %v909 = vadd.f32 %v820, %v908
        %910 = vmatmul.bf16.gmra.mxu0 %v636
        %v911 = vpop.f32.mrf.mxu0
        %v912 = vadd.f32 %v823, %v911
        %v913 = vpop.f32.mrf.mxu0
        %v914 = vadd.f32 %v825, %v913
        %915 = vmatmul.bf16.gmra.mxu0 %v638
        %v916 = vpop.f32.mrf.mxu0
        %v917 = vadd.f32 %v828, %v916
        %v918 = vpop.f32.mrf.mxu0
        %v919 = vadd.f32 %v830, %v918
        %920 = vmatmul.bf16.gmra.mxu0 %v640
        %v921 = vpop.f32.mrf.mxu0
        %v922 = vadd.f32 %v833, %v921
        %v923 = vpop.f32.mrf.mxu0
        %v924 = vadd.f32 %v835, %v923
        %925 = vmatmul.bf16.gmra.mxu0 %v642
        %v926 = vpop.f32.mrf.mxu0
        %v927 = vadd.f32 %v838, %v926
        %v928 = vpop.f32.mrf.mxu0
        %v929 = vadd.f32 %v840, %v928
        %930 = vmatmul.bf16.gmra.mxu0 %v644
        %v931 = vpop.f32.mrf.mxu0
        %v932 = vadd.f32 %v843, %v931
        %v933 = vpop.f32.mrf.mxu0
        %v934 = vadd.f32 %v845, %v933
        %935 = vmatmul.bf16.gmra.mxu0 %v646
        %v936 = vpop.f32.mrf.mxu0
        %v937 = vadd.f32 %v848, %v936
        %v938 = vpop.f32.mrf.mxu0
        %v939 = vadd.f32 %v850, %v938
        %940 = vmatmul.bf16.gmra.mxu0 %v648
        %v941 = vpop.f32.mrf.mxu0
        %v942 = vadd.f32 %v853, %v941
        %v943 = vpop.f32.mrf.mxu0
        %v944 = vadd.f32 %v855, %v943
        %945 = vmatmul.bf16.gmra.mxu0 %v650
        %v946 = vpop.f32.mrf.mxu0
        %v947 = vadd.f32 %v858, %v946
        %v948 = vpop.f32.mrf.mxu0
        %v949 = vadd.f32 %v860, %v948
        %950 = vmatmul.bf16.gmra.mxu0 %v652
        %v951 = vpop.f32.mrf.mxu0
        %v952 = vadd.f32 %v863, %v951
        %v953 = vpop.f32.mrf.mxu0
        %v954 = vadd.f32 %v865, %v953
        %955 = vmatmul.bf16.gmra.mxu0 %v654
        %v956 = vpop.f32.mrf.mxu0
        %v957 = vadd.f32 %v868, %v956
        %v958 = vpop.f32.mrf.mxu0
        %v959 = vadd.f32 %v870, %v958
        %960 = vdwg.mxu0
        %v961 = vadd.f32 %v431, %v882
        %v962 = vadd.f32 %v432, %v884
        %v963 = vadd.f32 %v433, %v887
        %v964 = vadd.f32 %v434, %v889
        %v965 = vadd.f32 %v435, %v892
        %v966 = vadd.f32 %v436, %v894
        %v967 = vadd.f32 %v437, %v897
        %v968 = vadd.f32 %v438, %v899
        %v969 = vadd.f32 %v439, %v902
        %v970 = vadd.f32 %v440, %v904
        %v971 = vadd.f32 %v441, %v907
        %v972 = vadd.f32 %v442, %v909
        %v973 = vadd.f32 %v443, %v912
        %v974 = vadd.f32 %v444, %v914
        %v975 = vadd.f32 %v445, %v917
        %v976 = vadd.f32 %v446, %v919
        %v977 = vadd.f32 %v447, %v922
        %v978 = vadd.f32 %v448, %v924
        %v979 = vadd.f32 %v449, %v927
        %v980 = vadd.f32 %v450, %v929
        %v981 = vadd.f32 %v451, %v932
        %v982 = vadd.f32 %v452, %v934
        %v983 = vadd.f32 %v453, %v937
        %v984 = vadd.f32 %v454, %v939
        %v985 = vadd.f32 %v455, %v942
        %v986 = vadd.f32 %v456, %v944
        %v987 = vadd.f32 %v457, %v947
        %v988 = vadd.f32 %v458, %v949
        %v989 = vadd.f32 %v459, %v952
        %v990 = vadd.f32 %v460, %v954
        %v991 = vadd.f32 %v461, %v957
        %v992 = vadd.f32 %v462, %v959
        %993 = vst [vmem:[#allocation2] sm:$0xff] %v961
        %994 = vst [vmem:[#allocation2 + $0x8] sm:$0xff] %v962
        %995 = vst [vmem:[#allocation2 + $0x10] sm:$0xff] %v963
        %996 = vst [vmem:[#allocation2 + $0x18] sm:$0xff] %v964
        %997 = vst [vmem:[#allocation2 + $0x20] sm:$0xff] %v965
        %998 = vst [vmem:[#allocation2 + $0x28] sm:$0xff] %v966
        %999 = vst [vmem:[#allocation2 + $0x30] sm:$0xff] %v967
        %1000 = vst [vmem:[#allocation2 + $0x38] sm:$0xff] %v968
        %1001 = vst [vmem:[#allocation2 + $0x40] sm:$0xff] %v969
        %1002 = vst [vmem:[#allocation2 + $0x48] sm:$0xff] %v970
        %1003 = vst [vmem:[#allocation2 + $0x50] sm:$0xff] %v971
        %1004 = vst [vmem:[#allocation2 + $0x58] sm:$0xff] %v972
        %1005 = vst [vmem:[#allocation2 + $0x60] sm:$0xff] %v973
        %1006 = vst [vmem:[#allocation2 + $0x68] sm:$0xff] %v974
        %1007 = vst [vmem:[#allocation2 + $0x70] sm:$0xff] %v975
        %1008 = vst [vmem:[#allocation2 + $0x78] sm:$0xff] %v976
        %1009 = vst [vmem:[#allocation2 + $0x80] sm:$0xff] %v977
        %1010 = vst [vmem:[#allocation2 + $0x88] sm:$0xff] %v978
        %1011 = vst [vmem:[#allocation2 + $0x90] sm:$0xff] %v979
        %1012 = vst [vmem:[#allocation2 + $0x98] sm:$0xff] %v980
        %1013 = vst [vmem:[#allocation2 + $0xa0] sm:$0xff] %v981
        %1014 = vst [vmem:[#allocation2 + $0xa8] sm:$0xff] %v982
        %1015 = vst [vmem:[#allocation2 + $0xb0] sm:$0xff] %v983
        %1016 = vst [vmem:[#allocation2 + $0xb8] sm:$0xff] %v984
        %1017 = vst [vmem:[#allocation2 + $0xc0] sm:$0xff] %v985
        %1018 = vst [vmem:[#allocation2 + $0xc8] sm:$0xff] %v986
        %1019 = vst [vmem:[#allocation2 + $0xd0] sm:$0xff] %v987
        %1020 = vst [vmem:[#allocation2 + $0xd8] sm:$0xff] %v988
        %1021 = vst [vmem:[#allocation2 + $0xe0] sm:$0xff] %v989
        %1022 = vst [vmem:[#allocation2 + $0xe8] sm:$0xff] %v990
        %1023 = vst [vmem:[#allocation2 + $0xf0] sm:$0xff] %v991
        %1024 = vst [vmem:[#allocation2 + $0xf8] sm:$0xff] %v992
        %p1025 = scmp.eq.s32.totalorder %s19, 1
        // Predicated region
        $region75: #{lame_sage.7} parent=65 // pred_check
          %p1026 = pneg %p1025
        $region76: #{lame_sage.7} parent=65 // pred_check_branch
          %1028 = sbr.rel (%p1026) target = $region78
        $region77: #{lame_sage.7} parent=65 // pred_region
          %v1029 = vld [vmem:[#allocation2] sm:$0xff]
          %v1030 = vld [vmem:[#allocation2 + $0x8] sm:$0xff]
          %v1031 = vld [vmem:[#allocation2 + $0x10] sm:$0xff]
          %v1032 = vld [vmem:[#allocation2 + $0x18] sm:$0xff]
          %v1033 = vld [vmem:[#allocation2 + $0x20] sm:$0xff]
          %v1034 = vld [vmem:[#allocation2 + $0x28] sm:$0xff]
          %v1035 = vld [vmem:[#allocation2 + $0x30] sm:$0xff]
          %v1036 = vld [vmem:[#allocation2 + $0x38] sm:$0xff]
          %v1037 = vld [vmem:[#allocation2 + $0x40] sm:$0xff]
          %v1038 = vld [vmem:[#allocation2 + $0x48] sm:$0xff]
          %v1039 = vld [vmem:[#allocation2 + $0x50] sm:$0xff]
          %v1040 = vld [vmem:[#allocation2 + $0x58] sm:$0xff]
          %v1041 = vld [vmem:[#allocation2 + $0x60] sm:$0xff]
          %v1042 = vld [vmem:[#allocation2 + $0x68] sm:$0xff]
          %v1043 = vld [vmem:[#allocation2 + $0x70] sm:$0xff]
          %v1044 = vld [vmem:[#allocation2 + $0x78] sm:$0xff]
          %v1045 = vld [vmem:[#allocation2 + $0x80] sm:$0xff]
          %v1046 = vld [vmem:[#allocation2 + $0x88] sm:$0xff]
          %v1047 = vld [vmem:[#allocation2 + $0x90] sm:$0xff]
          %v1048 = vld [vmem:[#allocation2 + $0x98] sm:$0xff]
          %v1049 = vld [vmem:[#allocation2 + $0xa0] sm:$0xff]
          %v1050 = vld [vmem:[#allocation2 + $0xa8] sm:$0xff]
          %v1051 = vld [vmem:[#allocation2 + $0xb0] sm:$0xff]
          %v1052 = vld [vmem:[#allocation2 + $0xb8] sm:$0xff]
          %v1053 = vld [vmem:[#allocation2 + $0xc0] sm:$0xff]
          %v1054 = vld [vmem:[#allocation2 + $0xc8] sm:$0xff]
          %v1055 = vld [vmem:[#allocation2 + $0xd0] sm:$0xff]
          %v1056 = vld [vmem:[#allocation2 + $0xd8] sm:$0xff]
          %v1057 = vld [vmem:[#allocation2 + $0xe0] sm:$0xff]
          %v1058 = vld [vmem:[#allocation2 + $0xe8] sm:$0xff]
          %v1059 = vld [vmem:[#allocation2 + $0xf0] sm:$0xff]
          %v1060 = vld [vmem:[#allocation2 + $0xf8] sm:$0xff]
          %v1061 = vld [vmem:[%s387] sm:$0xff]
          %v1062 = vld [vmem:[%s387 + $0x8] sm:$0xff]
          %v1063 = vld [vmem:[%s387 + $0x10] sm:$0xff]
          %v1064 = vld [vmem:[%s387 + $0x18] sm:$0xff]
          %v1065 = vld [vmem:[%s387 + $0x20] sm:$0xff]
          %v1066 = vld [vmem:[%s387 + $0x28] sm:$0xff]
          %v1067 = vld [vmem:[%s387 + $0x30] sm:$0xff]
          %v1068 = vld [vmem:[%s387 + $0x38] sm:$0xff]
          %v1069 = vld [vmem:[%s387 + $0x40] sm:$0xff]
          %v1070 = vld [vmem:[%s387 + $0x48] sm:$0xff]
          %v1071 = vld [vmem:[%s387 + $0x50] sm:$0xff]
          %v1072 = vld [vmem:[%s387 + $0x58] sm:$0xff]
          %v1073 = vld [vmem:[%s387 + $0x60] sm:$0xff]
          %v1074 = vld [vmem:[%s387 + $0x68] sm:$0xff]
          %v1075 = vld [vmem:[%s387 + $0x70] sm:$0xff]
          %v1076 = vld [vmem:[%s387 + $0x78] sm:$0xff]
          %v1077 = vld [vmem:[%s387 + $0x80] sm:$0xff]
          %v1078 = vld [vmem:[%s387 + $0x88] sm:$0xff]
          %v1079 = vld [vmem:[%s387 + $0x90] sm:$0xff]
          %v1080 = vld [vmem:[%s387 + $0x98] sm:$0xff]
          %v1081 = vld [vmem:[%s387 + $0xa0] sm:$0xff]
          %v1082 = vld [vmem:[%s387 + $0xa8] sm:$0xff]
          %v1083 = vld [vmem:[%s387 + $0xb0] sm:$0xff]
          %v1084 = vld [vmem:[%s387 + $0xb8] sm:$0xff]
          %v1085 = vld [vmem:[%s387 + $0xc0] sm:$0xff]
          %v1086 = vld [vmem:[%s387 + $0xc8] sm:$0xff]
          %v1087 = vld [vmem:[%s387 + $0xd0] sm:$0xff]
          %v1088 = vld [vmem:[%s387 + $0xd8] sm:$0xff]
          %v1089 = vld [vmem:[%s387 + $0xe0] sm:$0xff]
          %v1090 = vld [vmem:[%s387 + $0xe8] sm:$0xff]
          %v1091 = vld [vmem:[%s387 + $0xf0] sm:$0xff]
          %v1092 = vld [vmem:[%s387 + $0xf8] sm:$0xff]
          %v1093 = vadd.f32 %v1029, %v1061
          %v1094 = vadd.f32 %v1030, %v1062
          %v1095 = vadd.f32 %v1031, %v1063
          %v1096 = vadd.f32 %v1032, %v1064
          %v1097 = vadd.f32 %v1033, %v1065
          %v1098 = vadd.f32 %v1034, %v1066
          %v1099 = vadd.f32 %v1035, %v1067
          %v1100 = vadd.f32 %v1036, %v1068
          %v1101 = vadd.f32 %v1037, %v1069
          %v1102 = vadd.f32 %v1038, %v1070
          %v1103 = vadd.f32 %v1039, %v1071
          %v1104 = vadd.f32 %v1040, %v1072
          %v1105 = vadd.f32 %v1041, %v1073
          %v1106 = vadd.f32 %v1042, %v1074
          %v1107 = vadd.f32 %v1043, %v1075
          %v1108 = vadd.f32 %v1044, %v1076
          %v1109 = vadd.f32 %v1045, %v1077
          %v1110 = vadd.f32 %v1046, %v1078
          %v1111 = vadd.f32 %v1047, %v1079
          %v1112 = vadd.f32 %v1048, %v1080
          %v1113 = vadd.f32 %v1049, %v1081
          %v1114 = vadd.f32 %v1050, %v1082
          %v1115 = vadd.f32 %v1051, %v1083
          %v1116 = vadd.f32 %v1052, %v1084
          %v1117 = vadd.f32 %v1053, %v1085
          %v1118 = vadd.f32 %v1054, %v1086
          %v1119 = vadd.f32 %v1055, %v1087
          %v1120 = vadd.f32 %v1056, %v1088
          %v1121 = vadd.f32 %v1057, %v1089
          %v1122 = vadd.f32 %v1058, %v1090
          %v1123 = vadd.f32 %v1059, %v1091
          %v1124 = vadd.f32 %v1060, %v1092
          %vm1125 = vcmp.gt.f32.partialorder %v1093, 0.0
          %vm1126 = vcmp.gt.f32.partialorder %v1094, 0.0
          %vm1127 = vcmp.gt.f32.partialorder %v1095, 0.0
          %vm1128 = vcmp.gt.f32.partialorder %v1096, 0.0
          %vm1129 = vcmp.gt.f32.partialorder %v1097, 0.0
          %vm1130 = vcmp.gt.f32.partialorder %v1098, 0.0
          %vm1131 = vcmp.gt.f32.partialorder %v1099, 0.0
          %vm1132 = vcmp.gt.f32.partialorder %v1100, 0.0
          %vm1133 = vcmp.gt.f32.partialorder %v1101, 0.0
          %vm1134 = vcmp.gt.f32.partialorder %v1102, 0.0
          %vm1135 = vcmp.gt.f32.partialorder %v1103, 0.0
          %vm1136 = vcmp.gt.f32.partialorder %v1104, 0.0
          %vm1137 = vcmp.gt.f32.partialorder %v1105, 0.0
          %vm1138 = vcmp.gt.f32.partialorder %v1106, 0.0
          %vm1139 = vcmp.gt.f32.partialorder %v1107, 0.0
          %vm1140 = vcmp.gt.f32.partialorder %v1108, 0.0
          %vm1141 = vcmp.gt.f32.partialorder %v1109, 0.0
          %vm1142 = vcmp.gt.f32.partialorder %v1110, 0.0
          %vm1143 = vcmp.gt.f32.partialorder %v1111, 0.0
          %vm1144 = vcmp.gt.f32.partialorder %v1112, 0.0
          %vm1145 = vcmp.gt.f32.partialorder %v1113, 0.0
          %vm1146 = vcmp.gt.f32.partialorder %v1114, 0.0
          %vm1147 = vcmp.gt.f32.partialorder %v1115, 0.0
          %vm1148 = vcmp.gt.f32.partialorder %v1116, 0.0
          %vm1149 = vcmp.gt.f32.partialorder %v1117, 0.0
          %vm1150 = vcmp.gt.f32.partialorder %v1118, 0.0
          %vm1151 = vcmp.gt.f32.partialorder %v1119, 0.0
          %vm1152 = vcmp.gt.f32.partialorder %v1120, 0.0
          %vm1153 = vcmp.gt.f32.partialorder %v1121, 0.0
          %vm1154 = vcmp.gt.f32.partialorder %v1122, 0.0
          %vm1155 = vcmp.gt.f32.partialorder %v1123, 0.0
          %vm1156 = vcmp.gt.f32.partialorder %v1124, 0.0
          %v1157 = vmin.f32 %v1093, 0.0
          %v1158 = vmin.f32 %v1094, 0.0
          %v1159 = vmin.f32 %v1095, 0.0
          %v1160 = vmin.f32 %v1096, 0.0
          %v1161 = vmin.f32 %v1097, 0.0
          %v1162 = vmin.f32 %v1098, 0.0
          %v1163 = vmin.f32 %v1099, 0.0
          %v1164 = vmin.f32 %v1100, 0.0
          %v1165 = vmin.f32 %v1101, 0.0
          %v1166 = vmin.f32 %v1102, 0.0
          %v1167 = vmin.f32 %v1103, 0.0
          %v1168 = vmin.f32 %v1104, 0.0
          %v1169 = vmin.f32 %v1105, 0.0
          %v1170 = vmin.f32 %v1106, 0.0
          %v1171 = vmin.f32 %v1107, 0.0
          %v1172 = vmin.f32 %v1108, 0.0
          %v1173 = vmin.f32 %v1109, 0.0
          %v1174 = vmin.f32 %v1110, 0.0
          %v1175 = vmin.f32 %v1111, 0.0
          %v1176 = vmin.f32 %v1112, 0.0
          %v1177 = vmin.f32 %v1113, 0.0
          %v1178 = vmin.f32 %v1114, 0.0
          %v1179 = vmin.f32 %v1115, 0.0
          %v1180 = vmin.f32 %v1116, 0.0
          %v1181 = vmin.f32 %v1117, 0.0
          %v1182 = vmin.f32 %v1118, 0.0
          %v1183 = vmin.f32 %v1119, 0.0
          %v1184 = vmin.f32 %v1120, 0.0
          %v1185 = vmin.f32 %v1121, 0.0
          %v1186 = vmin.f32 %v1122, 0.0
          %v1187 = vmin.f32 %v1123, 0.0
          %v1188 = vmin.f32 %v1124, 0.0
          %v1189 = vmul.f32 %v1157, 1.442695
          %v1190 = vpow.pop %v1189
          %v1191 = vmul.f32 %v1158, 1.442695
          %v1192 = vpow.pop %v1191
          %v1193 = vmul.f32 %v1159, 1.442695
          %v1194 = vpow.pop %v1193
          %v1195 = vmul.f32 %v1160, 1.442695
          %v1196 = vpow.pop %v1195
          %v1197 = vmul.f32 %v1161, 1.442695
          %v1198 = vpow.pop %v1197
          %v1199 = vmul.f32 %v1162, 1.442695
          %v1200 = vpow.pop %v1199
          %v1201 = vmul.f32 %v1163, 1.442695
          %v1202 = vpow.pop %v1201
          %v1203 = vmul.f32 %v1164, 1.442695
          %v1204 = vpow.pop %v1203
          %v1205 = vmul.f32 %v1165, 1.442695
          %v1206 = vpow.pop %v1205
          %v1207 = vmul.f32 %v1166, 1.442695
          %v1208 = vpow.pop %v1207
          %v1209 = vmul.f32 %v1167, 1.442695
          %v1210 = vpow.pop %v1209
          %v1211 = vmul.f32 %v1168, 1.442695
          %v1212 = vpow.pop %v1211
          %v1213 = vmul.f32 %v1169, 1.442695
          %v1214 = vpow.pop %v1213
          %v1215 = vmul.f32 %v1170, 1.442695
          %v1216 = vpow.pop %v1215
          %v1217 = vmul.f32 %v1171, 1.442695
          %v1218 = vpow.pop %v1217
          %v1219 = vmul.f32 %v1172, 1.442695
          %v1220 = vpow.pop %v1219
          %v1221 = vmul.f32 %v1173, 1.442695
          %v1222 = vpow.pop %v1221
          %v1223 = vmul.f32 %v1174, 1.442695
          %v1224 = vpow.pop %v1223
          %v1225 = vmul.f32 %v1175, 1.442695
          %v1226 = vpow.pop %v1225
          %v1227 = vmul.f32 %v1176, 1.442695
          %v1228 = vpow.pop %v1227
          %v1229 = vmul.f32 %v1177, 1.442695
          %v1230 = vpow.pop %v1229
          %v1231 = vmul.f32 %v1178, 1.442695
          %v1232 = vpow.pop %v1231
          %v1233 = vmul.f32 %v1179, 1.442695
          %v1234 = vpow.pop %v1233
          %v1235 = vmul.f32 %v1180, 1.442695
          %v1236 = vpow.pop %v1235
          %v1237 = vmul.f32 %v1181, 1.442695
          %v1238 = vpow.pop %v1237
          %v1239 = vmul.f32 %v1182, 1.442695
          %v1240 = vpow.pop %v1239
          %v1241 = vmul.f32 %v1183, 1.442695
          %v1242 = vpow.pop %v1241
          %v1243 = vmul.f32 %v1184, 1.442695
          %v1244 = vpow.pop %v1243
          %v1245 = vmul.f32 %v1185, 1.442695
          %v1246 = vpow.pop %v1245
          %v1247 = vmul.f32 %v1186, 1.442695
          %v1248 = vpow.pop %v1247
          %v1249 = vmul.f32 %v1187, 1.442695
          %v1250 = vpow.pop %v1249
          %v1251 = vmul.f32 %v1188, 1.442695
          %v1252 = vpow.pop %v1251
          %v1253 = vsub.f32 %v1190, 1.0
          %v1254 = vsub.f32 %v1192, 1.0
          %v1255 = vsub.f32 %v1194, 1.0
          %v1256 = vsub.f32 %v1196, 1.0
          %v1257 = vsub.f32 %v1198, 1.0
          %v1258 = vsub.f32 %v1200, 1.0
          %v1259 = vsub.f32 %v1202, 1.0
          %v1260 = vsub.f32 %v1204, 1.0
          %v1261 = vsub.f32 %v1206, 1.0
          %v1262 = vsub.f32 %v1208, 1.0
          %v1263 = vsub.f32 %v1210, 1.0
          %v1264 = vsub.f32 %v1212, 1.0
          %v1265 = vsub.f32 %v1214, 1.0
          %v1266 = vsub.f32 %v1216, 1.0
          %v1267 = vsub.f32 %v1218, 1.0
          %v1268 = vsub.f32 %v1220, 1.0
          %v1269 = vsub.f32 %v1222, 1.0
          %v1270 = vsub.f32 %v1224, 1.0
          %v1271 = vsub.f32 %v1226, 1.0
          %v1272 = vsub.f32 %v1228, 1.0
          %v1273 = vsub.f32 %v1230, 1.0
          %v1274 = vsub.f32 %v1232, 1.0
          %v1275 = vsub.f32 %v1234, 1.0
          %v1276 = vsub.f32 %v1236, 1.0
          %v1277 = vsub.f32 %v1238, 1.0
          %v1278 = vsub.f32 %v1240, 1.0
          %v1279 = vsub.f32 %v1242, 1.0
          %v1280 = vsub.f32 %v1244, 1.0
          %v1281 = vsub.f32 %v1246, 1.0
          %v1282 = vsub.f32 %v1248, 1.0
          %v1283 = vsub.f32 %v1250, 1.0
          %v1284 = vsub.f32 %v1252, 1.0
          %v1285 = vsel %vm1125, %v1093, %v1253
          %v1286 = vsel %vm1126, %v1094, %v1254
          %v1287 = vsel %vm1127, %v1095, %v1255
          %v1288 = vsel %vm1128, %v1096, %v1256
          %v1289 = vsel %vm1129, %v1097, %v1257
          %v1290 = vsel %vm1130, %v1098, %v1258
          %v1291 = vsel %vm1131, %v1099, %v1259
          %v1292 = vsel %vm1132, %v1100, %v1260
          %v1293 = vsel %vm1133, %v1101, %v1261
          %v1294 = vsel %vm1134, %v1102, %v1262
          %v1295 = vsel %vm1135, %v1103, %v1263
          %v1296 = vsel %vm1136, %v1104, %v1264
          %v1297 = vsel %vm1137, %v1105, %v1265
          %v1298 = vsel %vm1138, %v1106, %v1266
          %v1299 = vsel %vm1139, %v1107, %v1267
          %v1300 = vsel %vm1140, %v1108, %v1268
          %v1301 = vsel %vm1141, %v1109, %v1269
          %v1302 = vsel %vm1142, %v1110, %v1270
          %v1303 = vsel %vm1143, %v1111, %v1271
          %v1304 = vsel %vm1144, %v1112, %v1272
          %v1305 = vsel %vm1145, %v1113, %v1273
          %v1306 = vsel %vm1146, %v1114, %v1274
          %v1307 = vsel %vm1147, %v1115, %v1275
          %v1308 = vsel %vm1148, %v1116, %v1276
          %v1309 = vsel %vm1149, %v1117, %v1277
          %v1310 = vsel %vm1150, %v1118, %v1278
          %v1311 = vsel %vm1151, %v1119, %v1279
          %v1312 = vsel %vm1152, %v1120, %v1280
          %v1313 = vsel %vm1153, %v1121, %v1281
          %v1314 = vsel %vm1154, %v1122, %v1282
          %v1315 = vsel %vm1155, %v1123, %v1283
          %v1316 = vsel %vm1156, %v1124, %v1284
          %1317 = vst [vmem:[%s393] sm:$0xff] %v1285
          %1318 = vst [vmem:[%s393 + $0x8] sm:$0xff] %v1286
          %1319 = vst [vmem:[%s393 + $0x10] sm:$0xff] %v1287
          %1320 = vst [vmem:[%s393 + $0x18] sm:$0xff] %v1288
          %1321 = vst [vmem:[%s393 + $0x20] sm:$0xff] %v1289
          %1322 = vst [vmem:[%s393 + $0x28] sm:$0xff] %v1290
          %1323 = vst [vmem:[%s393 + $0x30] sm:$0xff] %v1291
          %1324 = vst [vmem:[%s393 + $0x38] sm:$0xff] %v1292
          %1325 = vst [vmem:[%s393 + $0x40] sm:$0xff] %v1293
          %1326 = vst [vmem:[%s393 + $0x48] sm:$0xff] %v1294
          %1327 = vst [vmem:[%s393 + $0x50] sm:$0xff] %v1295
          %1328 = vst [vmem:[%s393 + $0x58] sm:$0xff] %v1296
          %1329 = vst [vmem:[%s393 + $0x60] sm:$0xff] %v1297
          %1330 = vst [vmem:[%s393 + $0x68] sm:$0xff] %v1298
          %1331 = vst [vmem:[%s393 + $0x70] sm:$0xff] %v1299
          %1332 = vst [vmem:[%s393 + $0x78] sm:$0xff] %v1300
          %1333 = vst [vmem:[%s393 + $0x80] sm:$0xff] %v1301
          %1334 = vst [vmem:[%s393 + $0x88] sm:$0xff] %v1302
          %1335 = vst [vmem:[%s393 + $0x90] sm:$0xff] %v1303
          %1336 = vst [vmem:[%s393 + $0x98] sm:$0xff] %v1304
          %1337 = vst [vmem:[%s393 + $0xa0] sm:$0xff] %v1305
          %1338 = vst [vmem:[%s393 + $0xa8] sm:$0xff] %v1306
          %1339 = vst [vmem:[%s393 + $0xb0] sm:$0xff] %v1307
          %1340 = vst [vmem:[%s393 + $0xb8] sm:$0xff] %v1308
          %1341 = vst [vmem:[%s393 + $0xc0] sm:$0xff] %v1309
          %1342 = vst [vmem:[%s393 + $0xc8] sm:$0xff] %v1310
          %1343 = vst [vmem:[%s393 + $0xd0] sm:$0xff] %v1311
          %1344 = vst [vmem:[%s393 + $0xd8] sm:$0xff] %v1312
          %1345 = vst [vmem:[%s393 + $0xe0] sm:$0xff] %v1313
          %1346 = vst [vmem:[%s393 + $0xe8] sm:$0xff] %v1314
          %1347 = vst [vmem:[%s393 + $0xf0] sm:$0xff] %v1315
          %1348 = vst [vmem:[%s393 + $0xf8] sm:$0xff] %v1316
        $region78: #{lame_sage.7} parent=65 // pred_fallthru
          _
        %s1349 = smul.u32 32, %s18
        %p1350 = scmp.lt.s32.totalorder %s1349, 63
        %s1351 = scalar_select %p1350, %s1349, 63
        %s1352 = smul.addr %s1351, 8
        %s1353 = scalar_lea.vmem %s3, %s1352
        // Predicated region
        $region79: #{lame_sage.7} parent=65 // pred_check
          %p1354 = pneg %p124
        $region80: #{lame_sage.7} parent=65 // pred_check_branch
          %1356 = sbr.rel (%p1354) target = $region82
        $region81: #{lame_sage.7} parent=65 // pred_region
          %s1357 = smul.u32 32, %s18
        $region82: #{lame_sage.7} parent=65 // pred_fallthru
          _
      $region66: #{lame_sage.7} parent=5 // pred_fallthru
        _
      %p1358 = scmp.le.s32.totalorder 2, %s9
      // Predicated region
      $region83: #{lame_sage.7} parent=5 // pred_check
        %p1359 = pneg %p1358
      $region84: #{lame_sage.7} parent=5 // pred_check_branch
        %1361 = sbr.rel (%p1359) target = $region86
      $region85: #{lame_sage.7} parent=5 // pred_region
        %s1362 = ssub.s32 %s9, 2
        // Predicated region
        $region87: #{lame_sage.7} parent=85 // pred_check
          %p1363 = pneg %p130
        $region88: #{lame_sage.7} parent=85 // pred_check_branch
          %1365 = sbr.rel (%p1363) target = $region90
        $region89: #{lame_sage.7} parent=85 // pred_region
          %s1366 = smul.u32 32, %s20
          %p1367 = scmp.lt.s32.totalorder %s1366, 63
          %s1368 = scalar_select %p1367, %s1366, 63
          %s1369 = smul.addr %s1368, 8
          %s1370 = scalar_lea.vmem %s3, %s1369
        $region90: #{lame_sage.7} parent=85 // pred_fallthru
          _
      $region86: #{lame_sage.7} parent=5 // pred_fallthru
        _
    $region6: #{lame_sage.7} parent=1 // loop_footer
      %s13 = sadd.s32 1, %s9
    $region7: #{lame_sage.7} parent=1 // loop_footer_branch
      %8 = sbr.rel target = $region3
    $region8: #{lame_sage.7} parent=1 // loop_exit
      _

// kernel: lame_sage.11
$region0: #{lame_sage.11}
  #allocation0 [shape = 'u32[]', space=smem, size = 0x4, offset = 0x4, fixed_abs, tag = 'smem constant byte address 0x4 - core index']
  #allocation1 [shape = 'u32[72,128]{1,0:T(1,128)}', space=vmem, size = 0x9000, scoped, tag = 'internal scratch']
  #allocation2 [shape = 'f32[256,128]{1,0:T(8,128)}', space=vmem, size = 0x20000, scoped, tag = 'scratch operand']
  %s0 = inlined_call_operand.vmem [shape: bf16[512,512], index: 0, kind: input, shape index: {}]
  %s1 = inlined_call_operand.vmem [shape: bf16[512,128], index: 1, kind: input, shape index: {}]
  %s2 = inlined_call_operand.vmem [shape: f32[512,128], index: 2, kind: input, shape index: {}]
  %s3 = inlined_call_operand.vmem [shape: f32[512,128], index: 3, kind: output, shape index: {0}]
  %s4 = inlined_call_operand.vmem [shape: f32[512,128], index: 4, kind: output, shape index: {1}]
  %5 = xla_tuple %s3, %s4
  %s6 = sld [smem:[#allocation0]]
  $region99: #{lame_sage.11} parent=0
    _
  %s8 = ssub.s32 1, %s6
  %s9 = scalar_select 0, %s8, %s6
  $region1: #{lame_sage.11} parent=0
    #allocation3 [shape = 'u8[262144]{0}', space=vmem, size = 0x40000, scoped, tag = 'input window, operand 0']
    loop: start=0, step=1, limit=6
    $region2: #{lame_sage.11} parent=1 // loop_pre_header
      _
    $region3: #{lame_sage.11} parent=1 // loop_header
      %s11 = sphi 0, %s15
      %p12 = scmp.ge.s32.totalorder %s11, 6
      %s18 = sphi 0, %s30
      %s19 = sphi 0, %s26
      %s20 = sphi 0, %s18
      %s21 = sphi 0, %s19
      %s22 = sphi 0, %s20
      %s23 = sphi 0, %s21
      %s35 = sphi 0, %s37
      %s38 = sphi 0, %s35
      %s39 = sphi 0, %s38
      %s55 = sphi 0, %s39
      %s61 = sphi 0, %s63
      %s64 = sphi 0, %s61
      %s65 = sphi 0, %s64
      %s81 = sphi 0, %s65
      %s87 = sphi 0, %s89
      %s90 = sphi 0, %s87
      %s91 = sphi 0, %s90
      %s107 = sphi 0, %s91
      %s113 = sphi 0, %s115
      %s116 = sphi 0, %s113
      %s117 = sphi 0, %s116
      %s133 = sphi 0, %s117
      %s139 = sphi 0, %s141
      %s142 = sphi 0, %s139
      %s143 = sphi 0, %s142
      %s159 = sphi 0, %s143
    $region4: #{lame_sage.11} parent=1 // loop_header_branch
      %14 = sbr.rel (%p12) target = $region8
    $region5: #{lame_sage.11} parent=1 // loop_body
      %s16 = ssub.s32 %s11, 1
      %s17 = ssub.s32 %s11, 2
      %s24 = sadd.s32 1, %s19
      %p25 = scmp.ge.s32.totalorder %s24, 2
      %s26 = scalar_select %p25, 0, %s24
      %s27 = sadd.s32 1, %s18
      %s28 = scalar_select %p25, %s27, %s18
      %p29 = scmp.ge.s32.totalorder %s28, 2
      %s30 = scalar_select %p29, 0, %s28
      %s31 = ssub.s32 %s18, %s30
      %s32 = ssub.s32 %s19, %s26
      %s33 = sor.u32 %s31, %s32
      %p34 = scmp.eq.s32.totalorder %s33, 0
      %s36 = sadd.s32 %s35, 1
      %s37 = scalar_select %p34, %s35, %s36
      %p40 = pneg %p34
      %p41 = scmp.eq.s32.totalorder %s11, 3
      %p42 = por %p40, %p41
      %p43 = scmp.ne.s32.totalorder %s35, %s38
      %p44 = scmp.eq.s32.totalorder %s11, 0
      %p45 = por %p43, %p44
      %p46 = scmp.ne.s32.totalorder %s35, %s38
      %p47 = scmp.eq.s32.totalorder %s16, 3
      %p48 = por %p46, %p47
      %p49 = scmp.ne.s32.totalorder %s38, %s39
      %p50 = scmp.eq.s32.totalorder %s16, 0
      %p51 = por %p49, %p50
      %p52 = scmp.ne.s32.totalorder %s38, %s39
      %p53 = scmp.eq.s32.totalorder %s17, 3
      %p54 = por %p52, %p53
      %p56 = scmp.ne.s32.totalorder %s39, %s55
      %p57 = scmp.eq.s32.totalorder %s17, 0
      %p58 = por %p56, %p57
      %s59 = ssub.s32 %s19, %s26
      %p60 = scmp.eq.s32.totalorder %s59, 0
      %s62 = sadd.s32 %s61, 1
      %s63 = scalar_select %p60, %s61, %s62
      %p66 = pneg %p60
      %p67 = scmp.eq.s32.totalorder %s11, 3
      %p68 = por %p66, %p67
      %p69 = scmp.ne.s32.totalorder %s61, %s64
      %p70 = scmp.eq.s32.totalorder %s11, 0
      %p71 = por %p69, %p70
      %p72 = scmp.ne.s32.totalorder %s61, %s64
      %p73 = scmp.eq.s32.totalorder %s16, 3
      %p74 = por %p72, %p73
      %p75 = scmp.ne.s32.totalorder %s64, %s65
      %p76 = scmp.eq.s32.totalorder %s16, 0
      %p77 = por %p75, %p76
      %p78 = scmp.ne.s32.totalorder %s64, %s65
      %p79 = scmp.eq.s32.totalorder %s17, 3
      %p80 = por %p78, %p79
      %p82 = scmp.ne.s32.totalorder %s65, %s81
      %p83 = scmp.eq.s32.totalorder %s17, 0
      %p84 = por %p82, %p83
      %s85 = ssub.s32 %s18, %s30
      %p86 = scmp.eq.s32.totalorder %s85, 0
      %s88 = sadd.s32 %s87, 1
      %s89 = scalar_select %p86, %s87, %s88
      %p92 = pneg %p86
      %p93 = scmp.eq.s32.totalorder %s11, 3
      %p94 = por %p92, %p93
      %p95 = scmp.ne.s32.totalorder %s87, %s90
      %p96 = scmp.eq.s32.totalorder %s11, 0
      %p97 = por %p95, %p96
      %p98 = scmp.ne.s32.totalorder %s87, %s90
      %p99 = scmp.eq.s32.totalorder %s16, 3
      %p100 = por %p98, %p99
      %p101 = scmp.ne.s32.totalorder %s90, %s91
      %p102 = scmp.eq.s32.totalorder %s16, 0
      %p103 = por %p101, %p102
      %p104 = scmp.ne.s32.totalorder %s90, %s91
      %p105 = scmp.eq.s32.totalorder %s17, 3
      %p106 = por %p104, %p105
      %p108 = scmp.ne.s32.totalorder %s91, %s107
      %p109 = scmp.eq.s32.totalorder %s17, 0
      %p110 = por %p108, %p109
      %s111 = ssub.s32 %s18, %s30
      %p112 = scmp.eq.s32.totalorder %s111, 0
      %s114 = sadd.s32 %s113, 1
      %s115 = scalar_select %p112, %s113, %s114
      %p118 = pneg %p112
      %p119 = scmp.eq.s32.totalorder %s11, 3
      %p120 = por %p118, %p119
      %p121 = scmp.ne.s32.totalorder %s113, %s116
      %p122 = scmp.eq.s32.totalorder %s11, 0
      %p123 = por %p121, %p122
      %p124 = scmp.ne.s32.totalorder %s113, %s116
      %p125 = scmp.eq.s32.totalorder %s16, 3
      %p126 = por %p124, %p125
      %p127 = scmp.ne.s32.totalorder %s116, %s117
      %p128 = scmp.eq.s32.totalorder %s16, 0
      %p129 = por %p127, %p128
      %p130 = scmp.ne.s32.totalorder %s116, %s117
      %p131 = scmp.eq.s32.totalorder %s17, 3
      %p132 = por %p130, %p131
      %p134 = scmp.ne.s32.totalorder %s117, %s133
      %p135 = scmp.eq.s32.totalorder %s17, 0
      %p136 = por %p134, %p135
      %s137 = ssub.s32 %s18, %s30
      %p138 = scmp.eq.s32.totalorder %s137, 0
      %s140 = sadd.s32 %s139, 1
      %s141 = scalar_select %p138, %s139, %s140
      %p144 = pneg %p138
      %p145 = scmp.eq.s32.totalorder %s11, 3
      %p146 = por %p144, %p145
      %p147 = scmp.ne.s32.totalorder %s139, %s142
      %p148 = scmp.eq.s32.totalorder %s11, 0
      %p149 = por %p147, %p148
      %p150 = scmp.ne.s32.totalorder %s139, %s142
      %p151 = scmp.eq.s32.totalorder %s16, 3
      %p152 = por %p150, %p151
      %p153 = scmp.ne.s32.totalorder %s142, %s143
      %p154 = scmp.eq.s32.totalorder %s16, 0
      %p155 = por %p153, %p154
      %p156 = scmp.ne.s32.totalorder %s142, %s143
      %p157 = scmp.eq.s32.totalorder %s17, 3
      %p158 = por %p156, %p157
      %p160 = scmp.ne.s32.totalorder %s143, %s159
      %p161 = scmp.eq.s32.totalorder %s17, 0
      %p162 = por %p160, %p161
      %p163 = scmp.le.s32.totalorder 1, %s11
      %p164 = scmp.lt.s32.totalorder %s11, 5
      %p165 = pnand %p163, %p164
      %p166 = pneg %p165
      // Predicated region
      $region9: #{lame_sage.11} parent=5 // pred_check
        _
      $region10: #{lame_sage.11} parent=5 // pred_check_branch
        %168 = sbr.rel (%p165) target = $region12
      $region11: #{lame_sage.11} parent=5 // pred_region
        %s169 = ssub.s32 %s11, 1
      $region12: #{lame_sage.11} parent=5 // pred_fallthru
        _
      %p170 = scmp.lt.s32.totalorder %s11, 4
      // Predicated region
      $region13: #{lame_sage.11} parent=5 // pred_check
        %p171 = pneg %p170
      $region14: #{lame_sage.11} parent=5 // pred_check_branch
        %173 = sbr.rel (%p171) target = $region16
      $region15: #{lame_sage.11} parent=5 // pred_region
        // Predicated region
        $region17: #{lame_sage.11} parent=15 // pred_check
          %p174 = pneg %p45
        $region18: #{lame_sage.11} parent=15 // pred_check_branch
          %176 = sbr.rel (%p174) target = $region20
        $region19: #{lame_sage.11} parent=15 // pred_region
          %s177 = sand.u32 %s35, 1
          %s178 = sand.u32 %s35, 1
          %s179 = smul.addr %s178, 256
          %s180 = scalar_lea.vmem [#allocation3], %s179
          %s181 = smul.u32 32, %s18
          %s182 = smul.u32 2, %s19
          %s183 = smul.addr %s181, 4
          %s184 = sadd.s32 %s182, %s183
          %s185 = smul.addr %s184, 4
          %s186 = scalar_lea.vmem %s0, %s185
          // Predicated region
          $region21: #{lame_sage.11} parent=19 // pred_check
            _
          $region22: #{lame_sage.11} parent=19 // pred_check_branch
            %188 = sbr.rel (0) target = $region24
          $region23: #{lame_sage.11} parent=19 // pred_region
            // Predicated region
            $region25: #{lame_sage.11} parent=23 // pred_check
              _
            $region26: #{lame_sage.11} parent=23 // pred_check_branch
              %190 = sbr.rel (0) target = $region28
            $region27: #{lame_sage.11} parent=23 // pred_region
              // Predicated region
              $region40: #{lame_sage.11} parent=27 // pred_check
                _
              $region41: #{lame_sage.11} parent=27 // pred_check_branch
                %268 = sbr.rel (0) target = $region43
              $region42: #{lame_sage.11} parent=27 // pred_region
                loop: start=0, step=1, limit=1
                $region44: #{lame_sage.11} parent=42 // loop_pre_header
                  _
                $region45: #{lame_sage.11} parent=42 // loop_header
                  %s270 = sphi 0, %s274
                  %p271 = scmp.ge.s32.totalorder %s270, 1
                  %s275 = sphi %s186, %s186
                  %s276 = sphi %s180, %s180
                $region46: #{lame_sage.11} parent=42 // loop_header_branch
                  %273 = sbr.rel (%p271) target = $region50
                $region47: #{lame_sage.11} parent=42 // loop_body
                  %v277 = vld [vmem:[%s275] sm:$0xff]
                  %278 = vst [vmem:[%s276] sm:$0xff] %v277
                  %v279 = vld [vmem:[%s275 + $0x10] sm:$0xff]
                  %280 = vst [vmem:[%s276 + $0x8] sm:$0xff] %v279
                  %v281 = vld [vmem:[%s275 + $0x20] sm:$0xff]
                  %282 = vst [vmem:[%s276 + $0x10] sm:$0xff] %v281
                  %v283 = vld [vmem:[%s275 + $0x30] sm:$0xff]
                  %284 = vst [vmem:[%s276 + $0x18] sm:$0xff] %v283
                  %v285 = vld [vmem:[%s275 + $0x40] sm:$0xff]
                  %286 = vst [vmem:[%s276 + $0x20] sm:$0xff] %v285
                  %v287 = vld [vmem:[%s275 + $0x50] sm:$0xff]
                  %288 = vst [vmem:[%s276 + $0x28] sm:$0xff] %v287
                  %v289 = vld [vmem:[%s275 + $0x60] sm:$0xff]
                  %290 = vst [vmem:[%s276 + $0x30] sm:$0xff] %v289
                  %v291 = vld [vmem:[%s275 + $0x70] sm:$0xff]
                  %292 = vst [vmem:[%s276 + $0x38] sm:$0xff] %v291
                  %v293 = vld [vmem:[%s275 + $0x80] sm:$0xff]
                  %294 = vst [vmem:[%s276 + $0x40] sm:$0xff] %v293
                  %v295 = vld [vmem:[%s275 + $0x90] sm:$0xff]
                  %296 = vst [vmem:[%s276 + $0x48] sm:$0xff] %v295
                  %v297 = vld [vmem:[%s275 + $0xa0] sm:$0xff]
                  %298 = vst [vmem:[%s276 + $0x50] sm:$0xff] %v297
                  %v299 = vld [vmem:[%s275 + $0xb0] sm:$0xff]
                  %300 = vst [vmem:[%s276 + $0x58] sm:$0xff] %v299
                  %v301 = vld [vmem:[%s275 + $0xc0] sm:$0xff]
                  %302 = vst [vmem:[%s276 + $0x60] sm:$0xff] %v301
                  %v303 = vld [vmem:[%s275 + $0xd0] sm:$0xff]
                  %304 = vst [vmem:[%s276 + $0x68] sm:$0xff] %v303
                  %v305 = vld [vmem:[%s275 + $0xe0] sm:$0xff]
                  %306 = vst [vmem:[%s276 + $0x70] sm:$0xff] %v305
                  %v307 = vld [vmem:[%s275 + $0xf0] sm:$0xff]
                  %308 = vst [vmem:[%s276 + $0x78] sm:$0xff] %v307
                  %v309 = vld [vmem:[%s275 + $0x100] sm:$0xff]
                  %310 = vst [vmem:[%s276 + $0x80] sm:$0xff] %v309
                  %v311 = vld [vmem:[%s275 + $0x110] sm:$0xff]
                  %312 = vst [vmem:[%s276 + $0x88] sm:$0xff] %v311
                  %v313 = vld [vmem:[%s275 + $0x120] sm:$0xff]
                  %314 = vst [vmem:[%s276 + $0x90] sm:$0xff] %v313
                  %v315 = vld [vmem:[%s275 + $0x130] sm:$0xff]
                  %316 = vst [vmem:[%s276 + $0x98] sm:$0xff] %v315
                  %v317 = vld [vmem:[%s275 + $0x140] sm:$0xff]
                  %318 = vst [vmem:[%s276 + $0xa0] sm:$0xff] %v317
                  %v319 = vld [vmem:[%s275 + $0x150] sm:$0xff]
                  %320 = vst [vmem:[%s276 + $0xa8] sm:$0xff] %v319
                  %v321 = vld [vmem:[%s275 + $0x160] sm:$0xff]
                  %322 = vst [vmem:[%s276 + $0xb0] sm:$0xff] %v321
                  %v323 = vld [vmem:[%s275 + $0x170] sm:$0xff]
                  %324 = vst [vmem:[%s276 + $0xb8] sm:$0xff] %v323
                  %v325 = vld [vmem:[%s275 + $0x180] sm:$0xff]
                  %326 = vst [vmem:[%s276 + $0xc0] sm:$0xff] %v325
                  %v327 = vld [vmem:[%s275 + $0x190] sm:$0xff]
                  %328 = vst [vmem:[%s276 + $0xc8] sm:$0xff] %v327
                  %v329 = vld [vmem:[%s275 + $0x1a0] sm:$0xff]
                  %330 = vst [vmem:[%s276 + $0xd0] sm:$0xff] %v329
                  %v331 = vld [vmem:[%s275 + $0x1b0] sm:$0xff]
                  %332 = vst [vmem:[%s276 + $0xd8] sm:$0xff] %v331
                  %v333 = vld [vmem:[%s275 + $0x1c0] sm:$0xff]
                  %334 = vst [vmem:[%s276 + $0xe0] sm:$0xff] %v333
                  %v335 = vld [vmem:[%s275 + $0x1d0] sm:$0xff]
                  %336 = vst [vmem:[%s276 + $0xe8] sm:$0xff] %v335
                  %v337 = vld [vmem:[%s275 + $0x1e0] sm:$0xff]
                  %338 = vst [vmem:[%s276 + $0xf0] sm:$0xff] %v337
                  %v339 = vld [vmem:[%s275 + $0x1f0] sm:$0xff]
                  %340 = vst [vmem:[%s276 + $0xf8] sm:$0xff] %v339
                $region48: #{lame_sage.11} parent=42 // loop_footer
                  %s274 = sadd.s32 1, %s270
                $region49: #{lame_sage.11} parent=42 // loop_footer_branch
                  %269 = sbr.rel target = $region45
                $region50: #{lame_sage.11} parent=42 // loop_exit
                  _
              $region43: #{lame_sage.11} parent=27 // pred_fallthru
                _
              // Predicated region
              $region51: #{lame_sage.11} parent=27 // pred_check
                _
              $region52: #{lame_sage.11} parent=27 // pred_check_branch
                %342 = sbr.rel target = $region54
              $region53: #{lame_sage.11} parent=27 // pred_region
                _
              $region54: #{lame_sage.11} parent=27 // pred_fallthru
                _
            $region28: #{lame_sage.11} parent=23 // pred_fallthru
              _
            // Predicated region
            $region29: #{lame_sage.11} parent=23 // pred_check
              _
            $region30: #{lame_sage.11} parent=23 // pred_check_branch
              %192 = sbr.rel target = $region32
            $region31: #{lame_sage.11} parent=23 // pred_region
              %s194 = ssub.s32 256, 1
              loop: start=0, step=1, limit=1
              $region33: #{lame_sage.11} parent=31 // loop_pre_header
                _
              $region34: #{lame_sage.11} parent=31 // loop_header
                %s196 = sphi 0, %s200
                %p197 = scmp.ge.s32.totalorder %s196, 1
                %s201 = sphi %s186, %s186
                %s202 = sphi %s180, %s180
              $region35: #{lame_sage.11} parent=31 // loop_header_branch
                %199 = sbr.rel (%p197) target = $region39
              $region36: #{lame_sage.11} parent=31 // loop_body
                %v203 = vld [vmem:[%s201] sm:%s194]
                %204 = vst [vmem:[%s202] sm:%s194] %v203
                %v205 = vld [vmem:[%s201 + $0x10] sm:%s194]
                %206 = vst [vmem:[%s202 + $0x8] sm:%s194] %v205
                %v207 = vld [vmem:[%s201 + $0x20] sm:%s194]
                %208 = vst [vmem:[%s202 + $0x10] sm:%s194] %v207
                %v209 = vld [vmem:[%s201 + $0x30] sm:%s194]
                %210 = vst [vmem:[%s202 + $0x18] sm:%s194] %v209
                %v211 = vld [vmem:[%s201 + $0x40] sm:%s194]
                %212 = vst [vmem:[%s202 + $0x20] sm:%s194] %v211
                %v213 = vld [vmem:[%s201 + $0x50] sm:%s194]
                %214 = vst [vmem:[%s202 + $0x28] sm:%s194] %v213
                %v215 = vld [vmem:[%s201 + $0x60] sm:%s194]
                %216 = vst [vmem:[%s202 + $0x30] sm:%s194] %v215
                %v217 = vld [vmem:[%s201 + $0x70] sm:%s194]
                %218 = vst [vmem:[%s202 + $0x38] sm:%s194] %v217
                %v219 = vld [vmem:[%s201 + $0x80] sm:%s194]
                %220 = vst [vmem:[%s202 + $0x40] sm:%s194] %v219
                %v221 = vld [vmem:[%s201 + $0x90] sm:%s194]
                %222 = vst [vmem:[%s202 + $0x48] sm:%s194] %v221
                %v223 = vld [vmem:[%s201 + $0xa0] sm:%s194]
                %224 = vst [vmem:[%s202 + $0x50] sm:%s194] %v223
                %v225 = vld [vmem:[%s201 + $0xb0] sm:%s194]
                %226 = vst [vmem:[%s202 + $0x58] sm:%s194] %v225
                %v227 = vld [vmem:[%s201 + $0xc0] sm:%s194]
                %228 = vst [vmem:[%s202 + $0x60] sm:%s194] %v227
                %v229 = vld [vmem:[%s201 + $0xd0] sm:%s194]
                %230 = vst [vmem:[%s202 + $0x68] sm:%s194] %v229
                %v231 = vld [vmem:[%s201 + $0xe0] sm:%s194]
                %232 = vst [vmem:[%s202 + $0x70] sm:%s194] %v231
                %v233 = vld [vmem:[%s201 + $0xf0] sm:%s194]
                %234 = vst [vmem:[%s202 + $0x78] sm:%s194] %v233
                %v235 = vld [vmem:[%s201 + $0x100] sm:%s194]
                %236 = vst [vmem:[%s202 + $0x80] sm:%s194] %v235
                %v237 = vld [vmem:[%s201 + $0x110] sm:%s194]
                %238 = vst [vmem:[%s202 + $0x88] sm:%s194] %v237
                %v239 = vld [vmem:[%s201 + $0x120] sm:%s194]
                %240 = vst [vmem:[%s202 + $0x90] sm:%s194] %v239
                %v241 = vld [vmem:[%s201 + $0x130] sm:%s194]
                %242 = vst [vmem:[%s202 + $0x98] sm:%s194] %v241
                %v243 = vld [vmem:[%s201 + $0x140] sm:%s194]
                %244 = vst [vmem:[%s202 + $0xa0] sm:%s194] %v243
                %v245 = vld [vmem:[%s201 + $0x150] sm:%s194]
                %246 = vst [vmem:[%s202 + $0xa8] sm:%s194] %v245
                %v247 = vld [vmem:[%s201 + $0x160] sm:%s194]
                %248 = vst [vmem:[%s202 + $0xb0] sm:%s194] %v247
                %v249 = vld [vmem:[%s201 + $0x170] sm:%s194]
                %250 = vst [vmem:[%s202 + $0xb8] sm:%s194] %v249
                %v251 = vld [vmem:[%s201 + $0x180] sm:%s194]
                %252 = vst [vmem:[%s202 + $0xc0] sm:%s194] %v251
                %v253 = vld [vmem:[%s201 + $0x190] sm:%s194]
                %254 = vst [vmem:[%s202 + $0xc8] sm:%s194] %v253
                %v255 = vld [vmem:[%s201 + $0x1a0] sm:%s194]
                %256 = vst [vmem:[%s202 + $0xd0] sm:%s194] %v255
                %v257 = vld [vmem:[%s201 + $0x1b0] sm:%s194]
                %258 = vst [vmem:[%s202 + $0xd8] sm:%s194] %v257
                %v259 = vld [vmem:[%s201 + $0x1c0] sm:%s194]
                %260 = vst [vmem:[%s202 + $0xe0] sm:%s194] %v259
                %v261 = vld [vmem:[%s201 + $0x1d0] sm:%s194]
                %262 = vst [vmem:[%s202 + $0xe8] sm:%s194] %v261
                %v263 = vld [vmem:[%s201 + $0x1e0] sm:%s194]
                %264 = vst [vmem:[%s202 + $0xf0] sm:%s194] %v263
                %v265 = vld [vmem:[%s201 + $0x1f0] sm:%s194]
                %266 = vst [vmem:[%s202 + $0xf8] sm:%s194] %v265
              $region37: #{lame_sage.11} parent=31 // loop_footer
                %s200 = sadd.s32 1, %s196
              $region38: #{lame_sage.11} parent=31 // loop_footer_branch
                %195 = sbr.rel target = $region34
              $region39: #{lame_sage.11} parent=31 // loop_exit
                _
            $region32: #{lame_sage.11} parent=23 // pred_fallthru
              _
          $region24: #{lame_sage.11} parent=19 // pred_fallthru
            _
          %343 = vnop
        $region20: #{lame_sage.11} parent=15 // pred_fallthru
          _
        // Predicated region
        $region55: #{lame_sage.11} parent=15 // pred_check
          %p344 = pneg %p71
        $region56: #{lame_sage.11} parent=15 // pred_check_branch
          %346 = sbr.rel (%p344) target = $region58
        $region57: #{lame_sage.11} parent=15 // pred_region
          %s347 = smul.u32 32, %s19
          %p348 = scmp.lt.s32.totalorder %s347, 63
          %s349 = scalar_select %p348, %s347, 63
          %s350 = smul.addr %s349, 4
          %s351 = scalar_lea.vmem %s1, %s350
          %s352 = smul.u32 32, %s19
        $region58: #{lame_sage.11} parent=15 // pred_fallthru
          _
        // Predicated region
        $region59: #{lame_sage.11} parent=15 // pred_check
          %p353 = pneg %p97
        $region60: #{lame_sage.11} parent=15 // pred_check_branch
          %355 = sbr.rel (%p353) target = $region62
        $region61: #{lame_sage.11} parent=15 // pred_region
          %s356 = smul.u32 32, %s18
          %p357 = scmp.lt.s32.totalorder %s356, 63
          %s358 = scalar_select %p357, %s356, 63
          %s359 = smul.addr %s358, 8
          %s360 = scalar_lea.vmem %s2, %s359
          %s361 = smul.u32 32, %s18
        $region62: #{lame_sage.11} parent=15 // pred_fallthru
          _
      $region16: #{lame_sage.11} parent=5 // pred_fallthru
        _
      %p362 = scmp.le.s32.totalorder 1, %s11
      %p363 = scmp.lt.s32.totalorder %s11, 5
      %p364 = pnand %p362, %p363
      %p365 = pneg %p364
      // Predicated region
      $region63: #{lame_sage.11} parent=5 // pred_check
        _
      $region64: #{lame_sage.11} parent=5 // pred_check_branch
        %367 = sbr.rel (%p364) target = $region66
      $region65: #{lame_sage.11} parent=5 // pred_region
        %s368 = ssub.s32 %s11, 1
        %s369 = sand.u32 %s38, 1
        %s370 = sand.u32 %s38, 1
        %s371 = smul.addr %s370, 256
        %s372 = scalar_lea.vmem [#allocation3], %s371
        // Predicated region
        $region67: #{lame_sage.11} parent=65 // pred_check
          %p373 = pneg %p51
        $region68: #{lame_sage.11} parent=65 // pred_check_branch
          %375 = sbr.rel (%p373) target = $region70
        $region69: #{lame_sage.11} parent=65 // pred_region
          _
        $region70: #{lame_sage.11} parent=65 // pred_fallthru
          _
        %s376 = sand.u32 %s38, 1
        %s377 = sand.u32 %s38, 1
        %s378 = smul.addr %s377, 256
        %s379 = scalar_lea.vmem [#allocation3], %s378
        %p380 = pneg %p51
        %p381 = pneg %p48
        %s382 = smul.u32 32, %s21
        %p383 = scmp.lt.s32.totalorder %s382, 63
        %s384 = scalar_select %p383, %s382, 63
        %s385 = smul.addr %s384, 4
        %s386 = scalar_lea.vmem %s1, %s385
        %p387 = pneg %p77
        %p388 = pneg %p74
        %s389 = smul.u32 32, %s20
        %p390 = scmp.lt.s32.totalorder %s389, 63
        %s391 = scalar_select %p390, %s389, 63
        %s392 = smul.addr %s391, 8
        %s393 = scalar_lea.vmem %s2, %s392
        %p394 = pneg %p103
        %p395 = pneg %p100
        %p396 = pneg %p129
        %p397 = pneg %p126
        %s398 = smul.u32 32, %s20
        %p399 = scmp.lt.s32.totalorder %s398, 63
        %s400 = scalar_select %p399, %s398, 63
        %s401 = smul.addr %s400, 8
        %s402 = scalar_lea.vmem %s3, %s401
        %p403 = pneg %p155
        %p404 = pneg %p152
        %s405 = smul.u32 32, %s20
        %p406 = scmp.lt.s32.totalorder %s405, 63
        %s407 = scalar_select %p406, %s405, 63
        %s408 = smul.addr %s407, 8
        %s409 = scalar_lea.vmem %s4, %s408
        %s410 = smul.u32 32, %s20
        %s411 = smul.u32 2, %s21
        %s412 = smul.u32 32, %s21
        %p413 = scmp.lt.s32.totalorder %s412, 63
        %s414 = scalar_select %p413, %s412, 63
        %s415 = smul.addr %s414, 4
        %s416 = scalar_lea.vmem %s1, %s415
        %s417 = smul.u32 32, %s21
        %s418 = smul.u32 32, %s20
        %p419 = scmp.lt.s32.totalorder %s418, 63
        %s420 = scalar_select %p419, %s418, 63
        %s421 = smul.addr %s420, 8
        %s422 = scalar_lea.vmem %s2, %s421
        %s423 = smul.u32 32, %s20
        %s424 = smul.u32 32, %s20
        %p425 = scmp.lt.s32.totalorder %s424, 63
        %s426 = scalar_select %p425, %s424, 63
        %s427 = smul.addr %s426, 8
        %s428 = scalar_lea.vmem %s3, %s427
        %s429 = smul.u32 32, %s20
        %s430 = smul.u32 32, %s20
        %p431 = scmp.lt.s32.totalorder %s430, 63
        %s432 = scalar_select %p431, %s430, 63
        %s433 = smul.addr %s432, 8
        %s434 = scalar_lea.vmem %s4, %s433
        %s435 = smul.u32 32, %s20
        %p436 = scmp.eq.s32.totalorder %s21, 0
        // Predicated region
        $region71: #{lame_sage.11} parent=65 // pred_check
          %p437 = pneg %p436
        $region72: #{lame_sage.11} parent=65 // pred_check_branch
          %439 = sbr.rel (%p437) target = $region74
        $region73: #{lame_sage.11} parent=65 // pred_region
          %440 = vst [vmem:[#allocation2] sm:$0xff] 0.0
          %441 = vst [vmem:[#allocation2 + $0x8] sm:$0xff] 0.0
          %442 = vst [vmem:[#allocation2 + $0x10] sm:$0xff] 0.0
          %443 = vst [vmem:[#allocation2 + $0x18] sm:$0xff] 0.0
          %444 = vst [vmem:[#allocation2 + $0x20] sm:$0xff] 0.0
          %445 = vst [vmem:[#allocation2 + $0x28] sm:$0xff] 0.0
          %446 = vst [vmem:[#allocation2 + $0x30] sm:$0xff] 0.0
          %447 = vst [vmem:[#allocation2 + $0x38] sm:$0xff] 0.0
          %448 = vst [vmem:[#allocation2 + $0x40] sm:$0xff] 0.0
          %449 = vst [vmem:[#allocation2 + $0x48] sm:$0xff] 0.0
          %450 = vst [vmem:[#allocation2 + $0x50] sm:$0xff] 0.0
          %451 = vst [vmem:[#allocation2 + $0x58] sm:$0xff] 0.0
          %452 = vst [vmem:[#allocation2 + $0x60] sm:$0xff] 0.0
          %453 = vst [vmem:[#allocation2 + $0x68] sm:$0xff] 0.0
          %454 = vst [vmem:[#allocation2 + $0x70] sm:$0xff] 0.0
          %455 = vst [vmem:[#allocation2 + $0x78] sm:$0xff] 0.0
          %456 = vst [vmem:[#allocation2 + $0x80] sm:$0xff] 0.0
          %457 = vst [vmem:[#allocation2 + $0x88] sm:$0xff] 0.0
          %458 = vst [vmem:[#allocation2 + $0x90] sm:$0xff] 0.0
          %459 = vst [vmem:[#allocation2 + $0x98] sm:$0xff] 0.0
          %460 = vst [vmem:[#allocation2 + $0xa0] sm:$0xff] 0.0
          %461 = vst [vmem:[#allocation2 + $0xa8] sm:$0xff] 0.0
          %462 = vst [vmem:[#allocation2 + $0xb0] sm:$0xff] 0.0
          %463 = vst [vmem:[#allocation2 + $0xb8] sm:$0xff] 0.0
          %464 = vst [vmem:[#allocation2 + $0xc0] sm:$0xff] 0.0
          %465 = vst [vmem:[#allocation2 + $0xc8] sm:$0xff] 0.0
          %466 = vst [vmem:[#allocation2 + $0xd0] sm:$0xff] 0.0
          %467 = vst [vmem:[#allocation2 + $0xd8] sm:$0xff] 0.0
          %468 = vst [vmem:[#allocation2 + $0xe0] sm:$0xff] 0.0
          %469 = vst [vmem:[#allocation2 + $0xe8] sm:$0xff] 0.0
          %470 = vst [vmem:[#allocation2 + $0xf0] sm:$0xff] 0.0
          %471 = vst [vmem:[#allocation2 + $0xf8] sm:$0xff] 0.0
        $region74: #{lame_sage.11} parent=65 // pred_fallthru
          _
        %v472 = vld [vmem:[#allocation2] sm:$0xff]
        %v473 = vld [vmem:[#allocation2 + $0x8] sm:$0xff]
        %v474 = vld [vmem:[#allocation2 + $0x10] sm:$0xff]
        %v475 = vld [vmem:[#allocation2 + $0x18] sm:$0xff]
        %v476 = vld [vmem:[#allocation2 + $0x20] sm:$0xff]
        %v477 = vld [vmem:[#allocation2 + $0x28] sm:$0xff]
        %v478 = vld [vmem:[#allocation2 + $0x30] sm:$0xff]
        %v479 = vld [vmem:[#allocation2 + $0x38] sm:$0xff]
        %v480 = vld [vmem:[#allocation2 + $0x40] sm:$0xff]
        %v481 = vld [vmem:[#allocation2 + $0x48] sm:$0xff]
        %v482 = vld [vmem:[#allocation2 + $0x50] sm:$0xff]
        %v483 = vld [vmem:[#allocation2 + $0x58] sm:$0xff]
        %v484 = vld [vmem:[#allocation2 + $0x60] sm:$0xff]
        %v485 = vld [vmem:[#allocation2 + $0x68] sm:$0xff]
        %v486 = vld [vmem:[#allocation2 + $0x70] sm:$0xff]
        %v487 = vld [vmem:[#allocation2 + $0x78] sm:$0xff]
        %v488 = vld [vmem:[#allocation2 + $0x80] sm:$0xff]
        %v489 = vld [vmem:[#allocation2 + $0x88] sm:$0xff]
        %v490 = vld [vmem:[#allocation2 + $0x90] sm:$0xff]
        %v491 = vld [vmem:[#allocation2 + $0x98] sm:$0xff]
        %v492 = vld [vmem:[#allocation2 + $0xa0] sm:$0xff]
        %v493 = vld [vmem:[#allocation2 + $0xa8] sm:$0xff]
        %v494 = vld [vmem:[#allocation2 + $0xb0] sm:$0xff]
        %v495 = vld [vmem:[#allocation2 + $0xb8] sm:$0xff]
        %v496 = vld [vmem:[#allocation2 + $0xc0] sm:$0xff]
        %v497 = vld [vmem:[#allocation2 + $0xc8] sm:$0xff]
        %v498 = vld [vmem:[#allocation2 + $0xd0] sm:$0xff]
        %v499 = vld [vmem:[#allocation2 + $0xd8] sm:$0xff]
        %v500 = vld [vmem:[#allocation2 + $0xe0] sm:$0xff]
        %v501 = vld [vmem:[#allocation2 + $0xe8] sm:$0xff]
        %v502 = vld [vmem:[#allocation2 + $0xf0] sm:$0xff]
        %v503 = vld [vmem:[#allocation2 + $0xf8] sm:$0xff]
        %v504 = vld [vmem:[%s372] sm:$0xff]
        %v505 = vld [vmem:[%s372 + $0x8] sm:$0xff]
        %v506 = vld [vmem:[%s372 + $0x10] sm:$0xff]
        %v507 = vld [vmem:[%s372 + $0x18] sm:$0xff]
        %v508 = vld [vmem:[%s372 + $0x20] sm:$0xff]
        %v509 = vld [vmem:[%s372 + $0x28] sm:$0xff]
        %v510 = vld [vmem:[%s372 + $0x30] sm:$0xff]
        %v511 = vld [vmem:[%s372 + $0x38] sm:$0xff]
        %v512 = vld [vmem:[%s372 + $0x40] sm:$0xff]
        %v513 = vld [vmem:[%s372 + $0x48] sm:$0xff]
        %v514 = vld [vmem:[%s372 + $0x50] sm:$0xff]
        %v515 = vld [vmem:[%s372 + $0x58] sm:$0xff]
        %v516 = vld [vmem:[%s372 + $0x60] sm:$0xff]
        %v517 = vld [vmem:[%s372 + $0x68] sm:$0xff]
        %v518 = vld [vmem:[%s372 + $0x70] sm:$0xff]
        %v519 = vld [vmem:[%s372 + $0x78] sm:$0xff]
        %v520 = vld [vmem:[%s372 + $0x80] sm:$0xff]
        %v521 = vld [vmem:[%s372 + $0x88] sm:$0xff]
        %v522 = vld [vmem:[%s372 + $0x90] sm:$0xff]
        %v523 = vld [vmem:[%s372 + $0x98] sm:$0xff]
        %v524 = vld [vmem:[%s372 + $0xa0] sm:$0xff]
        %v525 = vld [vmem:[%s372 + $0xa8] sm:$0xff]
        %v526 = vld [vmem:[%s372 + $0xb0] sm:$0xff]
        %v527 = vld [vmem:[%s372 + $0xb8] sm:$0xff]
        %v528 = vld [vmem:[%s372 + $0xc0] sm:$0xff]
        %v529 = vld [vmem:[%s372 + $0xc8] sm:$0xff]
        %v530 = vld [vmem:[%s372 + $0xd0] sm:$0xff]
        %v531 = vld [vmem:[%s372 + $0xd8] sm:$0xff]
        %v532 = vld [vmem:[%s372 + $0xe0] sm:$0xff]
        %v533 = vld [vmem:[%s372 + $0xe8] sm:$0xff]
        %v534 = vld [vmem:[%s372 + $0xf0] sm:$0xff]
        %v535 = vld [vmem:[%s372 + $0xf8] sm:$0xff]
        %v536 = vld [vmem:[%s416] sm:$0xf]
        %v537 = vld [vmem:[%s416 + $0x4] sm:$0xf]
        %v538 = vld [vmem:[%s416 + $0x8] sm:$0xf]
        %v539 = vld [vmem:[%s416 + $0xc] sm:$0xf]
        %v540 = vld [vmem:[%s416 + $0x10] sm:$0xf]
        %v541 = vld [vmem:[%s416 + $0x14] sm:$0xf]
        %v542 = vld [vmem:[%s416 + $0x18] sm:$0xf]
        %v543 = vld [vmem:[%s416 + $0x1c] sm:$0xf]
        %v544 = vld [vmem:[%s416 + $0x20] sm:$0xf]
        %v545 = vld [vmem:[%s416 + $0x24] sm:$0xf]
        %v546 = vld [vmem:[%s416 + $0x28] sm:$0xf]
        %v547 = vld [vmem:[%s416 + $0x2c] sm:$0xf]
        %v548 = vld [vmem:[%s416 + $0x30] sm:$0xf]
        %v549 = vld [vmem:[%s416 + $0x34] sm:$0xf]
        %v550 = vld [vmem:[%s416 + $0x38] sm:$0xf]
        %v551 = vld [vmem:[%s416 + $0x3c] sm:$0xf]
        %v552 = vld [vmem:[%s416 + $0x40] sm:$0xf]
        %v553 = vld [vmem:[%s416 + $0x44] sm:$0xf]
        %v554 = vld [vmem:[%s416 + $0x48] sm:$0xf]
        %v555 = vld [vmem:[%s416 + $0x4c] sm:$0xf]
        %v556 = vld [vmem:[%s416 + $0x50] sm:$0xf]
        %v557 = vld [vmem:[%s416 + $0x54] sm:$0xf]
        %v558 = vld [vmem:[%s416 + $0x58] sm:$0xf]
        %v559 = vld [vmem:[%s416 + $0x5c] sm:$0xf]
        %v560 = vld [vmem:[%s416 + $0x60] sm:$0xf]
        %v561 = vld [vmem:[%s416 + $0x64] sm:$0xf]
        %v562 = vld [vmem:[%s416 + $0x68] sm:$0xf]
        %v563 = vld [vmem:[%s416 + $0x6c] sm:$0xf]
        %v564 = vld [vmem:[%s416 + $0x70] sm:$0xf]
        %v565 = vld [vmem:[%s416 + $0x74] sm:$0xf]
        %v566 = vld [vmem:[%s416 + $0x78] sm:$0xf]
        %v567 = vld [vmem:[%s416 + $0x7c] sm:$0xf]
        %v600 = vunpack.c.l.b16 %v504
        %v601 = vunpack.c.h.b16 %v504
        %v602 = vunpack.c.l.b16 %v505
        %v603 = vunpack.c.h.b16 %v505
        %v604 = vunpack.c.l.b16 %v506
        %v605 = vunpack.c.h.b16 %v506
        %v606 = vunpack.c.l.b16 %v507
        %v607 = vunpack.c.h.b16 %v507
        %v608 = vunpack.c.l.b16 %v508
        %v609 = vunpack.c.h.b16 %v508
        %v610 = vunpack.c.l.b16 %v509
        %v611 = vunpack.c.h.b16 %v509
        %v612 = vunpack.c.l.b16 %v510
        %v613 = vunpack.c.h.b16 %v510
        %v614 = vunpack.c.l.b16 %v511
        %v615 = vunpack.c.h.b16 %v511
        %v616 = vunpack.c.l.b16 %v512
        %v617 = vunpack.c.h.b16 %v512
        %v618 = vunpack.c.l.b16 %v513
        %v619 = vunpack.c.h.b16 %v513
        %v620 = vunpack.c.l.b16 %v514
        %v621 = vunpack.c.h.b16 %v514
        %v622 = vunpack.c.l.b16 %v515
        %v623 = vunpack.c.h.b16 %v515
        %v624 = vunpack.c.l.b16 %v516
        %v625 = vunpack.c.h.b16 %v516
        %v626 = vunpack.c.l.b16 %v517
        %v627 = vunpack.c.h.b16 %v517
        %v628 = vunpack.c.l.b16 %v518
        %v629 = vunpack.c.h.b16 %v518
        %v630 = vunpack.c.l.b16 %v519
        %v631 = vunpack.c.h.b16 %v519
        %v632 = vunpack.c.l.b16 %v520
        %v633 = vunpack.c.h.b16 %v520
        %v634 = vunpack.c.l.b16 %v521
        %v635 = vunpack.c.h.b16 %v521
        %v636 = vunpack.c.l.b16 %v522
        %v637 = vunpack.c.h.b16 %v522
        %v638 = vunpack.c.l.b16 %v523
        %v639 = vunpack.c.h.b16 %v523
        %v640 = vunpack.c.l.b16 %v524
        %v641 = vunpack.c.h.b16 %v524
        %v642 = vunpack.c.l.b16 %v525
        %v643 = vunpack.c.h.b16 %v525
        %v644 = vunpack.c.l.b16 %v526
        %v645 = vunpack.c.h.b16 %v526
        %v646 = vunpack.c.l.b16 %v527
        %v647 = vunpack.c.h.b16 %v527
        %v648 = vunpack.c.l.b16 %v528
        %v649 = vunpack.c.h.b16 %v528
        %v650 = vunpack.c.l.b16 %v529
        %v651 = vunpack.c.h.b16 %v529
        %v652 = vunpack.c.l.b16 %v530
        %v653 = vunpack.c.h.b16 %v530
        %v654 = vunpack.c.l.b16 %v531
        %v655 = vunpack.c.h.b16 %v531
        %v656 = vunpack.c.l.b16 %v532
        %v657 = vunpack.c.h.b16 %v532
        %v658 = vunpack.c.l.b16 %v533
        %v659 = vunpack.c.h.b16 %v533
        %v660 = vunpack.c.l.b16 %v534
        %v661 = vunpack.c.h.b16 %v534
        %v662 = vunpack.c.l.b16 %v535
        %v663 = vunpack.c.h.b16 %v535
        %v664 = vpack.c.b16 %v602, %v600
        %v665 = vpack.c.b16 %v603, %v601
        %v666 = vpack.c.b16 %v606, %v604
        %v667 = vpack.c.b16 %v607, %v605
        %v668 = vpack.c.b16 %v610, %v608
        %v669 = vpack.c.b16 %v611, %v609
        %v670 = vpack.c.b16 %v614, %v612
        %v671 = vpack.c.b16 %v615, %v613
        %v672 = vpack.c.b16 %v618, %v616
        %v673 = vpack.c.b16 %v619, %v617
        %v674 = vpack.c.b16 %v622, %v620
        %v675 = vpack.c.b16 %v623, %v621
        %v676 = vpack.c.b16 %v626, %v624
        %v677 = vpack.c.b16 %v627, %v625
        %v678 = vpack.c.b16 %v630, %v628
        %v679 = vpack.c.b16 %v631, %v629
        %v680 = vpack.c.b16 %v634, %v632
        %v681 = vpack.c.b16 %v635, %v633
        %v682 = vpack.c.b16 %v638, %v636
        %v683 = vpack.c.b16 %v639, %v637
        %v684 = vpack.c.b16 %v642, %v640
        %v685 = vpack.c.b16 %v643, %v641
        %v686 = vpack.c.b16 %v646, %v644
        %v687 = vpack.c.b16 %v647, %v645
        %v688 = vpack.c.b16 %v650, %v648
        %v689 = vpack.c.b16 %v651, %v649
        %v690 = vpack.c.b16 %v654, %v652
        %v691 = vpack.c.b16 %v655, %v653
        %v692 = vpack.c.b16 %v658, %v656
        %v693 = vpack.c.b16 %v659, %v657
        %v694 = vpack.c.b16 %v662, %v660
        %v695 = vpack.c.b16 %v663, %v661
        %v760 = vunpack.c.l.b16 %v536
        %v761 = vunpack.c.l.b16 %v537
        %v762 = vunpack.c.l.b16 %v538
        %v763 = vunpack.c.l.b16 %v539
        %v764 = vunpack.c.l.b16 %v540
        %v765 = vunpack.c.l.b16 %v541
        %v766 = vunpack.c.l.b16 %v542
        %v767 = vunpack.c.l.b16 %v543
        %v768 = vunpack.c.l.b16 %v544
        %v769 = vunpack.c.l.b16 %v545
        %v770 = vunpack.c.l.b16 %v546
        %v771 = vunpack.c.l.b16 %v547
        %v772 = vunpack.c.l.b16 %v548
        %v773 = vunpack.c.l.b16 %v549
        %v774 = vunpack.c.l.b16 %v550
        %v775 = vunpack.c.l.b16 %v551
        %v776 = vunpack.c.l.b16 %v552
        %v777 = vunpack.c.l.b16 %v553
        %v778 = vunpack.c.l.b16 %v554
        %v779 = vunpack.c.l.b16 %v555
        %v780 = vunpack.c.l.b16 %v556
        %v781 = vunpack.c.l.b16 %v557
        %v782 = vunpack.c.l.b16 %v558
        %v783 = vunpack.c.l.b16 %v559
        %v784 = vunpack.c.l.b16 %v560
        %v785 = vunpack.c.l.b16 %v561
        %v786 = vunpack.c.l.b16 %v562
        %v787 = vunpack.c.l.b16 %v563
        %v788 = vunpack.c.l.b16 %v564
        %v789 = vunpack.c.l.b16 %v565
        %v790 = vunpack.c.l.b16 %v566
        %v791 = vunpack.c.l.b16 %v567
        %v792 = vpack.c.b16 %v761, %v760
        %v793 = vpack.c.b16 %v763, %v762
        %v794 = vpack.c.b16 %v765, %v764
        %v795 = vpack.c.b16 %v767, %v766
        %v796 = vpack.c.b16 %v769, %v768
        %v797 = vpack.c.b16 %v771, %v770
        %v798 = vpack.c.b16 %v773, %v772
        %v799 = vpack.c.b16 %v775, %v774
        %v800 = vpack.c.b16 %v777, %v776
        %v801 = vpack.c.b16 %v779, %v778
        %v802 = vpack.c.b16 %v781, %v780
        %v803 = vpack.c.b16 %v783, %v782
        %v804 = vpack.c.b16 %v785, %v784
        %v805 = vpack.c.b16 %v787, %v786
        %v806 = vpack.c.b16 %v789, %v788
        %v807 = vpack.c.b16 %v791, %v790
        %824 = vmatpush.bf16.msra.mxu0 %v799
        %825 = vmatpush.bf16.msra.mxu0 %v798
        %826 = vmatpush.bf16.msra.mxu0 %v797
        %827 = vmatpush.bf16.msra.mxu0 %v796
        %828 = vmatpush.bf16.msra.mxu0 %v795
        %829 = vmatpush.bf16.msra.mxu0 %v794
        %830 = vmatpush.bf16.msra.mxu0 %v793
        %831 = vmatpush.bf16.msra.mxu0 %v792
        %832 = vmatmul.bf16.gmra.mxu0 %v664
        %v833 = vpop.f32.mrf.mxu0
        %v834 = vadd.f32 0.0, %v833
        %v835 = vpop.f32.mrf.mxu0
        %v836 = vadd.f32 0.0, %v835
        %837 = vmatmul.bf16.gmra.mxu0 %v666
        %v838 = vpop.f32.mrf.mxu0
        %v839 = vadd.f32 0.0, %v838
        %v840 = vpop.f32.mrf.mxu0
        %v841 = vadd.f32 0.0, %v840
        %842 = vmatmul.bf16.gmra.mxu0 %v668
        %v843 = vpop.f32.mrf.mxu0
        %v844 = vadd.f32 0.0, %v843
        %v845 = vpop.f32.mrf.mxu0
        %v846 = vadd.f32 0.0, %v845
        %847 = vmatmul.bf16.gmra.mxu0 %v670
        %v848 = vpop.f32.mrf.mxu0
        %v849 = vadd.f32 0.0, %v848
        %v850 = vpop.f32.mrf.mxu0
        %v851 = vadd.f32 0.0, %v850
        %852 = vmatmul.bf16.gmra.mxu0 %v672
        %v853 = vpop.f32.mrf.mxu0
        %v854 = vadd.f32 0.0, %v853
        %v855 = vpop.f32.mrf.mxu0
        %v856 = vadd.f32 0.0, %v855
        %857 = vmatmul.bf16.gmra.mxu0 %v674
        %v858 = vpop.f32.mrf.mxu0
        %v859 = vadd.f32 0.0, %v858
        %v860 = vpop.f32.mrf.mxu0
        %v861 = vadd.f32 0.0, %v860
        %862 = vmatmul.bf16.gmra.mxu0 %v676
        %v863 = vpop.f32.mrf.mxu0
        %v864 = vadd.f32 0.0, %v863
        %v865 = vpop.f32.mrf.mxu0
        %v866 = vadd.f32 0.0, %v865
        %867 = vmatmul.bf16.gmra.mxu0 %v678
        %v868 = vpop.f32.mrf.mxu0
        %v869 = vadd.f32 0.0, %v868
        %v870 = vpop.f32.mrf.mxu0
        %v871 = vadd.f32 0.0, %v870
        %872 = vmatmul.bf16.gmra.mxu0 %v680
        %v873 = vpop.f32.mrf.mxu0
        %v874 = vadd.f32 0.0, %v873
        %v875 = vpop.f32.mrf.mxu0
        %v876 = vadd.f32 0.0, %v875
        %877 = vmatmul.bf16.gmra.mxu0 %v682
        %v878 = vpop.f32.mrf.mxu0
        %v879 = vadd.f32 0.0, %v878
        %v880 = vpop.f32.mrf.mxu0
        %v881 = vadd.f32 0.0, %v880
        %882 = vmatmul.bf16.gmra.mxu0 %v684
        %v883 = vpop.f32.mrf.mxu0
        %v884 = vadd.f32 0.0, %v883
        %v885 = vpop.f32.mrf.mxu0
        %v886 = vadd.f32 0.0, %v885
        %887 = vmatmul.bf16.gmra.mxu0 %v686
        %v888 = vpop.f32.mrf.mxu0
        %v889 = vadd.f32 0.0, %v888
        %v890 = vpop.f32.mrf.mxu0
        %v891 = vadd.f32 0.0, %v890
        %892 = vmatmul.bf16.gmra.mxu0 %v688
        %v893 = vpop.f32.mrf.mxu0
        %v894 = vadd.f32 0.0, %v893
        %v895 = vpop.f32.mrf.mxu0
        %v896 = vadd.f32 0.0, %v895
        %897 = vmatmul.bf16.gmra.mxu0 %v690
        %v898 = vpop.f32.mrf.mxu0
        %v899 = vadd.f32 0.0, %v898
        %v900 = vpop.f32.mrf.mxu0
        %v901 = vadd.f32 0.0, %v900
        %902 = vmatmul.bf16.gmra.mxu0 %v692
        %v903 = vpop.f32.mrf.mxu0
        %v904 = vadd.f32 0.0, %v903
        %v905 = vpop.f32.mrf.mxu0
        %v906 = vadd.f32 0.0, %v905
        %907 = vmatmul.bf16.gmra.mxu0 %v694
        %v908 = vpop.f32.mrf.mxu0
        %v909 = vadd.f32 0.0, %v908
        %v910 = vpop.f32.mrf.mxu0
        %v911 = vadd.f32 0.0, %v910
        %912 = vdwg.mxu0
        %913 = vmatpush.bf16.msra.mxu0 %v807
        %914 = vmatpush.bf16.msra.mxu0 %v806
        %915 = vmatpush.bf16.msra.mxu0 %v805
        %916 = vmatpush.bf16.msra.mxu0 %v804
        %917 = vmatpush.bf16.msra.mxu0 %v803
        %918 = vmatpush.bf16.msra.mxu0 %v802
        %919 = vmatpush.bf16.msra.mxu0 %v801
        %920 = vmatpush.bf16.msra.mxu0 %v800
        %921 = vmatmul.bf16.gmra.mxu0 %v665
        %v922 = vpop.f32.mrf.mxu0
        %v923 = vadd.f32 %v834, %v922
        %v924 = vpop.f32.mrf.mxu0
        %v925 = vadd.f32 %v836, %v924
        %926 = vmatmul.bf16.gmra.mxu0 %v667
        %v927 = vpop.f32.mrf.mxu0
        %v928 = vadd.f32 %v839, %v927
        %v929 = vpop.f32.mrf.mxu0
        %v930 = vadd.f32 %v841, %v929
        %931 = vmatmul.bf16.gmra.mxu0 %v669
        %v932 = vpop.f32.mrf.mxu0
        %v933 = vadd.f32 %v844, %v932
        %v934 = vpop.f32.mrf.mxu0
        %v935 = vadd.f32 %v846, %v934
        %936 = vmatmul.bf16.gmra.mxu0 %v671
        %v937 = vpop.f32.mrf.mxu0
        %v938 = vadd.f32 %v849, %v937
        %v939 = vpop.f32.mrf.mxu0
        %v940 = vadd.f32 %v851, %v939
        %941 = vmatmul.bf16.gmra.mxu0 %v673
        %v942 = vpop.f32.mrf.mxu0
        %v943 = vadd.f32 %v854, %v942
        %v944 = vpop.f32.mrf.mxu0
        %v945 = vadd.f32 %v856, %v944
        %946 = vmatmul.bf16.gmra.mxu0 %v675
        %v947 = vpop.f32.mrf.mxu0
        %v948 = vadd.f32 %v859, %v947
        %v949 = vpop.f32.mrf.mxu0
        %v950 = vadd.f32 %v861, %v949
        %951 = vmatmul.bf16.gmra.mxu0 %v677
        %v952 = vpop.f32.mrf.mxu0
        %v953 = vadd.f32 %v864, %v952
        %v954 = vpop.f32.mrf.mxu0
        %v955 = vadd.f32 %v866, %v954
        %956 = vmatmul.bf16.gmra.mxu0 %v679
        %v957 = vpop.f32.mrf.mxu0
        %v958 = vadd.f32 %v869, %v957
        %v959 = vpop.f32.mrf.mxu0
        %v960 = vadd.f32 %v871, %v959
        %961 = vmatmul.bf16.gmra.mxu0 %v681
        %v962 = vpop.f32.mrf.mxu0
        %v963 = vadd.f32 %v874, %v962
        %v964 = vpop.f32.mrf.mxu0
        %v965 = vadd.f32 %v876, %v964
        %966 = vmatmul.bf16.gmra.mxu0 %v683
        %v967 = vpop.f32.mrf.mxu0
        %v968 = vadd.f32 %v879, %v967
        %v969 = vpop.f32.mrf.mxu0
        %v970 = vadd.f32 %v881, %v969
        %971 = vmatmul.bf16.gmra.mxu0 %v685
        %v972 = vpop.f32.mrf.mxu0
        %v973 = vadd.f32 %v884, %v972
        %v974 = vpop.f32.mrf.mxu0
        %v975 = vadd.f32 %v886, %v974
        %976 = vmatmul.bf16.gmra.mxu0 %v687
        %v977 = vpop.f32.mrf.mxu0
        %v978 = vadd.f32 %v889, %v977
        %v979 = vpop.f32.mrf.mxu0
        %v980 = vadd.f32 %v891, %v979
        %981 = vmatmul.bf16.gmra.mxu0 %v689
        %v982 = vpop.f32.mrf.mxu0
        %v983 = vadd.f32 %v894, %v982
        %v984 = vpop.f32.mrf.mxu0
        %v985 = vadd.f32 %v896, %v984
        %986 = vmatmul.bf16.gmra.mxu0 %v691
        %v987 = vpop.f32.mrf.mxu0
        %v988 = vadd.f32 %v899, %v987
        %v989 = vpop.f32.mrf.mxu0
        %v990 = vadd.f32 %v901, %v989
        %991 = vmatmul.bf16.gmra.mxu0 %v693
        %v992 = vpop.f32.mrf.mxu0
        %v993 = vadd.f32 %v904, %v992
        %v994 = vpop.f32.mrf.mxu0
        %v995 = vadd.f32 %v906, %v994
        %996 = vmatmul.bf16.gmra.mxu0 %v695
        %v997 = vpop.f32.mrf.mxu0
        %v998 = vadd.f32 %v909, %v997
        %v999 = vpop.f32.mrf.mxu0
        %v1000 = vadd.f32 %v911, %v999
        %1001 = vdwg.mxu0
        %v1002 = vadd.f32 %v472, %v923
        %v1003 = vadd.f32 %v473, %v925
        %v1004 = vadd.f32 %v474, %v928
        %v1005 = vadd.f32 %v475, %v930
        %v1006 = vadd.f32 %v476, %v933
        %v1007 = vadd.f32 %v477, %v935
        %v1008 = vadd.f32 %v478, %v938
        %v1009 = vadd.f32 %v479, %v940
        %v1010 = vadd.f32 %v480, %v943
        %v1011 = vadd.f32 %v481, %v945
        %v1012 = vadd.f32 %v482, %v948
        %v1013 = vadd.f32 %v483, %v950
        %v1014 = vadd.f32 %v484, %v953
        %v1015 = vadd.f32 %v485, %v955
        %v1016 = vadd.f32 %v486, %v958
        %v1017 = vadd.f32 %v487, %v960
        %v1018 = vadd.f32 %v488, %v963
        %v1019 = vadd.f32 %v489, %v965
        %v1020 = vadd.f32 %v490, %v968
        %v1021 = vadd.f32 %v491, %v970
        %v1022 = vadd.f32 %v492, %v973
        %v1023 = vadd.f32 %v493, %v975
        %v1024 = vadd.f32 %v494, %v978
        %v1025 = vadd.f32 %v495, %v980
        %v1026 = vadd.f32 %v496, %v983
        %v1027 = vadd.f32 %v497, %v985
        %v1028 = vadd.f32 %v498, %v988
        %v1029 = vadd.f32 %v499, %v990
        %v1030 = vadd.f32 %v500, %v993
        %v1031 = vadd.f32 %v501, %v995
        %v1032 = vadd.f32 %v502, %v998
        %v1033 = vadd.f32 %v503, %v1000
        %1034 = vst [vmem:[#allocation2] sm:$0xff] %v1002
        %1035 = vst [vmem:[#allocation2 + $0x8] sm:$0xff] %v1003
        %1036 = vst [vmem:[#allocation2 + $0x10] sm:$0xff] %v1004
        %1037 = vst [vmem:[#allocation2 + $0x18] sm:$0xff] %v1005
        %1038 = vst [vmem:[#allocation2 + $0x20] sm:$0xff] %v1006
        %1039 = vst [vmem:[#allocation2 + $0x28] sm:$0xff] %v1007
        %1040 = vst [vmem:[#allocation2 + $0x30] sm:$0xff] %v1008
        %1041 = vst [vmem:[#allocation2 + $0x38] sm:$0xff] %v1009
        %1042 = vst [vmem:[#allocation2 + $0x40] sm:$0xff] %v1010
        %1043 = vst [vmem:[#allocation2 + $0x48] sm:$0xff] %v1011
        %1044 = vst [vmem:[#allocation2 + $0x50] sm:$0xff] %v1012
        %1045 = vst [vmem:[#allocation2 + $0x58] sm:$0xff] %v1013
        %1046 = vst [vmem:[#allocation2 + $0x60] sm:$0xff] %v1014
        %1047 = vst [vmem:[#allocation2 + $0x68] sm:$0xff] %v1015
        %1048 = vst [vmem:[#allocation2 + $0x70] sm:$0xff] %v1016
        %1049 = vst [vmem:[#allocation2 + $0x78] sm:$0xff] %v1017
        %1050 = vst [vmem:[#allocation2 + $0x80] sm:$0xff] %v1018
        %1051 = vst [vmem:[#allocation2 + $0x88] sm:$0xff] %v1019
        %1052 = vst [vmem:[#allocation2 + $0x90] sm:$0xff] %v1020
        %1053 = vst [vmem:[#allocation2 + $0x98] sm:$0xff] %v1021
        %1054 = vst [vmem:[#allocation2 + $0xa0] sm:$0xff] %v1022
        %1055 = vst [vmem:[#allocation2 + $0xa8] sm:$0xff] %v1023
        %1056 = vst [vmem:[#allocation2 + $0xb0] sm:$0xff] %v1024
        %1057 = vst [vmem:[#allocation2 + $0xb8] sm:$0xff] %v1025
        %1058 = vst [vmem:[#allocation2 + $0xc0] sm:$0xff] %v1026
        %1059 = vst [vmem:[#allocation2 + $0xc8] sm:$0xff] %v1027
        %1060 = vst [vmem:[#allocation2 + $0xd0] sm:$0xff] %v1028
        %1061 = vst [vmem:[#allocation2 + $0xd8] sm:$0xff] %v1029
        %1062 = vst [vmem:[#allocation2 + $0xe0] sm:$0xff] %v1030
        %1063 = vst [vmem:[#allocation2 + $0xe8] sm:$0xff] %v1031
        %1064 = vst [vmem:[#allocation2 + $0xf0] sm:$0xff] %v1032
        %1065 = vst [vmem:[#allocation2 + $0xf8] sm:$0xff] %v1033
        %p1066 = scmp.eq.s32.totalorder %s21, 1
        // Predicated region
        $region75: #{lame_sage.11} parent=65 // pred_check
          %p1067 = pneg %p1066
        $region76: #{lame_sage.11} parent=65 // pred_check_branch
          %1069 = sbr.rel (%p1067) target = $region78
        $region77: #{lame_sage.11} parent=65 // pred_region
          %v1070 = vld [vmem:[#allocation2] sm:$0xff]
          %v1071 = vld [vmem:[#allocation2 + $0x8] sm:$0xff]
          %v1072 = vld [vmem:[#allocation2 + $0x10] sm:$0xff]
          %v1073 = vld [vmem:[#allocation2 + $0x18] sm:$0xff]
          %v1074 = vld [vmem:[#allocation2 + $0x20] sm:$0xff]
          %v1075 = vld [vmem:[#allocation2 + $0x28] sm:$0xff]
          %v1076 = vld [vmem:[#allocation2 + $0x30] sm:$0xff]
          %v1077 = vld [vmem:[#allocation2 + $0x38] sm:$0xff]
          %v1078 = vld [vmem:[#allocation2 + $0x40] sm:$0xff]
          %v1079 = vld [vmem:[#allocation2 + $0x48] sm:$0xff]
          %v1080 = vld [vmem:[#allocation2 + $0x50] sm:$0xff]
          %v1081 = vld [vmem:[#allocation2 + $0x58] sm:$0xff]
          %v1082 = vld [vmem:[#allocation2 + $0x60] sm:$0xff]
          %v1083 = vld [vmem:[#allocation2 + $0x68] sm:$0xff]
          %v1084 = vld [vmem:[#allocation2 + $0x70] sm:$0xff]
          %v1085 = vld [vmem:[#allocation2 + $0x78] sm:$0xff]
          %v1086 = vld [vmem:[#allocation2 + $0x80] sm:$0xff]
          %v1087 = vld [vmem:[#allocation2 + $0x88] sm:$0xff]
          %v1088 = vld [vmem:[#allocation2 + $0x90] sm:$0xff]
          %v1089 = vld [vmem:[#allocation2 + $0x98] sm:$0xff]
          %v1090 = vld [vmem:[#allocation2 + $0xa0] sm:$0xff]
          %v1091 = vld [vmem:[#allocation2 + $0xa8] sm:$0xff]
          %v1092 = vld [vmem:[#allocation2 + $0xb0] sm:$0xff]
          %v1093 = vld [vmem:[#allocation2 + $0xb8] sm:$0xff]
          %v1094 = vld [vmem:[#allocation2 + $0xc0] sm:$0xff]
          %v1095 = vld [vmem:[#allocation2 + $0xc8] sm:$0xff]
          %v1096 = vld [vmem:[#allocation2 + $0xd0] sm:$0xff]
          %v1097 = vld [vmem:[#allocation2 + $0xd8] sm:$0xff]
          %v1098 = vld [vmem:[#allocation2 + $0xe0] sm:$0xff]
          %v1099 = vld [vmem:[#allocation2 + $0xe8] sm:$0xff]
          %v1100 = vld [vmem:[#allocation2 + $0xf0] sm:$0xff]
          %v1101 = vld [vmem:[#allocation2 + $0xf8] sm:$0xff]
          %v1102 = vld [vmem:[%s422] sm:$0xff]
          %v1103 = vld [vmem:[%s422 + $0x8] sm:$0xff]
          %v1104 = vld [vmem:[%s422 + $0x10] sm:$0xff]
          %v1105 = vld [vmem:[%s422 + $0x18] sm:$0xff]
          %v1106 = vld [vmem:[%s422 + $0x20] sm:$0xff]
          %v1107 = vld [vmem:[%s422 + $0x28] sm:$0xff]
          %v1108 = vld [vmem:[%s422 + $0x30] sm:$0xff]
          %v1109 = vld [vmem:[%s422 + $0x38] sm:$0xff]
          %v1110 = vld [vmem:[%s422 + $0x40] sm:$0xff]
          %v1111 = vld [vmem:[%s422 + $0x48] sm:$0xff]
          %v1112 = vld [vmem:[%s422 + $0x50] sm:$0xff]
          %v1113 = vld [vmem:[%s422 + $0x58] sm:$0xff]
          %v1114 = vld [vmem:[%s422 + $0x60] sm:$0xff]
          %v1115 = vld [vmem:[%s422 + $0x68] sm:$0xff]
          %v1116 = vld [vmem:[%s422 + $0x70] sm:$0xff]
          %v1117 = vld [vmem:[%s422 + $0x78] sm:$0xff]
          %v1118 = vld [vmem:[%s422 + $0x80] sm:$0xff]
          %v1119 = vld [vmem:[%s422 + $0x88] sm:$0xff]
          %v1120 = vld [vmem:[%s422 + $0x90] sm:$0xff]
          %v1121 = vld [vmem:[%s422 + $0x98] sm:$0xff]
          %v1122 = vld [vmem:[%s422 + $0xa0] sm:$0xff]
          %v1123 = vld [vmem:[%s422 + $0xa8] sm:$0xff]
          %v1124 = vld [vmem:[%s422 + $0xb0] sm:$0xff]
          %v1125 = vld [vmem:[%s422 + $0xb8] sm:$0xff]
          %v1126 = vld [vmem:[%s422 + $0xc0] sm:$0xff]
          %v1127 = vld [vmem:[%s422 + $0xc8] sm:$0xff]
          %v1128 = vld [vmem:[%s422 + $0xd0] sm:$0xff]
          %v1129 = vld [vmem:[%s422 + $0xd8] sm:$0xff]
          %v1130 = vld [vmem:[%s422 + $0xe0] sm:$0xff]
          %v1131 = vld [vmem:[%s422 + $0xe8] sm:$0xff]
          %v1132 = vld [vmem:[%s422 + $0xf0] sm:$0xff]
          %v1133 = vld [vmem:[%s422 + $0xf8] sm:$0xff]
          %v1134 = vadd.f32 %v1070, %v1102
          %v1135 = vadd.f32 %v1071, %v1103
          %v1136 = vadd.f32 %v1072, %v1104
          %v1137 = vadd.f32 %v1073, %v1105
          %v1138 = vadd.f32 %v1074, %v1106
          %v1139 = vadd.f32 %v1075, %v1107
          %v1140 = vadd.f32 %v1076, %v1108
          %v1141 = vadd.f32 %v1077, %v1109
          %v1142 = vadd.f32 %v1078, %v1110
          %v1143 = vadd.f32 %v1079, %v1111
          %v1144 = vadd.f32 %v1080, %v1112
          %v1145 = vadd.f32 %v1081, %v1113
          %v1146 = vadd.f32 %v1082, %v1114
          %v1147 = vadd.f32 %v1083, %v1115
          %v1148 = vadd.f32 %v1084, %v1116
          %v1149 = vadd.f32 %v1085, %v1117
          %v1150 = vadd.f32 %v1086, %v1118
          %v1151 = vadd.f32 %v1087, %v1119
          %v1152 = vadd.f32 %v1088, %v1120
          %v1153 = vadd.f32 %v1089, %v1121
          %v1154 = vadd.f32 %v1090, %v1122
          %v1155 = vadd.f32 %v1091, %v1123
          %v1156 = vadd.f32 %v1092, %v1124
          %v1157 = vadd.f32 %v1093, %v1125
          %v1158 = vadd.f32 %v1094, %v1126
          %v1159 = vadd.f32 %v1095, %v1127
          %v1160 = vadd.f32 %v1096, %v1128
          %v1161 = vadd.f32 %v1097, %v1129
          %v1162 = vadd.f32 %v1098, %v1130
          %v1163 = vadd.f32 %v1099, %v1131
          %v1164 = vadd.f32 %v1100, %v1132
          %v1165 = vadd.f32 %v1101, %v1133
          %vm1166 = vcmp.gt.f32.partialorder %v1134, 0.0
          %vm1167 = vcmp.gt.f32.partialorder %v1135, 0.0
          %vm1168 = vcmp.gt.f32.partialorder %v1136, 0.0
          %vm1169 = vcmp.gt.f32.partialorder %v1137, 0.0
          %vm1170 = vcmp.gt.f32.partialorder %v1138, 0.0
          %vm1171 = vcmp.gt.f32.partialorder %v1139, 0.0
          %vm1172 = vcmp.gt.f32.partialorder %v1140, 0.0
          %vm1173 = vcmp.gt.f32.partialorder %v1141, 0.0
          %vm1174 = vcmp.gt.f32.partialorder %v1142, 0.0
          %vm1175 = vcmp.gt.f32.partialorder %v1143, 0.0
          %vm1176 = vcmp.gt.f32.partialorder %v1144, 0.0
          %vm1177 = vcmp.gt.f32.partialorder %v1145, 0.0
          %vm1178 = vcmp.gt.f32.partialorder %v1146, 0.0
          %vm1179 = vcmp.gt.f32.partialorder %v1147, 0.0
          %vm1180 = vcmp.gt.f32.partialorder %v1148, 0.0
          %vm1181 = vcmp.gt.f32.partialorder %v1149, 0.0
          %vm1182 = vcmp.gt.f32.partialorder %v1150, 0.0
          %vm1183 = vcmp.gt.f32.partialorder %v1151, 0.0
          %vm1184 = vcmp.gt.f32.partialorder %v1152, 0.0
          %vm1185 = vcmp.gt.f32.partialorder %v1153, 0.0
          %vm1186 = vcmp.gt.f32.partialorder %v1154, 0.0
          %vm1187 = vcmp.gt.f32.partialorder %v1155, 0.0
          %vm1188 = vcmp.gt.f32.partialorder %v1156, 0.0
          %vm1189 = vcmp.gt.f32.partialorder %v1157, 0.0
          %vm1190 = vcmp.gt.f32.partialorder %v1158, 0.0
          %vm1191 = vcmp.gt.f32.partialorder %v1159, 0.0
          %vm1192 = vcmp.gt.f32.partialorder %v1160, 0.0
          %vm1193 = vcmp.gt.f32.partialorder %v1161, 0.0
          %vm1194 = vcmp.gt.f32.partialorder %v1162, 0.0
          %vm1195 = vcmp.gt.f32.partialorder %v1163, 0.0
          %vm1196 = vcmp.gt.f32.partialorder %v1164, 0.0
          %vm1197 = vcmp.gt.f32.partialorder %v1165, 0.0
          %v1198 = vmin.f32 %v1134, 0.0
          %v1199 = vmin.f32 %v1135, 0.0
          %v1200 = vmin.f32 %v1136, 0.0
          %v1201 = vmin.f32 %v1137, 0.0
          %v1202 = vmin.f32 %v1138, 0.0
          %v1203 = vmin.f32 %v1139, 0.0
          %v1204 = vmin.f32 %v1140, 0.0
          %v1205 = vmin.f32 %v1141, 0.0
          %v1206 = vmin.f32 %v1142, 0.0
          %v1207 = vmin.f32 %v1143, 0.0
          %v1208 = vmin.f32 %v1144, 0.0
          %v1209 = vmin.f32 %v1145, 0.0
          %v1210 = vmin.f32 %v1146, 0.0
          %v1211 = vmin.f32 %v1147, 0.0
          %v1212 = vmin.f32 %v1148, 0.0
          %v1213 = vmin.f32 %v1149, 0.0
          %v1214 = vmin.f32 %v1150, 0.0
          %v1215 = vmin.f32 %v1151, 0.0
          %v1216 = vmin.f32 %v1152, 0.0
          %v1217 = vmin.f32 %v1153, 0.0
          %v1218 = vmin.f32 %v1154, 0.0
          %v1219 = vmin.f32 %v1155, 0.0
          %v1220 = vmin.f32 %v1156, 0.0
          %v1221 = vmin.f32 %v1157, 0.0
          %v1222 = vmin.f32 %v1158, 0.0
          %v1223 = vmin.f32 %v1159, 0.0
          %v1224 = vmin.f32 %v1160, 0.0
          %v1225 = vmin.f32 %v1161, 0.0
          %v1226 = vmin.f32 %v1162, 0.0
          %v1227 = vmin.f32 %v1163, 0.0
          %v1228 = vmin.f32 %v1164, 0.0
          %v1229 = vmin.f32 %v1165, 0.0
          %v1230 = vmul.f32 %v1198, 1.442695
          %v1231 = vpow.pop %v1230
          %v1232 = vmul.f32 %v1199, 1.442695
          %v1233 = vpow.pop %v1232
          %v1234 = vmul.f32 %v1200, 1.442695
          %v1235 = vpow.pop %v1234
          %v1236 = vmul.f32 %v1201, 1.442695
          %v1237 = vpow.pop %v1236
          %v1238 = vmul.f32 %v1202, 1.442695
          %v1239 = vpow.pop %v1238
          %v1240 = vmul.f32 %v1203, 1.442695
          %v1241 = vpow.pop %v1240
          %v1242 = vmul.f32 %v1204, 1.442695
          %v1243 = vpow.pop %v1242
          %v1244 = vmul.f32 %v1205, 1.442695
          %v1245 = vpow.pop %v1244
          %v1246 = vmul.f32 %v1206, 1.442695
          %v1247 = vpow.pop %v1246
          %v1248 = vmul.f32 %v1207, 1.442695
          %v1249 = vpow.pop %v1248
          %v1250 = vmul.f32 %v1208, 1.442695
          %v1251 = vpow.pop %v1250
          %v1252 = vmul.f32 %v1209, 1.442695
          %v1253 = vpow.pop %v1252
          %v1254 = vmul.f32 %v1210, 1.442695
          %v1255 = vpow.pop %v1254
          %v1256 = vmul.f32 %v1211, 1.442695
          %v1257 = vpow.pop %v1256
          %v1258 = vmul.f32 %v1212, 1.442695
          %v1259 = vpow.pop %v1258
          %v1260 = vmul.f32 %v1213, 1.442695
          %v1261 = vpow.pop %v1260
          %v1262 = vmul.f32 %v1214, 1.442695
          %v1263 = vpow.pop %v1262
          %v1264 = vmul.f32 %v1215, 1.442695
          %v1265 = vpow.pop %v1264
          %v1266 = vmul.f32 %v1216, 1.442695
          %v1267 = vpow.pop %v1266
          %v1268 = vmul.f32 %v1217, 1.442695
          %v1269 = vpow.pop %v1268
          %v1270 = vmul.f32 %v1218, 1.442695
          %v1271 = vpow.pop %v1270
          %v1272 = vmul.f32 %v1219, 1.442695
          %v1273 = vpow.pop %v1272
          %v1274 = vmul.f32 %v1220, 1.442695
          %v1275 = vpow.pop %v1274
          %v1276 = vmul.f32 %v1221, 1.442695
          %v1277 = vpow.pop %v1276
          %v1278 = vmul.f32 %v1222, 1.442695
          %v1279 = vpow.pop %v1278
          %v1280 = vmul.f32 %v1223, 1.442695
          %v1281 = vpow.pop %v1280
          %v1282 = vmul.f32 %v1224, 1.442695
          %v1283 = vpow.pop %v1282
          %v1284 = vmul.f32 %v1225, 1.442695
          %v1285 = vpow.pop %v1284
          %v1286 = vmul.f32 %v1226, 1.442695
          %v1287 = vpow.pop %v1286
          %v1288 = vmul.f32 %v1227, 1.442695
          %v1289 = vpow.pop %v1288
          %v1290 = vmul.f32 %v1228, 1.442695
          %v1291 = vpow.pop %v1290
          %v1292 = vmul.f32 %v1229, 1.442695
          %v1293 = vpow.pop %v1292
          %v1294 = vsub.f32 %v1231, 1.0
          %v1295 = vsub.f32 %v1233, 1.0
          %v1296 = vsub.f32 %v1235, 1.0
          %v1297 = vsub.f32 %v1237, 1.0
          %v1298 = vsub.f32 %v1239, 1.0
          %v1299 = vsub.f32 %v1241, 1.0
          %v1300 = vsub.f32 %v1243, 1.0
          %v1301 = vsub.f32 %v1245, 1.0
          %v1302 = vsub.f32 %v1247, 1.0
          %v1303 = vsub.f32 %v1249, 1.0
          %v1304 = vsub.f32 %v1251, 1.0
          %v1305 = vsub.f32 %v1253, 1.0
          %v1306 = vsub.f32 %v1255, 1.0
          %v1307 = vsub.f32 %v1257, 1.0
          %v1308 = vsub.f32 %v1259, 1.0
          %v1309 = vsub.f32 %v1261, 1.0
          %v1310 = vsub.f32 %v1263, 1.0
          %v1311 = vsub.f32 %v1265, 1.0
          %v1312 = vsub.f32 %v1267, 1.0
          %v1313 = vsub.f32 %v1269, 1.0
          %v1314 = vsub.f32 %v1271, 1.0
          %v1315 = vsub.f32 %v1273, 1.0
          %v1316 = vsub.f32 %v1275, 1.0
          %v1317 = vsub.f32 %v1277, 1.0
          %v1318 = vsub.f32 %v1279, 1.0
          %v1319 = vsub.f32 %v1281, 1.0
          %v1320 = vsub.f32 %v1283, 1.0
          %v1321 = vsub.f32 %v1285, 1.0
          %v1322 = vsub.f32 %v1287, 1.0
          %v1323 = vsub.f32 %v1289, 1.0
          %v1324 = vsub.f32 %v1291, 1.0
          %v1325 = vsub.f32 %v1293, 1.0
          %v1326 = vsel %vm1166, %v1134, %v1294
          %v1327 = vsel %vm1167, %v1135, %v1295
          %v1328 = vsel %vm1168, %v1136, %v1296
          %v1329 = vsel %vm1169, %v1137, %v1297
          %v1330 = vsel %vm1170, %v1138, %v1298
          %v1331 = vsel %vm1171, %v1139, %v1299
          %v1332 = vsel %vm1172, %v1140, %v1300
          %v1333 = vsel %vm1173, %v1141, %v1301
          %v1334 = vsel %vm1174, %v1142, %v1302
          %v1335 = vsel %vm1175, %v1143, %v1303
          %v1336 = vsel %vm1176, %v1144, %v1304
          %v1337 = vsel %vm1177, %v1145, %v1305
          %v1338 = vsel %vm1178, %v1146, %v1306
          %v1339 = vsel %vm1179, %v1147, %v1307
          %v1340 = vsel %vm1180, %v1148, %v1308
          %v1341 = vsel %vm1181, %v1149, %v1309
          %v1342 = vsel %vm1182, %v1150, %v1310
          %v1343 = vsel %vm1183, %v1151, %v1311
          %v1344 = vsel %vm1184, %v1152, %v1312
          %v1345 = vsel %vm1185, %v1153, %v1313
          %v1346 = vsel %vm1186, %v1154, %v1314
          %v1347 = vsel %vm1187, %v1155, %v1315
          %v1348 = vsel %vm1188, %v1156, %v1316
          %v1349 = vsel %vm1189, %v1157, %v1317
          %v1350 = vsel %vm1190, %v1158, %v1318
          %v1351 = vsel %vm1191, %v1159, %v1319
          %v1352 = vsel %vm1192, %v1160, %v1320
          %v1353 = vsel %vm1193, %v1161, %v1321
          %v1354 = vsel %vm1194, %v1162, %v1322
          %v1355 = vsel %vm1195, %v1163, %v1323
          %v1356 = vsel %vm1196, %v1164, %v1324
          %v1357 = vsel %vm1197, %v1165, %v1325
          %1358 = vst [vmem:[%s428] sm:$0xff] %v1326
          %1359 = vst [vmem:[%s428 + $0x8] sm:$0xff] %v1327
          %1360 = vst [vmem:[%s428 + $0x10] sm:$0xff] %v1328
          %1361 = vst [vmem:[%s428 + $0x18] sm:$0xff] %v1329
          %1362 = vst [vmem:[%s428 + $0x20] sm:$0xff] %v1330
          %1363 = vst [vmem:[%s428 + $0x28] sm:$0xff] %v1331
          %1364 = vst [vmem:[%s428 + $0x30] sm:$0xff] %v1332
          %1365 = vst [vmem:[%s428 + $0x38] sm:$0xff] %v1333
          %1366 = vst [vmem:[%s428 + $0x40] sm:$0xff] %v1334
          %1367 = vst [vmem:[%s428 + $0x48] sm:$0xff] %v1335
          %1368 = vst [vmem:[%s428 + $0x50] sm:$0xff] %v1336
          %1369 = vst [vmem:[%s428 + $0x58] sm:$0xff] %v1337
          %1370 = vst [vmem:[%s428 + $0x60] sm:$0xff] %v1338
          %1371 = vst [vmem:[%s428 + $0x68] sm:$0xff] %v1339
          %1372 = vst [vmem:[%s428 + $0x70] sm:$0xff] %v1340
          %1373 = vst [vmem:[%s428 + $0x78] sm:$0xff] %v1341
          %1374 = vst [vmem:[%s428 + $0x80] sm:$0xff] %v1342
          %1375 = vst [vmem:[%s428 + $0x88] sm:$0xff] %v1343
          %1376 = vst [vmem:[%s428 + $0x90] sm:$0xff] %v1344
          %1377 = vst [vmem:[%s428 + $0x98] sm:$0xff] %v1345
          %1378 = vst [vmem:[%s428 + $0xa0] sm:$0xff] %v1346
          %1379 = vst [vmem:[%s428 + $0xa8] sm:$0xff] %v1347
          %1380 = vst [vmem:[%s428 + $0xb0] sm:$0xff] %v1348
          %1381 = vst [vmem:[%s428 + $0xb8] sm:$0xff] %v1349
          %1382 = vst [vmem:[%s428 + $0xc0] sm:$0xff] %v1350
          %1383 = vst [vmem:[%s428 + $0xc8] sm:$0xff] %v1351
          %1384 = vst [vmem:[%s428 + $0xd0] sm:$0xff] %v1352
          %1385 = vst [vmem:[%s428 + $0xd8] sm:$0xff] %v1353
          %1386 = vst [vmem:[%s428 + $0xe0] sm:$0xff] %v1354
          %1387 = vst [vmem:[%s428 + $0xe8] sm:$0xff] %v1355
          %1388 = vst [vmem:[%s428 + $0xf0] sm:$0xff] %v1356
          %1389 = vst [vmem:[%s428 + $0xf8] sm:$0xff] %v1357
          %v1390 = vlaneseq
          %v1391 = vand.u32 %v1390, 127
          %vm1392 = vcmp.lt.s32.totalorder %v1391, 10
          %v1393 = vsel %vm1392, %v1326, -inf
          %v1394 = vsel %vm1392, %v1327, -inf
          %v1395 = vsel %vm1392, %v1328, -inf
          %v1396 = vsel %vm1392, %v1329, -inf
          %v1397 = vsel %vm1392, %v1330, -inf
          %v1398 = vsel %vm1392, %v1331, -inf
          %v1399 = vsel %vm1392, %v1332, -inf
          %v1400 = vsel %vm1392, %v1333, -inf
          %v1401 = vsel %vm1392, %v1334, -inf
          %v1402 = vsel %vm1392, %v1335, -inf
          %v1403 = vsel %vm1392, %v1336, -inf
          %v1404 = vsel %vm1392, %v1337, -inf
          %v1405 = vsel %vm1392, %v1338, -inf
          %v1406 = vsel %vm1392, %v1339, -inf
          %v1407 = vsel %vm1392, %v1340, -inf
          %v1408 = vsel %vm1392, %v1341, -inf
          %v1409 = vsel %vm1392, %v1342, -inf
          %v1410 = vsel %vm1392, %v1343, -inf
          %v1411 = vsel %vm1392, %v1344, -inf
          %v1412 = vsel %vm1392, %v1345, -inf
          %v1413 = vsel %vm1392, %v1346, -inf
          %v1414 = vsel %vm1392, %v1347, -inf
          %v1415 = vsel %vm1392, %v1348, -inf
          %v1416 = vsel %vm1392, %v1349, -inf
          %v1417 = vsel %vm1392, %v1350, -inf
          %v1418 = vsel %vm1392, %v1351, -inf
          %v1419 = vsel %vm1392, %v1352, -inf
          %v1420 = vsel %vm1392, %v1353, -inf
          %v1421 = vsel %vm1392, %v1354, -inf
          %v1422 = vsel %vm1392, %v1355, -inf
          %v1423 = vsel %vm1392, %v1356, -inf
          %v1424 = vsel %vm1392, %v1357, -inf
          %1425 = vmax.xlane.f32.xlu0 %v1393
          %v1426 = vpop.xlane.xlu0 %1425
          %1427 = vmax.xlane.f32.xlu0 %v1394
          %v1428 = vpop.xlane.xlu0 %1427
          %1429 = vmax.xlane.f32.xlu0 %v1395
          %v1430 = vpop.xlane.xlu0 %1429
          %1431 = vmax.xlane.f32.xlu0 %v1396
          %v1432 = vpop.xlane.xlu0 %1431
          %1433 = vmax.xlane.f32.xlu0 %v1397
          %v1434 = vpop.xlane.xlu0 %1433
          %1435 = vmax.xlane.f32.xlu0 %v1398
          %v1436 = vpop.xlane.xlu0 %1435
          %1437 = vmax.xlane.f32.xlu0 %v1399
          %v1438 = vpop.xlane.xlu0 %1437
          %1439 = vmax.xlane.f32.xlu0 %v1400
          %v1440 = vpop.xlane.xlu0 %1439
          %1441 = vmax.xlane.f32.xlu0 %v1401
          %v1442 = vpop.xlane.xlu0 %1441
          %1443 = vmax.xlane.f32.xlu0 %v1402
          %v1444 = vpop.xlane.xlu0 %1443
          %1445 = vmax.xlane.f32.xlu0 %v1403
          %v1446 = vpop.xlane.xlu0 %1445
          %1447 = vmax.xlane.f32.xlu0 %v1404
          %v1448 = vpop.xlane.xlu0 %1447
          %1449 = vmax.xlane.f32.xlu0 %v1405
          %v1450 = vpop.xlane.xlu0 %1449
          %1451 = vmax.xlane.f32.xlu0 %v1406
          %v1452 = vpop.xlane.xlu0 %1451
          %1453 = vmax.xlane.f32.xlu0 %v1407
          %v1454 = vpop.xlane.xlu0 %1453
          %1455 = vmax.xlane.f32.xlu0 %v1408
          %v1456 = vpop.xlane.xlu0 %1455
          %1457 = vmax.xlane.f32.xlu0 %v1409
          %v1458 = vpop.xlane.xlu0 %1457
          %1459 = vmax.xlane.f32.xlu0 %v1410
          %v1460 = vpop.xlane.xlu0 %1459
          %1461 = vmax.xlane.f32.xlu0 %v1411
          %v1462 = vpop.xlane.xlu0 %1461
          %1463 = vmax.xlane.f32.xlu0 %v1412
          %v1464 = vpop.xlane.xlu0 %1463
          %1465 = vmax.xlane.f32.xlu0 %v1413
          %v1466 = vpop.xlane.xlu0 %1465
          %1467 = vmax.xlane.f32.xlu0 %v1414
          %v1468 = vpop.xlane.xlu0 %1467
          %1469 = vmax.xlane.f32.xlu0 %v1415
          %v1470 = vpop.xlane.xlu0 %1469
          %1471 = vmax.xlane.f32.xlu0 %v1416
          %v1472 = vpop.xlane.xlu0 %1471
          %1473 = vmax.xlane.f32.xlu0 %v1417
          %v1474 = vpop.xlane.xlu0 %1473
          %1475 = vmax.xlane.f32.xlu0 %v1418
          %v1476 = vpop.xlane.xlu0 %1475
          %1477 = vmax.xlane.f32.xlu0 %v1419
          %v1478 = vpop.xlane.xlu0 %1477
          %1479 = vmax.xlane.f32.xlu0 %v1420
          %v1480 = vpop.xlane.xlu0 %1479
          %1481 = vmax.xlane.f32.xlu0 %v1421
          %v1482 = vpop.xlane.xlu0 %1481
          %1483 = vmax.xlane.f32.xlu0 %v1422
          %v1484 = vpop.xlane.xlu0 %1483
          %1485 = vmax.xlane.f32.xlu0 %v1423
          %v1486 = vpop.xlane.xlu0 %1485
          %1487 = vmax.xlane.f32.xlu0 %v1424
          %v1488 = vpop.xlane.xlu0 %1487
          %v1489 = vsub.f32 %v1393, %v1426
          %v1490 = vsub.f32 %v1394, %v1428
          %v1491 = vsub.f32 %v1395, %v1430
          %v1492 = vsub.f32 %v1396, %v1432
          %v1493 = vsub.f32 %v1397, %v1434
          %v1494 = vsub.f32 %v1398, %v1436
          %v1495 = vsub.f32 %v1399, %v1438
          %v1496 = vsub.f32 %v1400, %v1440
          %v1497 = vsub.f32 %v1401, %v1442
          %v1498 = vsub.f32 %v1402, %v1444
          %v1499 = vsub.f32 %v1403, %v1446
          %v1500 = vsub.f32 %v1404, %v1448
          %v1501 = vsub.f32 %v1405, %v1450
          %v1502 = vsub.f32 %v1406, %v1452
          %v1503 = vsub.f32 %v1407, %v1454
          %v1504 = vsub.f32 %v1408, %v1456
          %v1505 = vsub.f32 %v1409, %v1458
          %v1506 = vsub.f32 %v1410, %v1460
          %v1507 = vsub.f32 %v1411, %v1462
          %v1508 = vsub.f32 %v1412, %v1464
          %v1509 = vsub.f32 %v1413, %v1466
          %v1510 = vsub.f32 %v1414, %v1468
          %v1511 = vsub.f32 %v1415, %v1470
          %v1512 = vsub.f32 %v1416, %v1472
          %v1513 = vsub.f32 %v1417, %v1474
          %v1514 = vsub.f32 %v1418, %v1476
          %v1515 = vsub.f32 %v1419, %v1478
          %v1516 = vsub.f32 %v1420, %v1480
          %v1517 = vsub.f32 %v1421, %v1482
          %v1518 = vsub.f32 %v1422, %v1484
          %v1519 = vsub.f32 %v1423, %v1486
          %v1520 = vsub.f32 %v1424, %v1488
          %v1521 = vmul.f32 %v1489, 1.442695
          %v1522 = vpow.pop %v1521
          %v1523 = vmul.f32 %v1490, 1.442695
          %v1524 = vpow.pop %v1523
          %v1525 = vmul.f32 %v1491, 1.442695
          %v1526 = vpow.pop %v1525
          %v1527 = vmul.f32 %v1492, 1.442695
          %v1528 = vpow.pop %v1527
          %v1529 = vmul.f32 %v1493, 1.442695
          %v1530 = vpow.pop %v1529
          %v1531 = vmul.f32 %v1494, 1.442695
          %v1532 = vpow.pop %v1531
          %v1533 = vmul.f32 %v1495, 1.442695
          %v1534 = vpow.pop %v1533
          %v1535 = vmul.f32 %v1496, 1.442695
          %v1536 = vpow.pop %v1535
          %v1537 = vmul.f32 %v1497, 1.442695
          %v1538 = vpow.pop %v1537
          %v1539 = vmul.f32 %v1498, 1.442695
          %v1540 = vpow.pop %v1539
          %v1541 = vmul.f32 %v1499, 1.442695
          %v1542 = vpow.pop %v1541
          %v1543 = vmul.f32 %v1500, 1.442695
          %v1544 = vpow.pop %v1543
          %v1545 = vmul.f32 %v1501, 1.442695
          %v1546 = vpow.pop %v1545
          %v1547 = vmul.f32 %v1502, 1.442695
          %v1548 = vpow.pop %v1547
          %v1549 = vmul.f32 %v1503, 1.442695
          %v1550 = vpow.pop %v1549
          %v1551 = vmul.f32 %v1504, 1.442695
          %v1552 = vpow.pop %v1551
          %v1553 = vmul.f32 %v1505, 1.442695
          %v1554 = vpow.pop %v1553
          %v1555 = vmul.f32 %v1506, 1.442695
          %v1556 = vpow.pop %v1555
          %v1557 = vmul.f32 %v1507, 1.442695
          %v1558 = vpow.pop %v1557
          %v1559 = vmul.f32 %v1508, 1.442695
          %v1560 = vpow.pop %v1559
          %v1561 = vmul.f32 %v1509, 1.442695
          %v1562 = vpow.pop %v1561
          %v1563 = vmul.f32 %v1510, 1.442695
          %v1564 = vpow.pop %v1563
          %v1565 = vmul.f32 %v1511, 1.442695
          %v1566 = vpow.pop %v1565
          %v1567 = vmul.f32 %v1512, 1.442695
          %v1568 = vpow.pop %v1567
          %v1569 = vmul.f32 %v1513, 1.442695
          %v1570 = vpow.pop %v1569
          %v1571 = vmul.f32 %v1514, 1.442695
          %v1572 = vpow.pop %v1571
          %v1573 = vmul.f32 %v1515, 1.442695
          %v1574 = vpow.pop %v1573
          %v1575 = vmul.f32 %v1516, 1.442695
          %v1576 = vpow.pop %v1575
          %v1577 = vmul.f32 %v1517, 1.442695
          %v1578 = vpow.pop %v1577
          %v1579 = vmul.f32 %v1518, 1.442695
          %v1580 = vpow.pop %v1579
          %v1581 = vmul.f32 %v1519, 1.442695
          %v1582 = vpow.pop %v1581
          %v1583 = vmul.f32 %v1520, 1.442695
          %v1584 = vpow.pop %v1583
          %v1585 = vsel %vm1392, %v1522, 0.0
          %v1586 = vsel %vm1392, %v1524, 0.0
          %v1587 = vsel %vm1392, %v1526, 0.0
          %v1588 = vsel %vm1392, %v1528, 0.0
          %v1589 = vsel %vm1392, %v1530, 0.0
          %v1590 = vsel %vm1392, %v1532, 0.0
          %v1591 = vsel %vm1392, %v1534, 0.0
          %v1592 = vsel %vm1392, %v1536, 0.0
          %v1593 = vsel %vm1392, %v1538, 0.0
          %v1594 = vsel %vm1392, %v1540, 0.0
          %v1595 = vsel %vm1392, %v1542, 0.0
          %v1596 = vsel %vm1392, %v1544, 0.0
          %v1597 = vsel %vm1392, %v1546, 0.0
          %v1598 = vsel %vm1392, %v1548, 0.0
          %v1599 = vsel %vm1392, %v1550, 0.0
          %v1600 = vsel %vm1392, %v1552, 0.0
          %v1601 = vsel %vm1392, %v1554, 0.0
          %v1602 = vsel %vm1392, %v1556, 0.0
          %v1603 = vsel %vm1392, %v1558, 0.0
          %v1604 = vsel %vm1392, %v1560, 0.0
          %v1605 = vsel %vm1392, %v1562, 0.0
          %v1606 = vsel %vm1392, %v1564, 0.0
          %v1607 = vsel %vm1392, %v1566, 0.0
          %v1608 = vsel %vm1392, %v1568, 0.0
          %v1609 = vsel %vm1392, %v1570, 0.0
          %v1610 = vsel %vm1392, %v1572, 0.0
          %v1611 = vsel %vm1392, %v1574, 0.0
          %v1612 = vsel %vm1392, %v1576, 0.0
          %v1613 = vsel %vm1392, %v1578, 0.0
          %v1614 = vsel %vm1392, %v1580, 0.0
          %v1615 = vsel %vm1392, %v1582, 0.0
          %v1616 = vsel %vm1392, %v1584, 0.0
          %1617 = vadd.xlane.f32.xlu0 %v1585
          %v1618 = vpop.xlane.xlu0 %1617
          %1619 = vadd.xlane.f32.xlu0 %v1586
          %v1620 = vpop.xlane.xlu0 %1619
          %1621 = vadd.xlane.f32.xlu0 %v1587
          %v1622 = vpop.xlane.xlu0 %1621
          %1623 = vadd.xlane.f32.xlu0 %v1588
          %v1624 = vpop.xlane.xlu0 %1623
          %1625 = vadd.xlane.f32.xlu0 %v1589
          %v1626 = vpop.xlane.xlu0 %1625
          %1627 = vadd.xlane.f32.xlu0 %v1590
          %v1628 = vpop.xlane.xlu0 %1627
          %1629 = vadd.xlane.f32.xlu0 %v1591
          %v1630 = vpop.xlane.xlu0 %1629
          %1631 = vadd.xlane.f32.xlu0 %v1592
          %v1632 = vpop.xlane.xlu0 %1631
          %1633 = vadd.xlane.f32.xlu0 %v1593
          %v1634 = vpop.xlane.xlu0 %1633
          %1635 = vadd.xlane.f32.xlu0 %v1594
          %v1636 = vpop.xlane.xlu0 %1635
          %1637 = vadd.xlane.f32.xlu0 %v1595
          %v1638 = vpop.xlane.xlu0 %1637
          %1639 = vadd.xlane.f32.xlu0 %v1596
          %v1640 = vpop.xlane.xlu0 %1639
          %1641 = vadd.xlane.f32.xlu0 %v1597
          %v1642 = vpop.xlane.xlu0 %1641
          %1643 = vadd.xlane.f32.xlu0 %v1598
          %v1644 = vpop.xlane.xlu0 %1643
          %1645 = vadd.xlane.f32.xlu0 %v1599
          %v1646 = vpop.xlane.xlu0 %1645
          %1647 = vadd.xlane.f32.xlu0 %v1600
          %v1648 = vpop.xlane.xlu0 %1647
          %1649 = vadd.xlane.f32.xlu0 %v1601
          %v1650 = vpop.xlane.xlu0 %1649
          %1651 = vadd.xlane.f32.xlu0 %v1602
          %v1652 = vpop.xlane.xlu0 %1651
          %1653 = vadd.xlane.f32.xlu0 %v1603
          %v1654 = vpop.xlane.xlu0 %1653
          %1655 = vadd.xlane.f32.xlu0 %v1604
          %v1656 = vpop.xlane.xlu0 %1655
          %1657 = vadd.xlane.f32.xlu0 %v1605
          %v1658 = vpop.xlane.xlu0 %1657
          %1659 = vadd.xlane.f32.xlu0 %v1606
          %v1660 = vpop.xlane.xlu0 %1659
          %1661 = vadd.xlane.f32.xlu0 %v1607
          %v1662 = vpop.xlane.xlu0 %1661
          %1663 = vadd.xlane.f32.xlu0 %v1608
          %v1664 = vpop.xlane.xlu0 %1663
          %1665 = vadd.xlane.f32.xlu0 %v1609
          %v1666 = vpop.xlane.xlu0 %1665
          %1667 = vadd.xlane.f32.xlu0 %v1610
          %v1668 = vpop.xlane.xlu0 %1667
          %1669 = vadd.xlane.f32.xlu0 %v1611
          %v1670 = vpop.xlane.xlu0 %1669
          %1671 = vadd.xlane.f32.xlu0 %v1612
          %v1672 = vpop.xlane.xlu0 %1671
          %1673 = vadd.xlane.f32.xlu0 %v1613
          %v1674 = vpop.xlane.xlu0 %1673
          %1675 = vadd.xlane.f32.xlu0 %v1614
          %v1676 = vpop.xlane.xlu0 %1675
          %1677 = vadd.xlane.f32.xlu0 %v1615
          %v1678 = vpop.xlane.xlu0 %1677
          %1679 = vadd.xlane.f32.xlu0 %v1616
          %v1680 = vpop.xlane.xlu0 %1679
          %v1681 = vlog2.pop %v1618
          %v1682 = vmul.f32 %v1681, 0.6931472
          %v1683 = vlog2.pop %v1620
          %v1684 = vmul.f32 %v1683, 0.6931472
          %v1685 = vlog2.pop %v1622
          %v1686 = vmul.f32 %v1685, 0.6931472
          %v1687 = vlog2.pop %v1624
          %v1688 = vmul.f32 %v1687, 0.6931472
          %v1689 = vlog2.pop %v1626
          %v1690 = vmul.f32 %v1689, 0.6931472
          %v1691 = vlog2.pop %v1628
          %v1692 = vmul.f32 %v1691, 0.6931472
          %v1693 = vlog2.pop %v1630
          %v1694 = vmul.f32 %v1693, 0.6931472
          %v1695 = vlog2.pop %v1632
          %v1696 = vmul.f32 %v1695, 0.6931472
          %v1697 = vlog2.pop %v1634
          %v1698 = vmul.f32 %v1697, 0.6931472
          %v1699 = vlog2.pop %v1636
          %v1700 = vmul.f32 %v1699, 0.6931472
          %v1701 = vlog2.pop %v1638
          %v1702 = vmul.f32 %v1701, 0.6931472
          %v1703 = vlog2.pop %v1640
          %v1704 = vmul.f32 %v1703, 0.6931472
          %v1705 = vlog2.pop %v1642
          %v1706 = vmul.f32 %v1705, 0.6931472
          %v1707 = vlog2.pop %v1644
          %v1708 = vmul.f32 %v1707, 0.6931472
          %v1709 = vlog2.pop %v1646
          %v1710 = vmul.f32 %v1709, 0.6931472
          %v1711 = vlog2.pop %v1648
          %v1712 = vmul.f32 %v1711, 0.6931472
          %v1713 = vlog2.pop %v1650
          %v1714 = vmul.f32 %v1713, 0.6931472
          %v1715 = vlog2.pop %v1652
          %v1716 = vmul.f32 %v1715, 0.6931472
          %v1717 = vlog2.pop %v1654
          %v1718 = vmul.f32 %v1717, 0.6931472
          %v1719 = vlog2.pop %v1656
          %v1720 = vmul.f32 %v1719, 0.6931472
          %v1721 = vlog2.pop %v1658
          %v1722 = vmul.f32 %v1721, 0.6931472
          %v1723 = vlog2.pop %v1660
          %v1724 = vmul.f32 %v1723, 0.6931472
          %v1725 = vlog2.pop %v1662
          %v1726 = vmul.f32 %v1725, 0.6931472
          %v1727 = vlog2.pop %v1664
          %v1728 = vmul.f32 %v1727, 0.6931472
          %v1729 = vlog2.pop %v1666
          %v1730 = vmul.f32 %v1729, 0.6931472
          %v1731 = vlog2.pop %v1668
          %v1732 = vmul.f32 %v1731, 0.6931472
          %v1733 = vlog2.pop %v1670
          %v1734 = vmul.f32 %v1733, 0.6931472
          %v1735 = vlog2.pop %v1672
          %v1736 = vmul.f32 %v1735, 0.6931472
          %v1737 = vlog2.pop %v1674
          %v1738 = vmul.f32 %v1737, 0.6931472
          %v1739 = vlog2.pop %v1676
          %v1740 = vmul.f32 %v1739, 0.6931472
          %v1741 = vlog2.pop %v1678
          %v1742 = vmul.f32 %v1741, 0.6931472
          %v1743 = vlog2.pop %v1680
          %v1744 = vmul.f32 %v1743, 0.6931472
          %v1745 = vsub.f32 %v1489, %v1682
          %v1746 = vsub.f32 %v1490, %v1684
          %v1747 = vsub.f32 %v1491, %v1686
          %v1748 = vsub.f32 %v1492, %v1688
          %v1749 = vsub.f32 %v1493, %v1690
          %v1750 = vsub.f32 %v1494, %v1692
          %v1751 = vsub.f32 %v1495, %v1694
          %v1752 = vsub.f32 %v1496, %v1696
          %v1753 = vsub.f32 %v1497, %v1698
          %v1754 = vsub.f32 %v1498, %v1700
          %v1755 = vsub.f32 %v1499, %v1702
          %v1756 = vsub.f32 %v1500, %v1704
          %v1757 = vsub.f32 %v1501, %v1706
          %v1758 = vsub.f32 %v1502, %v1708
          %v1759 = vsub.f32 %v1503, %v1710
          %v1760 = vsub.f32 %v1504, %v1712
          %v1761 = vsub.f32 %v1505, %v1714
          %v1762 = vsub.f32 %v1506, %v1716
          %v1763 = vsub.f32 %v1507, %v1718
          %v1764 = vsub.f32 %v1508, %v1720
          %v1765 = vsub.f32 %v1509, %v1722
          %v1766 = vsub.f32 %v1510, %v1724
          %v1767 = vsub.f32 %v1511, %v1726
          %v1768 = vsub.f32 %v1512, %v1728
          %v1769 = vsub.f32 %v1513, %v1730
          %v1770 = vsub.f32 %v1514, %v1732
          %v1771 = vsub.f32 %v1515, %v1734
          %v1772 = vsub.f32 %v1516, %v1736
          %v1773 = vsub.f32 %v1517, %v1738
          %v1774 = vsub.f32 %v1518, %v1740
          %v1775 = vsub.f32 %v1519, %v1742
          %v1776 = vsub.f32 %v1520, %v1744
          %1777 = vst [vmem:[%s434] sm:$0xff] %v1745
          %1778 = vst [vmem:[%s434 + $0x8] sm:$0xff] %v1746
          %1779 = vst [vmem:[%s434 + $0x10] sm:$0xff] %v1747
          %1780 = vst [vmem:[%s434 + $0x18] sm:$0xff] %v1748
          %1781 = vst [vmem:[%s434 + $0x20] sm:$0xff] %v1749
          %1782 = vst [vmem:[%s434 + $0x28] sm:$0xff] %v1750
          %1783 = vst [vmem:[%s434 + $0x30] sm:$0xff] %v1751
          %1784 = vst [vmem:[%s434 + $0x38] sm:$0xff] %v1752
          %1785 = vst [vmem:[%s434 + $0x40] sm:$0xff] %v1753
          %1786 = vst [vmem:[%s434 + $0x48] sm:$0xff] %v1754
          %1787 = vst [vmem:[%s434 + $0x50] sm:$0xff] %v1755
          %1788 = vst [vmem:[%s434 + $0x58] sm:$0xff] %v1756
          %1789 = vst [vmem:[%s434 + $0x60] sm:$0xff] %v1757
          %1790 = vst [vmem:[%s434 + $0x68] sm:$0xff] %v1758
          %1791 = vst [vmem:[%s434 + $0x70] sm:$0xff] %v1759
          %1792 = vst [vmem:[%s434 + $0x78] sm:$0xff] %v1760
          %1793 = vst [vmem:[%s434 + $0x80] sm:$0xff] %v1761
          %1794 = vst [vmem:[%s434 + $0x88] sm:$0xff] %v1762
          %1795 = vst [vmem:[%s434 + $0x90] sm:$0xff] %v1763
          %1796 = vst [vmem:[%s434 + $0x98] sm:$0xff] %v1764
          %1797 = vst [vmem:[%s434 + $0xa0] sm:$0xff] %v1765
          %1798 = vst [vmem:[%s434 + $0xa8] sm:$0xff] %v1766
          %1799 = vst [vmem:[%s434 + $0xb0] sm:$0xff] %v1767
          %1800 = vst [vmem:[%s434 + $0xb8] sm:$0xff] %v1768
          %1801 = vst [vmem:[%s434 + $0xc0] sm:$0xff] %v1769
          %1802 = vst [vmem:[%s434 + $0xc8] sm:$0xff] %v1770
          %1803 = vst [vmem:[%s434 + $0xd0] sm:$0xff] %v1771
          %1804 = vst [vmem:[%s434 + $0xd8] sm:$0xff] %v1772
          %1805 = vst [vmem:[%s434 + $0xe0] sm:$0xff] %v1773
          %1806 = vst [vmem:[%s434 + $0xe8] sm:$0xff] %v1774
          %1807 = vst [vmem:[%s434 + $0xf0] sm:$0xff] %v1775
          %1808 = vst [vmem:[%s434 + $0xf8] sm:$0xff] %v1776
        $region78: #{lame_sage.11} parent=65 // pred_fallthru
          _
        %s1809 = smul.u32 32, %s20
        %p1810 = scmp.lt.s32.totalorder %s1809, 63
        %s1811 = scalar_select %p1810, %s1809, 63
        %s1812 = smul.addr %s1811, 8
        %s1813 = scalar_lea.vmem %s3, %s1812
        %s1814 = smul.u32 32, %s20
        %p1815 = scmp.lt.s32.totalorder %s1814, 63
        %s1816 = scalar_select %p1815, %s1814, 63
        %s1817 = smul.addr %s1816, 8
        %s1818 = scalar_lea.vmem %s4, %s1817
        // Predicated region
        $region79: #{lame_sage.11} parent=65 // pred_check
          %p1819 = pneg %p126
        $region80: #{lame_sage.11} parent=65 // pred_check_branch
          %1821 = sbr.rel (%p1819) target = $region82
        $region81: #{lame_sage.11} parent=65 // pred_region
          %s1822 = smul.u32 32, %s20
        $region82: #{lame_sage.11} parent=65 // pred_fallthru
          _
        // Predicated region
        $region83: #{lame_sage.11} parent=65 // pred_check
          %p1823 = pneg %p152
        $region84: #{lame_sage.11} parent=65 // pred_check_branch
          %1825 = sbr.rel (%p1823) target = $region86
        $region85: #{lame_sage.11} parent=65 // pred_region
          %s1826 = smul.u32 32, %s20
        $region86: #{lame_sage.11} parent=65 // pred_fallthru
          _
      $region66: #{lame_sage.11} parent=5 // pred_fallthru
        _
      %p1827 = scmp.le.s32.totalorder 2, %s11
      // Predicated region
      $region87: #{lame_sage.11} parent=5 // pred_check
        %p1828 = pneg %p1827
      $region88: #{lame_sage.11} parent=5 // pred_check_branch
        %1830 = sbr.rel (%p1828) target = $region90
      $region89: #{lame_sage.11} parent=5 // pred_region
        %s1831 = ssub.s32 %s11, 2
        // Predicated region
        $region91: #{lame_sage.11} parent=89 // pred_check
          %p1832 = pneg %p132
        $region92: #{lame_sage.11} parent=89 // pred_check_branch
          %1834 = sbr.rel (%p1832) target = $region94
        $region93: #{lame_sage.11} parent=89 // pred_region
          %s1835 = smul.u32 32, %s22
          %p1836 = scmp.lt.s32.totalorder %s1835, 63
          %s1837 = scalar_select %p1836, %s1835, 63
          %s1838 = smul.addr %s1837, 8
          %s1839 = scalar_lea.vmem %s3, %s1838
        $region94: #{lame_sage.11} parent=89 // pred_fallthru
          _
        // Predicated region
        $region95: #{lame_sage.11} parent=89 // pred_check
          %p1840 = pneg %p158
        $region96: #{lame_sage.11} parent=89 // pred_check_branch
          %1842 = sbr.rel (%p1840) target = $region98
        $region97: #{lame_sage.11} parent=89 // pred_region
          %s1843 = smul.u32 32, %s22
          %p1844 = scmp.lt.s32.totalorder %s1843, 63
          %s1845 = scalar_select %p1844, %s1843, 63
          %s1846 = smul.addr %s1845, 8
          %s1847 = scalar_lea.vmem %s4, %s1846
        $region98: #{lame_sage.11} parent=89 // pred_fallthru
          _
      $region90: #{lame_sage.11} parent=5 // pred_fallthru
        _
    $region6: #{lame_sage.11} parent=1 // loop_footer
      %s15 = sadd.s32 1, %s11
    $region7: #{lame_sage.11} parent=1 // loop_footer_branch
      %10 = sbr.rel target = $region3
    $region8: #{lame_sage.11} parent=1 // loop_exit
      _

</llo_original>
